<compile_context>
chip_gen: v7x
topology: tpu7x:2x2x1
jax: 0.10.0
libtpu: 0.0.40
codegen_flags: <defaults>
</compile_context>

<pallas_src>
import functools

import jax
import jax.numpy as jnp
from jax.experimental import pallas as pl
from jax.experimental.pallas import tpu as pltpu

EPS = 1e-5                       # torch.nn.LayerNorm default eps
_SQRT_HALF = 0.7071067811865476  # 1/sqrt(2)


def _layer_norm(x, g, b):
    # x: (N, D); g, b: (1, D)
    mu = jnp.mean(x, axis=-1, keepdims=True)
    xc = x - mu
    var = jnp.mean(xc * xc, axis=-1, keepdims=True)
    return xc * jax.lax.rsqrt(var + EPS) * g + b


def _erf(x):
    # Abramowitz & Stegun 7.1.26, |error| <= 1.5e-7.  The divide goes through
    # the EUP (pl.reciprocal, approx=False) instead of a VPU Newton sequence.
    a1, a2, a3, a4, a5 = 0.254829592, -0.284496736, 1.421413741, -1.453152027, 1.061405429
    p = 0.3275911
    ax = jnp.abs(x)
    t = pl.reciprocal(1.0 + p * ax, approx=False)
    poly = ((((a5 * t + a4) * t + a3) * t + a2) * t + a1) * t
    y = 1.0 - poly * jnp.exp(-ax * ax)
    return jnp.where(x < 0.0, -y, y)


def _gelu(x):
    # exact (erf-based) GELU, matching torch.nn.functional.gelu default
    return 0.5 * x * (1.0 + _erf(x * _SQRT_HALF))


def encoder_kernel(x_ref, w_ref, v_ref, o_ref, *,
                   num_heads, batch, seq_len, num_layers, d_ffn):
    """Full fused encoder: L pre-LN transformer layers + final LN, all in VMEM.

    x_ref : (B*S, D)           flattened tokens (b-major)
    w_ref : (L, 3D+F, 3D)      per-layer matrices [wqkv; wo; w1; w2] (padded)
    v_ref : (L+1, 8, 3D)       per-layer vectors + final-LN params (padded)
    o_ref : (S, B*D)           lane-concatenated seq-first output slab
    """
    B, S, H, L, F = batch, seq_len, num_heads, num_layers, d_ffn
    N, D = x_ref.shape            # N = B*S
    Dh = D // H
    scale = Dh ** -0.5

    x = x_ref[...]                # (N, D) float32

    for l in range(L):            # static unroll over (small) layer count
        wl = w_ref[l]             # (3D+F, 3D) layer matrix slab
        vl = v_ref[l]             # (8, 3D)    layer vector slab
        wqkv = wl[0:D, :]                     # (D, 3D)  = [wq | wk | wv]
        wo = wl[D:2 * D, 0:D]                 # (D, D)
        w1 = wl[2 * D:3 * D, 0:F]             # (D, F)
        w2 = wl[3 * D:3 * D + F, 0:D]         # (F, D)
        bqkv = vl[0:1, :]                     # (1, 3D)
        ln1_g, ln1_b = vl[1:2, 0:D], vl[2:3, 0:D]
        bo = vl[3:4, 0:D]
        ln2_g, ln2_b = vl[4:5, 0:D], vl[5:6, 0:D]
        b1 = vl[6:7, 0:F]
        b2 = vl[7:8, 0:D]

        # ---------- self-attention sub-block (pre-LN, residual) ----------
        h = _layer_norm(x, ln1_g, ln1_b)
        qkv = jnp.dot(h, wqkv, preferred_element_type=jnp.float32) + bqkv   # (N, 3D)
        q = qkv[:, 0:D] * scale
        k = qkv[:, D:2 * D]
        v = qkv[:, 2 * D:3 * D]

        # (N, D) -> (B, S, D): layout-preserving split (S is a multiple of 8).
        q3 = q.reshape(B, S, D)
        k3 = k.reshape(B, S, D)
        v3 = v.reshape(B, S, D)

        # Fold heads into the leading batch axis of ONE einsum pair per layer:
        # (H*B, S, Dh), with qh[i*B + b] == head i of batch b.
        qh = jnp.concatenate([q3[:, :, i * Dh:(i + 1) * Dh] for i in range(H)], axis=0)
        kh = jnp.concatenate([k3[:, :, i * Dh:(i + 1) * Dh] for i in range(H)], axis=0)
        vh = jnp.concatenate([v3[:, :, i * Dh:(i + 1) * Dh] for i in range(H)], axis=0)

        s = jnp.einsum('bqd,bkd->bqk', qh, kh,
                       preferred_element_type=jnp.float32)                  # (H*B, S, S)
        s = s - jnp.max(s, axis=-1, keepdims=True)
        p = jnp.exp(s)
        p = p * pl.reciprocal(jnp.sum(p, axis=-1, keepdims=True), approx=False)
        o = jnp.einsum('bqk,bkd->bqd', p, vh,
                       preferred_element_type=jnp.float32)                  # (H*B, S, Dh)

        # merge heads back into lanes: attn[b*S+s, i*Dh+d] = o[i*B+b, s, d]
        attn = jnp.concatenate([o[i * B:(i + 1) * B] for i in range(H)],
                               axis=-1).reshape(N, D)
        attn = jnp.dot(attn, wo, preferred_element_type=jnp.float32) + bo
        x = x + attn

        # ---------- feed-forward sub-block (pre-LN, residual) ----------
        h2 = _layer_norm(x, ln2_g, ln2_b)
        f = jnp.dot(h2, w1, preferred_element_type=jnp.float32) + b1
        f = _gelu(f)
        f = jnp.dot(f, w2, preferred_element_type=jnp.float32) + b2
        x = x + f

    # ---------- final LayerNorm (encoder_normalize_before=True) ----------
    vf = v_ref[L]
    x = _layer_norm(x, vf[0:1, 0:D], vf[1:2, 0:D])

    # Store directly into the lane-concatenated (S, B*D) slab (no concat temp):
    # o_ref[s, b*D + d] = x[b*S + s, d]  ==> free metadata reshape to (S, B, D).
    for b in range(B):
        o_ref[:, b * D:(b + 1) * D] = x[b * S:(b + 1) * S, :]


def init_encoder_params(key, num_layers, d_model, d_ffn):
    """Per-layer weights stacked on a leading layer axis."""
    L, D, F = num_layers, d_model, d_ffn

    def dense(k, shape):
        return jax.random.normal(k, shape, dtype=jnp.float32) * 0.02

    key, *ks = jax.random.split(key, 7)
    params = dict(
        ln1_g=jnp.ones((L, 1, D), jnp.float32), ln1_b=jnp.zeros((L, 1, D), jnp.float32),
        wq=dense(ks[0], (L, D, D)), bq=jnp.zeros((L, 1, D), jnp.float32),
        wk=dense(ks[1], (L, D, D)), bk=jnp.zeros((L, 1, D), jnp.float32),
        wv=dense(ks[2], (L, D, D)), bv=jnp.zeros((L, 1, D), jnp.float32),
        wo=dense(ks[3], (L, D, D)), bo=jnp.zeros((L, 1, D), jnp.float32),
        ln2_g=jnp.ones((L, 1, D), jnp.float32), ln2_b=jnp.zeros((L, 1, D), jnp.float32),
        w1=dense(ks[4], (L, D, F)), b1=jnp.zeros((L, 1, F), jnp.float32),
        w2=dense(ks[5], (L, F, D)), b2=jnp.zeros((L, 1, D), jnp.float32),
        lnf_g=jnp.ones((1, D), jnp.float32), lnf_b=jnp.zeros((1, D), jnp.float32),
    )
    return params, key


def pack_params(params):
    """Pack all per-layer parameters into 2 slabs (2 input DMAs instead of 19).

    w_slab: (L, 3D+F, 3D)  rows [0:D)=wqkv, [D:2D)=wo, [2D:3D)=w1, [3D:3D+F)=w2
    v_slab: (L+1, 8, 3D)   rows 0..7 = bqkv, ln1_g, ln1_b, bo, ln2_g, ln2_b, b1, b2
                           slab L  = final LN gain / bias
    """
    L, D, _ = params['wq'].shape
    F = params['w1'].shape[-1]
    R, C = 3 * D + F, 3 * D

    wqkv = jnp.concatenate([params['wq'], params['wk'], params['wv']], axis=-1)  # (L, D, 3D)
    w = jnp.zeros((L, R, C), jnp.float32)
    w = w.at[:, 0:D, :].set(wqkv)
    w = w.at[:, D:2 * D, 0:D].set(params['wo'])
    w = w.at[:, 2 * D:3 * D, 0:F].set(params['w1'])
    w = w.at[:, 3 * D:3 * D + F, 0:D].set(params['w2'])

    bqkv = jnp.concatenate([params['bq'], params['bk'], params['bv']], axis=-1)  # (L, 1, 3D)
    v = jnp.zeros((L + 1, 8, C), jnp.float32)
    v = v.at[:L, 0:1, :].set(bqkv)
    v = v.at[:L, 1:2, 0:D].set(params['ln1_g'])
    v = v.at[:L, 2:3, 0:D].set(params['ln1_b'])
    v = v.at[:L, 3:4, 0:D].set(params['bo'])
    v = v.at[:L, 4:5, 0:D].set(params['ln2_g'])
    v = v.at[:L, 5:6, 0:D].set(params['ln2_b'])
    v = v.at[:L, 6:7, 0:F].set(params['b1'])
    v = v.at[:L, 7:8, 0:D].set(params['b2'])
    v = v.at[L, 0, 0:D].set(params['lnf_g'][0])
    v = v.at[L, 1, 0:D].set(params['lnf_b'][0])
    return w, v


@functools.partial(jax.jit, static_argnames=('num_heads',))
def encoder_forward(enc_input, w_slab, v_slab, *, num_heads):
    """enc_input: (B, S, D).  Returns (S, B, D), matching the PyTorch reference
    (which transposes to seq-first at the start and never transposes back)."""
    B, S, D = enc_input.shape
    L = w_slab.shape[0]
    F = w_slab.shape[1] - 3 * D
    vmem = pl.BlockSpec(memory_space=pltpu.MemorySpace.VMEM)
    out2d = pl.pallas_call(
        functools.partial(encoder_kernel, num_heads=num_heads, batch=B,
                          seq_len=S, num_layers=L, d_ffn=F),
        in_specs=[vmem, vmem, vmem],
        out_specs=vmem,
        out_shape=jax.ShapeDtypeStruct((S, B * D), jnp.float32),
    )(enc_input.reshape(B * S, D), w_slab, v_slab)
    return out2d.reshape(S, B, D)   # pure metadata reshape, no transpose


def encoder_reference(x, params, num_heads):
    """Plain-JAX reference of the PyTorch forward (for a correctness check)."""
    B, S, D = x.shape
    H = num_heads
    Dh = D // H
    L = params['wq'].shape[0]

    def ln(t, g, b):
        mu = t.mean(-1, keepdims=True)
        var = ((t - mu) ** 2).mean(-1, keepdims=True)
        return (t - mu) / jnp.sqrt(var + EPS) * g + b

    h = x
    for l in range(L):
        y = ln(h, params['ln1_g'][l], params['ln1_b'][l])
        q = (y @ params['wq'][l] + params['bq'][l]) * Dh ** -0.5
        k = y @ params['wk'][l] + params['bk'][l]
        v = y @ params['wv'][l] + params['bv'][l]
        q = q.reshape(B, S, H, Dh).transpose(0, 2, 1, 3)
        k = k.reshape(B, S, H, Dh).transpose(0, 2, 1, 3)
        v = v.reshape(B, S, H, Dh).transpose(0, 2, 1, 3)
        a = jax.nn.softmax(q @ k.transpose(0, 1, 3, 2), axis=-1)
        o = (a @ v).transpose(0, 2, 1, 3).reshape(B, S, D)
        h = h + o @ params['wo'][l] + params['bo'][l]
        y2 = ln(h, params['ln2_g'][l], params['ln2_b'][l])
        f = jax.nn.gelu(y2 @ params['w1'][l] + params['b1'][l], approximate=False)
        h = h + f @ params['w2'][l] + params['b2'][l]
    h = ln(h, params['lnf_g'], params['lnf_b'])
    return h.transpose(1, 0, 2)  # (S, B, D)


if __name__ == "__main__":
    B, S, D, H, FFN, L = 2, 8, 32, 4, 64, 2

    key = jax.random.PRNGKey(0)
    key, k_in = jax.random.split(key)
    enc_input = jax.random.normal(k_in, (B, S, D), dtype=jnp.float32)

    params, key = init_encoder_params(key, L, D, FFN)
    w_slab, v_slab = pack_params(params)

    out = encoder_forward(enc_input, w_slab, v_slab, num_heads=H)
    out = jax.block_until_ready(out)

    assert out.shape == (S, B, D), out.shape
    assert bool(jnp.all(jnp.isfinite(out)))

    ref = encoder_reference(enc_input, params, H)
    assert bool(jnp.allclose(out, ref, rtol=1e-3, atol=1e-3)), \
        float(jnp.max(jnp.abs(out - ref)))

    print("KERNEL_OK")
</pallas_src>

<mosaic_0001>
module attributes {stable_mosaic.version = 11 : i64} {
  func.func @encoder_kernel(%arg0: memref<16x32xf32, #tpu.memory_space<vmem>>, %arg1: memref<2x160x96xf32, #tpu.memory_space<vmem>>, %arg2: memref<3x8x96xf32, #tpu.memory_space<vmem>>, %arg3: memref<8x64xf32, #tpu.memory_space<vmem>>) attributes {dimension_semantics = [], scalar_prefetch = 0 : i64, scratch_operands = 0 : i64, tpu.core_type = #tpu.core_type<tc>} {
    %c0 = arith.constant 0 : index
    %c0_0 = arith.constant 0 : index
    %0 = vector.load %arg0[%c0, %c0_0] : memref<16x32xf32, #tpu.memory_space<vmem>>, vector<16x32xf32>
    %c0_1 = arith.constant 0 : index
    %c0_2 = arith.constant 0 : index
    %c0_3 = arith.constant 0 : index
    %1 = vector.load %arg1[%c0_1, %c0_2, %c0_3] : memref<2x160x96xf32, #tpu.memory_space<vmem>>, vector<1x160x96xf32>
    %2 = vector.shape_cast %1 : vector<1x160x96xf32> to vector<160x96xf32>
    %c0_4 = arith.constant 0 : index
    %c0_5 = arith.constant 0 : index
    %c0_6 = arith.constant 0 : index
    %3 = vector.load %arg2[%c0_4, %c0_5, %c0_6] : memref<3x8x96xf32, #tpu.memory_space<vmem>>, vector<1x8x96xf32>
    %4 = vector.shape_cast %3 : vector<1x8x96xf32> to vector<8x96xf32>
    %5 = vector.extract_strided_slice %2 {offsets = [0, 0], sizes = [32, 96], strides = [1, 1]} : vector<160x96xf32> to vector<32x96xf32>
    %6 = vector.extract_strided_slice %2 {offsets = [32, 0], sizes = [32, 32], strides = [1, 1]} : vector<160x96xf32> to vector<32x32xf32>
    %7 = vector.extract_strided_slice %2 {offsets = [64, 0], sizes = [32, 64], strides = [1, 1]} : vector<160x96xf32> to vector<32x64xf32>
    %8 = vector.extract_strided_slice %2 {offsets = [96, 0], sizes = [64, 32], strides = [1, 1]} : vector<160x96xf32> to vector<64x32xf32>
    %9 = vector.extract_strided_slice %4 {offsets = [0, 0], sizes = [1, 96], strides = [1, 1]} : vector<8x96xf32> to vector<1x96xf32>
    %10 = vector.extract_strided_slice %4 {offsets = [1, 0], sizes = [1, 32], strides = [1, 1]} : vector<8x96xf32> to vector<1x32xf32>
    %11 = vector.extract_strided_slice %4 {offsets = [2, 0], sizes = [1, 32], strides = [1, 1]} : vector<8x96xf32> to vector<1x32xf32>
    %12 = vector.extract_strided_slice %4 {offsets = [3, 0], sizes = [1, 32], strides = [1, 1]} : vector<8x96xf32> to vector<1x32xf32>
    %13 = vector.extract_strided_slice %4 {offsets = [4, 0], sizes = [1, 32], strides = [1, 1]} : vector<8x96xf32> to vector<1x32xf32>
    %14 = vector.extract_strided_slice %4 {offsets = [5, 0], sizes = [1, 32], strides = [1, 1]} : vector<8x96xf32> to vector<1x32xf32>
    %15 = vector.extract_strided_slice %4 {offsets = [6, 0], sizes = [1, 64], strides = [1, 1]} : vector<8x96xf32> to vector<1x64xf32>
    %16 = vector.extract_strided_slice %4 {offsets = [7, 0], sizes = [1, 32], strides = [1, 1]} : vector<8x96xf32> to vector<1x32xf32>
    %cst = arith.constant dense<0.000000e+00> : vector<16xf32>
    %17 = vector.multi_reduction <add>, %0, %cst [1] : vector<16x32xf32> to vector<16xf32>
    %18 = vector.shape_cast %17 : vector<16xf32> to vector<16x1xf32>
    %cst_7 = arith.constant 3.200000e+01 : f32
    %19 = vector.broadcast %cst_7 : f32 to vector<16x1xf32>
    %20 = arith.divf %18, %19 : vector<16x1xf32>
    %21 = vector.broadcast %20 : vector<16x1xf32> to vector<16x32xf32>
    %22 = arith.subf %0, %21 : vector<16x32xf32>
    %23 = arith.mulf %22, %22 : vector<16x32xf32>
    %cst_8 = arith.constant dense<0.000000e+00> : vector<16xf32>
    %24 = vector.multi_reduction <add>, %23, %cst_8 [1] : vector<16x32xf32> to vector<16xf32>
    %25 = vector.shape_cast %24 : vector<16xf32> to vector<16x1xf32>
    %cst_9 = arith.constant 3.200000e+01 : f32
    %26 = vector.broadcast %cst_9 : f32 to vector<16x1xf32>
    %27 = arith.divf %25, %26 : vector<16x1xf32>
    %cst_10 = arith.constant 9.99999974E-6 : f32
    %28 = vector.broadcast %cst_10 : f32 to vector<16x1xf32>
    %29 = arith.addf %27, %28 : vector<16x1xf32>
    %30 = math.rsqrt %29 : vector<16x1xf32>
    %31 = vector.broadcast %30 : vector<16x1xf32> to vector<16x32xf32>
    %32 = arith.mulf %22, %31 : vector<16x32xf32>
    %33 = vector.broadcast %10 : vector<1x32xf32> to vector<16x32xf32>
    %34 = arith.mulf %32, %33 : vector<16x32xf32>
    %35 = vector.broadcast %11 : vector<1x32xf32> to vector<16x32xf32>
    %36 = arith.addf %34, %35 : vector<16x32xf32>
    %cst_11 = arith.constant dense<0.000000e+00> : vector<16x96xf32>
    %37 = tpu.matmul %36, %5, %cst_11 {dimension_numbers = #tpu.dot_dimension_numbers<[1], [0], [0], [1], [0, 0, 1, 1], [], []>} : vector<16x32xf32>, vector<32x96xf32>, vector<16x96xf32> -> vector<16x96xf32>
    %38 = vector.broadcast %9 : vector<1x96xf32> to vector<16x96xf32>
    %39 = arith.addf %37, %38 : vector<16x96xf32>
    %40 = vector.extract_strided_slice %39 {offsets = [0, 0], sizes = [16, 32], strides = [1, 1]} : vector<16x96xf32> to vector<16x32xf32>
    %cst_12 = arith.constant 0.353553385 : f32
    %41 = vector.broadcast %cst_12 : f32 to vector<16x32xf32>
    %42 = arith.mulf %40, %41 : vector<16x32xf32>
    %43 = vector.extract_strided_slice %39 {offsets = [0, 32], sizes = [16, 32], strides = [1, 1]} : vector<16x96xf32> to vector<16x32xf32>
    %44 = vector.extract_strided_slice %39 {offsets = [0, 64], sizes = [16, 32], strides = [1, 1]} : vector<16x96xf32> to vector<16x32xf32>
    %45 = vector.shape_cast %42 : vector<16x32xf32> to vector<2x8x32xf32>
    %46 = vector.shape_cast %43 : vector<16x32xf32> to vector<2x8x32xf32>
    %47 = vector.shape_cast %44 : vector<16x32xf32> to vector<2x8x32xf32>
    %48 = vector.extract_strided_slice %45 {offsets = [0, 0, 0], sizes = [2, 8, 8], strides = [1, 1, 1]} : vector<2x8x32xf32> to vector<2x8x8xf32>
    %49 = vector.extract_strided_slice %45 {offsets = [0, 0, 8], sizes = [2, 8, 8], strides = [1, 1, 1]} : vector<2x8x32xf32> to vector<2x8x8xf32>
    %50 = vector.extract_strided_slice %45 {offsets = [0, 0, 16], sizes = [2, 8, 8], strides = [1, 1, 1]} : vector<2x8x32xf32> to vector<2x8x8xf32>
    %51 = vector.extract_strided_slice %45 {offsets = [0, 0, 24], sizes = [2, 8, 8], strides = [1, 1, 1]} : vector<2x8x32xf32> to vector<2x8x8xf32>
    %52 = tpu.concatenate %48, %49, %50, %51 in 0 : vector<2x8x8xf32>, vector<2x8x8xf32>, vector<2x8x8xf32>, vector<2x8x8xf32> -> vector<8x8x8xf32>
    %53 = vector.extract_strided_slice %46 {offsets = [0, 0, 0], sizes = [2, 8, 8], strides = [1, 1, 1]} : vector<2x8x32xf32> to vector<2x8x8xf32>
    %54 = vector.extract_strided_slice %46 {offsets = [0, 0, 8], sizes = [2, 8, 8], strides = [1, 1, 1]} : vector<2x8x32xf32> to vector<2x8x8xf32>
    %55 = vector.extract_strided_slice %46 {offsets = [0, 0, 16], sizes = [2, 8, 8], strides = [1, 1, 1]} : vector<2x8x32xf32> to vector<2x8x8xf32>
    %56 = vector.extract_strided_slice %46 {offsets = [0, 0, 24], sizes = [2, 8, 8], strides = [1, 1, 1]} : vector<2x8x32xf32> to vector<2x8x8xf32>
    %57 = tpu.concatenate %53, %54, %55, %56 in 0 : vector<2x8x8xf32>, vector<2x8x8xf32>, vector<2x8x8xf32>, vector<2x8x8xf32> -> vector<8x8x8xf32>
    %58 = vector.extract_strided_slice %47 {offsets = [0, 0, 0], sizes = [2, 8, 8], strides = [1, 1, 1]} : vector<2x8x32xf32> to vector<2x8x8xf32>
    %59 = vector.extract_strided_slice %47 {offsets = [0, 0, 8], sizes = [2, 8, 8], strides = [1, 1, 1]} : vector<2x8x32xf32> to vector<2x8x8xf32>
    %60 = vector.extract_strided_slice %47 {offsets = [0, 0, 16], sizes = [2, 8, 8], strides = [1, 1, 1]} : vector<2x8x32xf32> to vector<2x8x8xf32>
    %61 = vector.extract_strided_slice %47 {offsets = [0, 0, 24], sizes = [2, 8, 8], strides = [1, 1, 1]} : vector<2x8x32xf32> to vector<2x8x8xf32>
    %62 = tpu.concatenate %58, %59, %60, %61 in 0 : vector<2x8x8xf32>, vector<2x8x8xf32>, vector<2x8x8xf32>, vector<2x8x8xf32> -> vector<8x8x8xf32>
    "tpu.trace_start"() <{level = 10 : i32, message = "bqd,bkd->bqk"}> : () -> ()
    %cst_13 = arith.constant dense<0.000000e+00> : vector<8x8x8xf32>
    %63 = tpu.matmul %52, %57, %cst_13 {dimension_numbers = #tpu.dot_dimension_numbers<[2], [2], [1], [1], [0, 0, 0, 1, 1, 1], [0], [0]>} : vector<8x8x8xf32>, vector<8x8x8xf32>, vector<8x8x8xf32> -> vector<8x8x8xf32>
    "tpu.trace_stop"() : () -> ()
    %cst_14 = arith.constant dense<0xFF800000> : vector<8x8xf32>
    %64 = vector.multi_reduction <maximumf>, %63, %cst_14 [2] : vector<8x8x8xf32> to vector<8x8xf32>
    %65 = vector.shape_cast %64 : vector<8x8xf32> to vector<8x8x1xf32>
    %66 = vector.broadcast %65 : vector<8x8x1xf32> to vector<8x8x8xf32>
    %67 = arith.subf %63, %66 : vector<8x8x8xf32>
    %68 = math.exp %67 : vector<8x8x8xf32>
    %cst_15 = arith.constant dense<0.000000e+00> : vector<8x8xf32>
    %69 = vector.multi_reduction <add>, %68, %cst_15 [2] : vector<8x8x8xf32> to vector<8x8xf32>
    %70 = vector.shape_cast %69 : vector<8x8xf32> to vector<8x8x1xf32>
    %71 = tpu.reciprocal %70 : vector<8x8x1xf32> -> vector<8x8x1xf32>
    %72 = vector.broadcast %71 : vector<8x8x1xf32> to vector<8x8x8xf32>
    %73 = arith.mulf %68, %72 : vector<8x8x8xf32>
    "tpu.trace_start"() <{level = 10 : i32, message = "bqk,bkd->bqd"}> : () -> ()
    %cst_16 = arith.constant dense<0.000000e+00> : vector<8x8x8xf32>
    %74 = tpu.matmul %73, %62, %cst_16 {dimension_numbers = #tpu.dot_dimension_numbers<[2], [1], [1], [2], [0, 0, 0, 1, 1, 2], [0], [0]>} : vector<8x8x8xf32>, vector<8x8x8xf32>, vector<8x8x8xf32> -> vector<8x8x8xf32>
    "tpu.trace_stop"() : () -> ()
    %75 = vector.extract_strided_slice %74 {offsets = [0, 0, 0], sizes = [2, 8, 8], strides = [1, 1, 1]} : vector<8x8x8xf32> to vector<2x8x8xf32>
    %76 = vector.extract_strided_slice %74 {offsets = [2, 0, 0], sizes = [2, 8, 8], strides = [1, 1, 1]} : vector<8x8x8xf32> to vector<2x8x8xf32>
    %77 = vector.extract_strided_slice %74 {offsets = [4, 0, 0], sizes = [2, 8, 8], strides = [1, 1, 1]} : vector<8x8x8xf32> to vector<2x8x8xf32>
    %78 = vector.extract_strided_slice %74 {offsets = [6, 0, 0], sizes = [2, 8, 8], strides = [1, 1, 1]} : vector<8x8x8xf32> to vector<2x8x8xf32>
    %79 = tpu.concatenate %75, %76, %77, %78 in 2 : vector<2x8x8xf32>, vector<2x8x8xf32>, vector<2x8x8xf32>, vector<2x8x8xf32> -> vector<2x8x32xf32>
    %80 = vector.shape_cast %79 : vector<2x8x32xf32> to vector<16x32xf32>
    %cst_17 = arith.constant dense<0.000000e+00> : vector<16x32xf32>
    %81 = tpu.matmul %80, %6, %cst_17 {dimension_numbers = #tpu.dot_dimension_numbers<[1], [0], [0], [1], [0, 0, 1, 1], [], []>} : vector<16x32xf32>, vector<32x32xf32>, vector<16x32xf32> -> vector<16x32xf32>
    %82 = vector.broadcast %12 : vector<1x32xf32> to vector<16x32xf32>
    %83 = arith.addf %81, %82 : vector<16x32xf32>
    %84 = arith.addf %0, %83 : vector<16x32xf32>
    %cst_18 = arith.constant dense<0.000000e+00> : vector<16xf32>
    %85 = vector.multi_reduction <add>, %84, %cst_18 [1] : vector<16x32xf32> to vector<16xf32>
    %86 = vector.shape_cast %85 : vector<16xf32> to vector<16x1xf32>
    %cst_19 = arith.constant 3.200000e+01 : f32
    %87 = vector.broadcast %cst_19 : f32 to vector<16x1xf32>
    %88 = arith.divf %86, %87 : vector<16x1xf32>
    %89 = vector.broadcast %88 : vector<16x1xf32> to vector<16x32xf32>
    %90 = arith.subf %84, %89 : vector<16x32xf32>
    %91 = arith.mulf %90, %90 : vector<16x32xf32>
    %cst_20 = arith.constant dense<0.000000e+00> : vector<16xf32>
    %92 = vector.multi_reduction <add>, %91, %cst_20 [1] : vector<16x32xf32> to vector<16xf32>
    %93 = vector.shape_cast %92 : vector<16xf32> to vector<16x1xf32>
    %cst_21 = arith.constant 3.200000e+01 : f32
    %94 = vector.broadcast %cst_21 : f32 to vector<16x1xf32>
    %95 = arith.divf %93, %94 : vector<16x1xf32>
    %cst_22 = arith.constant 9.99999974E-6 : f32
    %96 = vector.broadcast %cst_22 : f32 to vector<16x1xf32>
    %97 = arith.addf %95, %96 : vector<16x1xf32>
    %98 = math.rsqrt %97 : vector<16x1xf32>
    %99 = vector.broadcast %98 : vector<16x1xf32> to vector<16x32xf32>
    %100 = arith.mulf %90, %99 : vector<16x32xf32>
    %101 = vector.broadcast %13 : vector<1x32xf32> to vector<16x32xf32>
    %102 = arith.mulf %100, %101 : vector<16x32xf32>
    %103 = vector.broadcast %14 : vector<1x32xf32> to vector<16x32xf32>
    %104 = arith.addf %102, %103 : vector<16x32xf32>
    %cst_23 = arith.constant dense<0.000000e+00> : vector<16x64xf32>
    %105 = tpu.matmul %104, %7, %cst_23 {dimension_numbers = #tpu.dot_dimension_numbers<[1], [0], [0], [1], [0, 0, 1, 1], [], []>} : vector<16x32xf32>, vector<32x64xf32>, vector<16x64xf32> -> vector<16x64xf32>
    %106 = vector.broadcast %15 : vector<1x64xf32> to vector<16x64xf32>
    %107 = arith.addf %105, %106 : vector<16x64xf32>
    %cst_24 = arith.constant 5.000000e-01 : f32
    %108 = vector.broadcast %cst_24 : f32 to vector<16x64xf32>
    %109 = arith.mulf %108, %107 : vector<16x64xf32>
    %cst_25 = arith.constant 0.707106769 : f32
    %110 = vector.broadcast %cst_25 : f32 to vector<16x64xf32>
    %111 = arith.mulf %107, %110 : vector<16x64xf32>
    %112 = math.absf %111 : vector<16x64xf32>
    %cst_26 = arith.constant 0.327591091 : f32
    %113 = vector.broadcast %cst_26 : f32 to vector<16x64xf32>
    %114 = arith.mulf %113, %112 : vector<16x64xf32>
    %cst_27 = arith.constant 1.000000e+00 : f32
    %115 = vector.broadcast %cst_27 : f32 to vector<16x64xf32>
    %116 = arith.addf %115, %114 : vector<16x64xf32>
    %117 = tpu.reciprocal %116 : vector<16x64xf32> -> vector<16x64xf32>
    %cst_28 = arith.constant 1.06140542 : f32
    %118 = vector.broadcast %cst_28 : f32 to vector<16x64xf32>
    %119 = arith.mulf %118, %117 : vector<16x64xf32>
    %cst_29 = arith.constant -1.45315206 : f32
    %120 = vector.broadcast %cst_29 : f32 to vector<16x64xf32>
    %121 = arith.addf %119, %120 : vector<16x64xf32>
    %122 = arith.mulf %121, %117 : vector<16x64xf32>
    %cst_30 = arith.constant 1.42141378 : f32
    %123 = vector.broadcast %cst_30 : f32 to vector<16x64xf32>
    %124 = arith.addf %122, %123 : vector<16x64xf32>
    %125 = arith.mulf %124, %117 : vector<16x64xf32>
    %cst_31 = arith.constant -0.284496725 : f32
    %126 = vector.broadcast %cst_31 : f32 to vector<16x64xf32>
    %127 = arith.addf %125, %126 : vector<16x64xf32>
    %128 = arith.mulf %127, %117 : vector<16x64xf32>
    %cst_32 = arith.constant 0.254829586 : f32
    %129 = vector.broadcast %cst_32 : f32 to vector<16x64xf32>
    %130 = arith.addf %128, %129 : vector<16x64xf32>
    %131 = arith.mulf %130, %117 : vector<16x64xf32>
    %cst_33 = arith.constant 0.000000e+00 : f32
    %132 = vector.broadcast %cst_33 : f32 to vector<16x64xf32>
    %133 = arith.subf %132, %112 : vector<16x64xf32>
    %134 = arith.mulf %133, %112 : vector<16x64xf32>
    %135 = math.exp %134 : vector<16x64xf32>
    %136 = arith.mulf %131, %135 : vector<16x64xf32>
    %cst_34 = arith.constant 1.000000e+00 : f32
    %137 = vector.broadcast %cst_34 : f32 to vector<16x64xf32>
    %138 = arith.subf %137, %136 : vector<16x64xf32>
    %cst_35 = arith.constant 0.000000e+00 : f32
    %139 = vector.broadcast %cst_35 : f32 to vector<16x64xf32>
    %140 = arith.cmpf olt, %111, %139 : vector<16x64xf32>
    %cst_36 = arith.constant 0.000000e+00 : f32
    %141 = vector.broadcast %cst_36 : f32 to vector<16x64xf32>
    %142 = arith.subf %141, %138 : vector<16x64xf32>
    %143 = arith.select %140, %142, %138 : vector<16x64xi1>, vector<16x64xf32>
    %cst_37 = arith.constant 1.000000e+00 : f32
    %144 = vector.broadcast %cst_37 : f32 to vector<16x64xf32>
    %145 = arith.addf %144, %143 : vector<16x64xf32>
    %146 = arith.mulf %109, %145 : vector<16x64xf32>
    %cst_38 = arith.constant dense<0.000000e+00> : vector<16x32xf32>
    %147 = tpu.matmul %146, %8, %cst_38 {dimension_numbers = #tpu.dot_dimension_numbers<[1], [0], [0], [1], [0, 0, 1, 1], [], []>} : vector<16x64xf32>, vector<64x32xf32>, vector<16x32xf32> -> vector<16x32xf32>
    %148 = vector.broadcast %16 : vector<1x32xf32> to vector<16x32xf32>
    %149 = arith.addf %147, %148 : vector<16x32xf32>
    %150 = arith.addf %84, %149 : vector<16x32xf32>
    %c1 = arith.constant 1 : index
    %c0_39 = arith.constant 0 : index
    %c0_40 = arith.constant 0 : index
    %151 = vector.load %arg1[%c1, %c0_39, %c0_40] : memref<2x160x96xf32, #tpu.memory_space<vmem>>, vector<1x160x96xf32>
    %152 = vector.shape_cast %151 : vector<1x160x96xf32> to vector<160x96xf32>
    %c1_41 = arith.constant 1 : index
    %c0_42 = arith.constant 0 : index
    %c0_43 = arith.constant 0 : index
    %153 = vector.load %arg2[%c1_41, %c0_42, %c0_43] : memref<3x8x96xf32, #tpu.memory_space<vmem>>, vector<1x8x96xf32>
    %154 = vector.shape_cast %153 : vector<1x8x96xf32> to vector<8x96xf32>
    %155 = vector.extract_strided_slice %152 {offsets = [0, 0], sizes = [32, 96], strides = [1, 1]} : vector<160x96xf32> to vector<32x96xf32>
    %156 = vector.extract_strided_slice %152 {offsets = [32, 0], sizes = [32, 32], strides = [1, 1]} : vector<160x96xf32> to vector<32x32xf32>
    %157 = vector.extract_strided_slice %152 {offsets = [64, 0], sizes = [32, 64], strides = [1, 1]} : vector<160x96xf32> to vector<32x64xf32>
    %158 = vector.extract_strided_slice %152 {offsets = [96, 0], sizes = [64, 32], strides = [1, 1]} : vector<160x96xf32> to vector<64x32xf32>
    %159 = vector.extract_strided_slice %154 {offsets = [0, 0], sizes = [1, 96], strides = [1, 1]} : vector<8x96xf32> to vector<1x96xf32>
    %160 = vector.extract_strided_slice %154 {offsets = [1, 0], sizes = [1, 32], strides = [1, 1]} : vector<8x96xf32> to vector<1x32xf32>
    %161 = vector.extract_strided_slice %154 {offsets = [2, 0], sizes = [1, 32], strides = [1, 1]} : vector<8x96xf32> to vector<1x32xf32>
    %162 = vector.extract_strided_slice %154 {offsets = [3, 0], sizes = [1, 32], strides = [1, 1]} : vector<8x96xf32> to vector<1x32xf32>
    %163 = vector.extract_strided_slice %154 {offsets = [4, 0], sizes = [1, 32], strides = [1, 1]} : vector<8x96xf32> to vector<1x32xf32>
    %164 = vector.extract_strided_slice %154 {offsets = [5, 0], sizes = [1, 32], strides = [1, 1]} : vector<8x96xf32> to vector<1x32xf32>
    %165 = vector.extract_strided_slice %154 {offsets = [6, 0], sizes = [1, 64], strides = [1, 1]} : vector<8x96xf32> to vector<1x64xf32>
    %166 = vector.extract_strided_slice %154 {offsets = [7, 0], sizes = [1, 32], strides = [1, 1]} : vector<8x96xf32> to vector<1x32xf32>
    %cst_44 = arith.constant dense<0.000000e+00> : vector<16xf32>
    %167 = vector.multi_reduction <add>, %150, %cst_44 [1] : vector<16x32xf32> to vector<16xf32>
    %168 = vector.shape_cast %167 : vector<16xf32> to vector<16x1xf32>
    %cst_45 = arith.constant 3.200000e+01 : f32
    %169 = vector.broadcast %cst_45 : f32 to vector<16x1xf32>
    %170 = arith.divf %168, %169 : vector<16x1xf32>
    %171 = vector.broadcast %170 : vector<16x1xf32> to vector<16x32xf32>
    %172 = arith.subf %150, %171 : vector<16x32xf32>
    %173 = arith.mulf %172, %172 : vector<16x32xf32>
    %cst_46 = arith.constant dense<0.000000e+00> : vector<16xf32>
    %174 = vector.multi_reduction <add>, %173, %cst_46 [1] : vector<16x32xf32> to vector<16xf32>
    %175 = vector.shape_cast %174 : vector<16xf32> to vector<16x1xf32>
    %cst_47 = arith.constant 3.200000e+01 : f32
    %176 = vector.broadcast %cst_47 : f32 to vector<16x1xf32>
    %177 = arith.divf %175, %176 : vector<16x1xf32>
    %cst_48 = arith.constant 9.99999974E-6 : f32
    %178 = vector.broadcast %cst_48 : f32 to vector<16x1xf32>
    %179 = arith.addf %177, %178 : vector<16x1xf32>
    %180 = math.rsqrt %179 : vector<16x1xf32>
    %181 = vector.broadcast %180 : vector<16x1xf32> to vector<16x32xf32>
    %182 = arith.mulf %172, %181 : vector<16x32xf32>
    %183 = vector.broadcast %160 : vector<1x32xf32> to vector<16x32xf32>
    %184 = arith.mulf %182, %183 : vector<16x32xf32>
    %185 = vector.broadcast %161 : vector<1x32xf32> to vector<16x32xf32>
    %186 = arith.addf %184, %185 : vector<16x32xf32>
    %cst_49 = arith.constant dense<0.000000e+00> : vector<16x96xf32>
    %187 = tpu.matmul %186, %155, %cst_49 {dimension_numbers = #tpu.dot_dimension_numbers<[1], [0], [0], [1], [0, 0, 1, 1], [], []>} : vector<16x32xf32>, vector<32x96xf32>, vector<16x96xf32> -> vector<16x96xf32>
    %188 = vector.broadcast %159 : vector<1x96xf32> to vector<16x96xf32>
    %189 = arith.addf %187, %188 : vector<16x96xf32>
    %190 = vector.extract_strided_slice %189 {offsets = [0, 0], sizes = [16, 32], strides = [1, 1]} : vector<16x96xf32> to vector<16x32xf32>
    %cst_50 = arith.constant 0.353553385 : f32
    %191 = vector.broadcast %cst_50 : f32 to vector<16x32xf32>
    %192 = arith.mulf %190, %191 : vector<16x32xf32>
    %193 = vector.extract_strided_slice %189 {offsets = [0, 32], sizes = [16, 32], strides = [1, 1]} : vector<16x96xf32> to vector<16x32xf32>
    %194 = vector.extract_strided_slice %189 {offsets = [0, 64], sizes = [16, 32], strides = [1, 1]} : vector<16x96xf32> to vector<16x32xf32>
    %195 = vector.shape_cast %192 : vector<16x32xf32> to vector<2x8x32xf32>
    %196 = vector.shape_cast %193 : vector<16x32xf32> to vector<2x8x32xf32>
    %197 = vector.shape_cast %194 : vector<16x32xf32> to vector<2x8x32xf32>
    %198 = vector.extract_strided_slice %195 {offsets = [0, 0, 0], sizes = [2, 8, 8], strides = [1, 1, 1]} : vector<2x8x32xf32> to vector<2x8x8xf32>
    %199 = vector.extract_strided_slice %195 {offsets = [0, 0, 8], sizes = [2, 8, 8], strides = [1, 1, 1]} : vector<2x8x32xf32> to vector<2x8x8xf32>
    %200 = vector.extract_strided_slice %195 {offsets = [0, 0, 16], sizes = [2, 8, 8], strides = [1, 1, 1]} : vector<2x8x32xf32> to vector<2x8x8xf32>
    %201 = vector.extract_strided_slice %195 {offsets = [0, 0, 24], sizes = [2, 8, 8], strides = [1, 1, 1]} : vector<2x8x32xf32> to vector<2x8x8xf32>
    %202 = tpu.concatenate %198, %199, %200, %201 in 0 : vector<2x8x8xf32>, vector<2x8x8xf32>, vector<2x8x8xf32>, vector<2x8x8xf32> -> vector<8x8x8xf32>
    %203 = vector.extract_strided_slice %196 {offsets = [0, 0, 0], sizes = [2, 8, 8], strides = [1, 1, 1]} : vector<2x8x32xf32> to vector<2x8x8xf32>
    %204 = vector.extract_strided_slice %196 {offsets = [0, 0, 8], sizes = [2, 8, 8], strides = [1, 1, 1]} : vector<2x8x32xf32> to vector<2x8x8xf32>
    %205 = vector.extract_strided_slice %196 {offsets = [0, 0, 16], sizes = [2, 8, 8], strides = [1, 1, 1]} : vector<2x8x32xf32> to vector<2x8x8xf32>
    %206 = vector.extract_strided_slice %196 {offsets = [0, 0, 24], sizes = [2, 8, 8], strides = [1, 1, 1]} : vector<2x8x32xf32> to vector<2x8x8xf32>
    %207 = tpu.concatenate %203, %204, %205, %206 in 0 : vector<2x8x8xf32>, vector<2x8x8xf32>, vector<2x8x8xf32>, vector<2x8x8xf32> -> vector<8x8x8xf32>
    %208 = vector.extract_strided_slice %197 {offsets = [0, 0, 0], sizes = [2, 8, 8], strides = [1, 1, 1]} : vector<2x8x32xf32> to vector<2x8x8xf32>
    %209 = vector.extract_strided_slice %197 {offsets = [0, 0, 8], sizes = [2, 8, 8], strides = [1, 1, 1]} : vector<2x8x32xf32> to vector<2x8x8xf32>
    %210 = vector.extract_strided_slice %197 {offsets = [0, 0, 16], sizes = [2, 8, 8], strides = [1, 1, 1]} : vector<2x8x32xf32> to vector<2x8x8xf32>
    %211 = vector.extract_strided_slice %197 {offsets = [0, 0, 24], sizes = [2, 8, 8], strides = [1, 1, 1]} : vector<2x8x32xf32> to vector<2x8x8xf32>
    %212 = tpu.concatenate %208, %209, %210, %211 in 0 : vector<2x8x8xf32>, vector<2x8x8xf32>, vector<2x8x8xf32>, vector<2x8x8xf32> -> vector<8x8x8xf32>
    "tpu.trace_start"() <{level = 10 : i32, message = "bqd,bkd->bqk"}> : () -> ()
    %cst_51 = arith.constant dense<0.000000e+00> : vector<8x8x8xf32>
    %213 = tpu.matmul %202, %207, %cst_51 {dimension_numbers = #tpu.dot_dimension_numbers<[2], [2], [1], [1], [0, 0, 0, 1, 1, 1], [0], [0]>} : vector<8x8x8xf32>, vector<8x8x8xf32>, vector<8x8x8xf32> -> vector<8x8x8xf32>
    "tpu.trace_stop"() : () -> ()
    %cst_52 = arith.constant dense<0xFF800000> : vector<8x8xf32>
    %214 = vector.multi_reduction <maximumf>, %213, %cst_52 [2] : vector<8x8x8xf32> to vector<8x8xf32>
    %215 = vector.shape_cast %214 : vector<8x8xf32> to vector<8x8x1xf32>
    %216 = vector.broadcast %215 : vector<8x8x1xf32> to vector<8x8x8xf32>
    %217 = arith.subf %213, %216 : vector<8x8x8xf32>
    %218 = math.exp %217 : vector<8x8x8xf32>
    %cst_53 = arith.constant dense<0.000000e+00> : vector<8x8xf32>
    %219 = vector.multi_reduction <add>, %218, %cst_53 [2] : vector<8x8x8xf32> to vector<8x8xf32>
    %220 = vector.shape_cast %219 : vector<8x8xf32> to vector<8x8x1xf32>
    %221 = tpu.reciprocal %220 : vector<8x8x1xf32> -> vector<8x8x1xf32>
    %222 = vector.broadcast %221 : vector<8x8x1xf32> to vector<8x8x8xf32>
    %223 = arith.mulf %218, %222 : vector<8x8x8xf32>
    "tpu.trace_start"() <{level = 10 : i32, message = "bqk,bkd->bqd"}> : () -> ()
    %cst_54 = arith.constant dense<0.000000e+00> : vector<8x8x8xf32>
    %224 = tpu.matmul %223, %212, %cst_54 {dimension_numbers = #tpu.dot_dimension_numbers<[2], [1], [1], [2], [0, 0, 0, 1, 1, 2], [0], [0]>} : vector<8x8x8xf32>, vector<8x8x8xf32>, vector<8x8x8xf32> -> vector<8x8x8xf32>
    "tpu.trace_stop"() : () -> ()
    %225 = vector.extract_strided_slice %224 {offsets = [0, 0, 0], sizes = [2, 8, 8], strides = [1, 1, 1]} : vector<8x8x8xf32> to vector<2x8x8xf32>
    %226 = vector.extract_strided_slice %224 {offsets = [2, 0, 0], sizes = [2, 8, 8], strides = [1, 1, 1]} : vector<8x8x8xf32> to vector<2x8x8xf32>
    %227 = vector.extract_strided_slice %224 {offsets = [4, 0, 0], sizes = [2, 8, 8], strides = [1, 1, 1]} : vector<8x8x8xf32> to vector<2x8x8xf32>
    %228 = vector.extract_strided_slice %224 {offsets = [6, 0, 0], sizes = [2, 8, 8], strides = [1, 1, 1]} : vector<8x8x8xf32> to vector<2x8x8xf32>
    %229 = tpu.concatenate %225, %226, %227, %228 in 2 : vector<2x8x8xf32>, vector<2x8x8xf32>, vector<2x8x8xf32>, vector<2x8x8xf32> -> vector<2x8x32xf32>
    %230 = vector.shape_cast %229 : vector<2x8x32xf32> to vector<16x32xf32>
    %cst_55 = arith.constant dense<0.000000e+00> : vector<16x32xf32>
    %231 = tpu.matmul %230, %156, %cst_55 {dimension_numbers = #tpu.dot_dimension_numbers<[1], [0], [0], [1], [0, 0, 1, 1], [], []>} : vector<16x32xf32>, vector<32x32xf32>, vector<16x32xf32> -> vector<16x32xf32>
    %232 = vector.broadcast %162 : vector<1x32xf32> to vector<16x32xf32>
    %233 = arith.addf %231, %232 : vector<16x32xf32>
    %234 = arith.addf %150, %233 : vector<16x32xf32>
    %cst_56 = arith.constant dense<0.000000e+00> : vector<16xf32>
    %235 = vector.multi_reduction <add>, %234, %cst_56 [1] : vector<16x32xf32> to vector<16xf32>
    %236 = vector.shape_cast %235 : vector<16xf32> to vector<16x1xf32>
    %cst_57 = arith.constant 3.200000e+01 : f32
    %237 = vector.broadcast %cst_57 : f32 to vector<16x1xf32>
    %238 = arith.divf %236, %237 : vector<16x1xf32>
    %239 = vector.broadcast %238 : vector<16x1xf32> to vector<16x32xf32>
    %240 = arith.subf %234, %239 : vector<16x32xf32>
    %241 = arith.mulf %240, %240 : vector<16x32xf32>
    %cst_58 = arith.constant dense<0.000000e+00> : vector<16xf32>
    %242 = vector.multi_reduction <add>, %241, %cst_58 [1] : vector<16x32xf32> to vector<16xf32>
    %243 = vector.shape_cast %242 : vector<16xf32> to vector<16x1xf32>
    %cst_59 = arith.constant 3.200000e+01 : f32
    %244 = vector.broadcast %cst_59 : f32 to vector<16x1xf32>
    %245 = arith.divf %243, %244 : vector<16x1xf32>
    %cst_60 = arith.constant 9.99999974E-6 : f32
    %246 = vector.broadcast %cst_60 : f32 to vector<16x1xf32>
    %247 = arith.addf %245, %246 : vector<16x1xf32>
    %248 = math.rsqrt %247 : vector<16x1xf32>
    %249 = vector.broadcast %248 : vector<16x1xf32> to vector<16x32xf32>
    %250 = arith.mulf %240, %249 : vector<16x32xf32>
    %251 = vector.broadcast %163 : vector<1x32xf32> to vector<16x32xf32>
    %252 = arith.mulf %250, %251 : vector<16x32xf32>
    %253 = vector.broadcast %164 : vector<1x32xf32> to vector<16x32xf32>
    %254 = arith.addf %252, %253 : vector<16x32xf32>
    %cst_61 = arith.constant dense<0.000000e+00> : vector<16x64xf32>
    %255 = tpu.matmul %254, %157, %cst_61 {dimension_numbers = #tpu.dot_dimension_numbers<[1], [0], [0], [1], [0, 0, 1, 1], [], []>} : vector<16x32xf32>, vector<32x64xf32>, vector<16x64xf32> -> vector<16x64xf32>
    %256 = vector.broadcast %165 : vector<1x64xf32> to vector<16x64xf32>
    %257 = arith.addf %255, %256 : vector<16x64xf32>
    %cst_62 = arith.constant 5.000000e-01 : f32
    %258 = vector.broadcast %cst_62 : f32 to vector<16x64xf32>
    %259 = arith.mulf %258, %257 : vector<16x64xf32>
    %cst_63 = arith.constant 0.707106769 : f32
    %260 = vector.broadcast %cst_63 : f32 to vector<16x64xf32>
    %261 = arith.mulf %257, %260 : vector<16x64xf32>
    %262 = math.absf %261 : vector<16x64xf32>
    %cst_64 = arith.constant 0.327591091 : f32
    %263 = vector.broadcast %cst_64 : f32 to vector<16x64xf32>
    %264 = arith.mulf %263, %262 : vector<16x64xf32>
    %cst_65 = arith.constant 1.000000e+00 : f32
    %265 = vector.broadcast %cst_65 : f32 to vector<16x64xf32>
    %266 = arith.addf %265, %264 : vector<16x64xf32>
    %267 = tpu.reciprocal %266 : vector<16x64xf32> -> vector<16x64xf32>
    %cst_66 = arith.constant 1.06140542 : f32
    %268 = vector.broadcast %cst_66 : f32 to vector<16x64xf32>
    %269 = arith.mulf %268, %267 : vector<16x64xf32>
    %cst_67 = arith.constant -1.45315206 : f32
    %270 = vector.broadcast %cst_67 : f32 to vector<16x64xf32>
    %271 = arith.addf %269, %270 : vector<16x64xf32>
    %272 = arith.mulf %271, %267 : vector<16x64xf32>
    %cst_68 = arith.constant 1.42141378 : f32
    %273 = vector.broadcast %cst_68 : f32 to vector<16x64xf32>
    %274 = arith.addf %272, %273 : vector<16x64xf32>
    %275 = arith.mulf %274, %267 : vector<16x64xf32>
    %cst_69 = arith.constant -0.284496725 : f32
    %276 = vector.broadcast %cst_69 : f32 to vector<16x64xf32>
    %277 = arith.addf %275, %276 : vector<16x64xf32>
    %278 = arith.mulf %277, %267 : vector<16x64xf32>
    %cst_70 = arith.constant 0.254829586 : f32
    %279 = vector.broadcast %cst_70 : f32 to vector<16x64xf32>
    %280 = arith.addf %278, %279 : vector<16x64xf32>
    %281 = arith.mulf %280, %267 : vector<16x64xf32>
    %cst_71 = arith.constant 0.000000e+00 : f32
    %282 = vector.broadcast %cst_71 : f32 to vector<16x64xf32>
    %283 = arith.subf %282, %262 : vector<16x64xf32>
    %284 = arith.mulf %283, %262 : vector<16x64xf32>
    %285 = math.exp %284 : vector<16x64xf32>
    %286 = arith.mulf %281, %285 : vector<16x64xf32>
    %cst_72 = arith.constant 1.000000e+00 : f32
    %287 = vector.broadcast %cst_72 : f32 to vector<16x64xf32>
    %288 = arith.subf %287, %286 : vector<16x64xf32>
    %cst_73 = arith.constant 0.000000e+00 : f32
    %289 = vector.broadcast %cst_73 : f32 to vector<16x64xf32>
    %290 = arith.cmpf olt, %261, %289 : vector<16x64xf32>
    %cst_74 = arith.constant 0.000000e+00 : f32
    %291 = vector.broadcast %cst_74 : f32 to vector<16x64xf32>
    %292 = arith.subf %291, %288 : vector<16x64xf32>
    %293 = arith.select %290, %292, %288 : vector<16x64xi1>, vector<16x64xf32>
    %cst_75 = arith.constant 1.000000e+00 : f32
    %294 = vector.broadcast %cst_75 : f32 to vector<16x64xf32>
    %295 = arith.addf %294, %293 : vector<16x64xf32>
    %296 = arith.mulf %259, %295 : vector<16x64xf32>
    %cst_76 = arith.constant dense<0.000000e+00> : vector<16x32xf32>
    %297 = tpu.matmul %296, %158, %cst_76 {dimension_numbers = #tpu.dot_dimension_numbers<[1], [0], [0], [1], [0, 0, 1, 1], [], []>} : vector<16x64xf32>, vector<64x32xf32>, vector<16x32xf32> -> vector<16x32xf32>
    %298 = vector.broadcast %166 : vector<1x32xf32> to vector<16x32xf32>
    %299 = arith.addf %297, %298 : vector<16x32xf32>
    %300 = arith.addf %234, %299 : vector<16x32xf32>
    %c2 = arith.constant 2 : index
    %c0_77 = arith.constant 0 : index
    %c0_78 = arith.constant 0 : index
    %301 = vector.load %arg2[%c2, %c0_77, %c0_78] : memref<3x8x96xf32, #tpu.memory_space<vmem>>, vector<1x8x96xf32>
    %302 = vector.shape_cast %301 : vector<1x8x96xf32> to vector<8x96xf32>
    %303 = vector.extract_strided_slice %302 {offsets = [0, 0], sizes = [1, 32], strides = [1, 1]} : vector<8x96xf32> to vector<1x32xf32>
    %304 = vector.extract_strided_slice %302 {offsets = [1, 0], sizes = [1, 32], strides = [1, 1]} : vector<8x96xf32> to vector<1x32xf32>
    %cst_79 = arith.constant dense<0.000000e+00> : vector<16xf32>
    %305 = vector.multi_reduction <add>, %300, %cst_79 [1] : vector<16x32xf32> to vector<16xf32>
    %306 = vector.shape_cast %305 : vector<16xf32> to vector<16x1xf32>
    %cst_80 = arith.constant 3.200000e+01 : f32
    %307 = vector.broadcast %cst_80 : f32 to vector<16x1xf32>
    %308 = arith.divf %306, %307 : vector<16x1xf32>
    %309 = vector.broadcast %308 : vector<16x1xf32> to vector<16x32xf32>
    %310 = arith.subf %300, %309 : vector<16x32xf32>
    %311 = arith.mulf %310, %310 : vector<16x32xf32>
    %cst_81 = arith.constant dense<0.000000e+00> : vector<16xf32>
    %312 = vector.multi_reduction <add>, %311, %cst_81 [1] : vector<16x32xf32> to vector<16xf32>
    %313 = vector.shape_cast %312 : vector<16xf32> to vector<16x1xf32>
    %cst_82 = arith.constant 3.200000e+01 : f32
    %314 = vector.broadcast %cst_82 : f32 to vector<16x1xf32>
    %315 = arith.divf %313, %314 : vector<16x1xf32>
    %cst_83 = arith.constant 9.99999974E-6 : f32
    %316 = vector.broadcast %cst_83 : f32 to vector<16x1xf32>
    %317 = arith.addf %315, %316 : vector<16x1xf32>
    %318 = math.rsqrt %317 : vector<16x1xf32>
    %319 = vector.broadcast %318 : vector<16x1xf32> to vector<16x32xf32>
    %320 = arith.mulf %310, %319 : vector<16x32xf32>
    %321 = vector.broadcast %303 : vector<1x32xf32> to vector<16x32xf32>
    %322 = arith.mulf %320, %321 : vector<16x32xf32>
    %323 = vector.broadcast %304 : vector<1x32xf32> to vector<16x32xf32>
    %324 = arith.addf %322, %323 : vector<16x32xf32>
    %325 = vector.extract_strided_slice %324 {offsets = [0, 0], sizes = [8, 32], strides = [1, 1]} : vector<16x32xf32> to vector<8x32xf32>
    %c0_84 = arith.constant 0 : index
    %c0_85 = arith.constant 0 : index
    %326 = vector.load %arg3[%c0_84, %c0_85] : memref<8x64xf32, #tpu.memory_space<vmem>>, vector<8x32xf32>
    tpu.vector_store %arg3[%c0_84, %c0_85], %325 {strides = array<i32>} : memref<8x64xf32, #tpu.memory_space<vmem>>, vector<8x32xf32>,
    %327 = vector.extract_strided_slice %324 {offsets = [8, 0], sizes = [8, 32], strides = [1, 1]} : vector<16x32xf32> to vector<8x32xf32>
    %c0_86 = arith.constant 0 : index
    %c32 = arith.constant 32 : index
    %328 = vector.load %arg3[%c0_86, %c32] : memref<8x64xf32, #tpu.memory_space<vmem>>, vector<8x32xf32>
    tpu.vector_store %arg3[%c0_86, %c32], %327 {strides = array<i32>} : memref<8x64xf32, #tpu.memory_space<vmem>>, vector<8x32xf32>,
    return
  }
}

</mosaic_0001>

<llo_original>
// kernel: encoder_forward.1
$region0: #{encoder_forward.1}
  #allocation0 [shape = 'u32[]', space=smem, size = 0x4, offset = 0x4, fixed_abs, tag = 'smem constant byte address 0x4 - core index']
  #allocation1 [shape = 'u32[144,128]{1,0:T(1,128)}', space=vmem, size = 0x12000, scoped, tag = 'internal scratch']
  %s0 = inlined_call_operand.hbm [shape: f32[16,32], index: 0, kind: input, shape index: {}]
  %s1 = inlined_call_operand.hbm [shape: f32[2,160,96], index: 1, kind: input, shape index: {}]
  %s2 = inlined_call_operand.hbm [shape: f32[3,8,96], index: 2, kind: input, shape index: {}]
  %s3 = inlined_call_operand.vmem [shape: f32[8,64], index: 3, kind: output, shape index: {}]
  %s4 = sld [smem:[#allocation0]]
  $region34: #{encoder_forward.1} parent=0
    _
  %s6 = ssub.s32 1, %s4
  %s7 = scalar_select 0, %s6, %s4
  $region1: #{encoder_forward.1} parent=0
    #allocation2 [shape = 'u8[8192]{0}', space=vmem, size = 0x2000, scoped, tag = 'input window, operand 0, single buffered']
    #allocation3 [shape = 's32[1]{0}', space=sflag, size = 0x4, scoped, tag = 'scoped memory for encoder_forward.1']
    #allocation4 [shape = 'u8[163840]{0}', space=vmem, size = 0x28000, scoped, tag = 'input window, operand 1, single buffered']
    #allocation5 [shape = 's32[1]{0}', space=sflag, size = 0x4, scoped, tag = 'scoped memory for encoder_forward.1']
    #allocation6 [shape = 'u8[12288]{0}', space=vmem, size = 0x3000, scoped, tag = 'input window, operand 2, single buffered']
    %8 = vsyncpa [#allocation3], 0
    %9 = vsyncpa [#allocation5], 0
    // Predicated region
    $region2: #{encoder_forward.1} parent=1 // pred_check
      _
    $region3: #{encoder_forward.1} parent=1 // pred_check_branch
      %11 = sbr.rel (0) target = $region5
    $region4: #{encoder_forward.1} parent=1 // pred_region
      %s13 = ssub.s32 256, 256
      %14 = vsyncadd [#allocation3], %s13
      %s15 = sshll.u32 [#allocation2], 4
      %s16 = int_to_ptr.vmem [resolvable:$true] %s15
      %21 = dma.hbm_to_vmem [thread:$0]  %s0, 256, %s16, [#allocation3], 128, 128, 8
    $region5: #{encoder_forward.1} parent=1 // pred_fallthru
      _
    // Predicated region
    $region6: #{encoder_forward.1} parent=1 // pred_check
      _
    $region7: #{encoder_forward.1} parent=1 // pred_check_branch
      %23 = sbr.rel (0) target = $region9
    $region8: #{encoder_forward.1} parent=1 // pred_region
      %s25 = ssub.s32 5120, 5120
      %26 = vsyncadd [#allocation5], %s25
      %s27 = sshll.u32 [#allocation4], 4
      %s28 = int_to_ptr.vmem [resolvable:$true] %s27
      %33 = dma.hbm_to_vmem [thread:$0]  %s1, 5120, %s28, [#allocation5], 128, 128, 8
    $region9: #{encoder_forward.1} parent=1 // pred_fallthru
      _
    // Predicated region
    $region10: #{encoder_forward.1} parent=1 // pred_check
      _
    $region11: #{encoder_forward.1} parent=1 // pred_check_branch
      %35 = sbr.rel (0) target = $region13
    $region12: #{encoder_forward.1} parent=1 // pred_region
      %s37 = ssub.s32 384, 384
      %38 = vsyncadd [#allocation5], %s37
      %s39 = sshll.u32 [#allocation6], 4
      %s40 = int_to_ptr.vmem [resolvable:$true] %s39
      %45 = dma.hbm_to_vmem [thread:$0]  %s2, 384, %s40, [#allocation5], 128, 128, 8
    $region13: #{encoder_forward.1} parent=1 // pred_fallthru
      _
    // Predicated region
    $region14: #{encoder_forward.1} parent=1 // pred_check
      _
    $region15: #{encoder_forward.1} parent=1 // pred_check_branch
      %47 = sbr.rel (0) target = $region17
    $region16: #{encoder_forward.1} parent=1 // pred_region
      %48 = dma.done [#allocation3], 256
    $region17: #{encoder_forward.1} parent=1 // pred_fallthru
      _
    // Predicated region
    $region18: #{encoder_forward.1} parent=1 // pred_check
      _
    $region19: #{encoder_forward.1} parent=1 // pred_check_branch
      %50 = sbr.rel (0) target = $region21
    $region20: #{encoder_forward.1} parent=1 // pred_region
      %51 = dma.done [#allocation5], 5120
    $region21: #{encoder_forward.1} parent=1 // pred_fallthru
      _
    // Predicated region
    $region22: #{encoder_forward.1} parent=1 // pred_check
      _
    $region23: #{encoder_forward.1} parent=1 // pred_check_branch
      %53 = sbr.rel (0) target = $region25
    $region24: #{encoder_forward.1} parent=1 // pred_region
      %54 = dma.done [#allocation5], 384
    $region25: #{encoder_forward.1} parent=1 // pred_fallthru
      _
    %v55 = vld [vmem:[#allocation2] sm:$0xff]
    %v56 = vld [vmem:[#allocation2 + $0x8] sm:$0xff]
    %v57 = vld [vmem:[#allocation4] sm:$0xff]
    %v58 = vld [vmem:[#allocation4 + $0x8] sm:$0xff]
    %v59 = vld [vmem:[#allocation4 + $0x10] sm:$0xff]
    %v60 = vld [vmem:[#allocation4 + $0x18] sm:$0xff]
    %v61 = vld [vmem:[#allocation4 + $0x20] sm:$0xff]
    %v62 = vld [vmem:[#allocation4 + $0x28] sm:$0xff]
    %v63 = vld [vmem:[#allocation4 + $0x30] sm:$0xff]
    %v64 = vld [vmem:[#allocation4 + $0x38] sm:$0xff]
    %v65 = vld [vmem:[#allocation4 + $0x40] sm:$0xff]
    %v66 = vld [vmem:[#allocation4 + $0x48] sm:$0xff]
    %v67 = vld [vmem:[#allocation4 + $0x50] sm:$0xff]
    %v68 = vld [vmem:[#allocation4 + $0x58] sm:$0xff]
    %v69 = vld [vmem:[#allocation4 + $0x60] sm:$0xff]
    %v70 = vld [vmem:[#allocation4 + $0x68] sm:$0xff]
    %v71 = vld [vmem:[#allocation4 + $0x70] sm:$0xff]
    %v72 = vld [vmem:[#allocation4 + $0x78] sm:$0xff]
    %v73 = vld [vmem:[#allocation4 + $0x80] sm:$0xff]
    %v74 = vld [vmem:[#allocation4 + $0x88] sm:$0xff]
    %v75 = vld [vmem:[#allocation4 + $0x90] sm:$0xff]
    %v76 = vld [vmem:[#allocation4 + $0x98] sm:$0xff]
    %v77 = vld [vmem:[#allocation6] sm:$0xff]
    %vm78 = vcmask 261120
    %v79 = vsel %vm78, %v55, 0.0
    %80 = vadd.xlane.f32.xlu0 %v79
    %v81 = vpop.xlane.xlu0 %80
    %v82 = vsel %vm78, %v56, 0.0
    %83 = vadd.xlane.f32.xlu0 %v82
    %v84 = vpop.xlane.xlu0 %83
    %v85 = vrcp.pop 32.0
    %v86 = vmul.f32 %v81, %v85
    %v87 = vmul.f32 %v84, %v85
    %v88 = vsub.f32 %v55, %v86
    %v89 = vsub.f32 %v56, %v87
    %v90 = vmul.f32 %v88, %v88
    %v91 = vmul.f32 %v89, %v89
    %v92 = vsel %vm78, %v90, 0.0
    %93 = vadd.xlane.f32.xlu0 %v92
    %v94 = vpop.xlane.xlu0 %93
    %v95 = vsel %vm78, %v91, 0.0
    %96 = vadd.xlane.f32.xlu0 %v95
    %v97 = vpop.xlane.xlu0 %96
    %v98 = vmul.f32 %v94, %v85
    %v99 = vmul.f32 %v97, %v85
    %v100 = vadd.f32 %v98, 1e-05
    %v101 = vadd.f32 %v99, 1e-05
    %v102 = vrsqrt.pop %v100
    %v103 = vrsqrt.pop %v101
    %v104 = vmul.f32 %v88, %v102
    %v105 = vmul.f32 %v89, %v103
    %v106 = vlaneseq
    %v107 = vshrl.u32 %v106, 7
    %v108 = vsub.s32 1, %v107
    %v109 = vrot.slane %v77, %v108
    %v110 = vmul.f32 %v104, %v109
    %v111 = vmul.f32 %v105, %v109
    %v112 = vlaneseq
    %v113 = vshrl.u32 %v112, 7
    %v114 = vsub.s32 2, %v113
    %v115 = vrot.slane %v77, %v114
    %v116 = vadd.f32 %v110, %v115
    %v117 = vadd.f32 %v111, %v115
    %v118 = vlaneseq
    %v119 = vshrl.u32 %v118, 7
    %v120 = vsub.s32 0, %v119
    %v121 = vrot.slane %v77, %v120
    %v123 = vsel %vm78, %v116, 0
    %v126 = vsel %vm78, %v117, 0
    %128 = vmatprep.subr.mxu0 0.0
    %129 = vmatpush1.msra.mxu0 %v57
    %130 = vmatprep.subr.mxu0 0.0
    %131 = vmatpush1.msra.mxu0 %v58
    %132 = vmatprep.subr.mxu0 0.0
    %133 = vmatpush1.msra.mxu0 %v59
    %134 = vmatprep.subr.mxu0 0.0
    %135 = vmatpush1.msra.mxu0 %v60
    %136 = vmatprep.subr.mxu0 0.0
    %137 = vmatpush1.msra.mxu0 0.0
    %138 = vmatprep.subr.mxu0 0.0
    %139 = vmatpush1.msra.mxu0 0.0
    %140 = vmatprep.subr.mxu0 0.0
    %141 = vmatpush1.msra.mxu0 0.0
    %142 = vmatprep.subr.mxu0 0.0
    %143 = vmatpush1.msra.mxu0 0.0
    %144 = vmatprep.subr.mxu0 0.0
    %145 = vmatpush1.msra.mxu0 0.0
    %146 = vmatprep.subr.mxu0 0.0
    %147 = vmatpush1.msra.mxu0 0.0
    %148 = vmatprep.subr.mxu0 0.0
    %149 = vmatpush1.msra.mxu0 0.0
    %150 = vmatprep.subr.mxu0 0.0
    %151 = vmatpush1.msra.mxu0 0.0
    %152 = vmatprep.subr.mxu0 0.0
    %153 = vmatpush1.msra.mxu0 0.0
    %154 = vmatprep.subr.mxu0 0.0
    %155 = vmatpush1.msra.mxu0 0.0
    %156 = vmatprep.subr.mxu0 0.0
    %157 = vmatpush1.msra.mxu0 0.0
    %158 = vmatprep.subr.mxu0 0.0
    %159 = vmatpush1.msra.mxu0 0.0
    %160 = vmatprep.subr.mxu0 0.0
    %161 = vmatpush1.msra.mxu0 0.0
    %162 = vmatprep.subr.mxu0 0.0
    %163 = vmatpush1.msra.mxu0 0.0
    %164 = vmatprep.subr.mxu0 0.0
    %165 = vmatpush1.msra.mxu0 0.0
    %166 = vmatprep.subr.mxu0 0.0
    %167 = vmatpush1.msra.mxu0 0.0
    %168 = vmatprep.subr.mxu0 0.0
    %169 = vmatpush1.msra.mxu0 0.0
    %170 = vmatprep.subr.mxu0 0.0
    %171 = vmatpush1.msra.mxu0 0.0
    %172 = vmatprep.subr.mxu0 0.0
    %173 = vmatpush1.msra.mxu0 0.0
    %174 = vmatprep.subr.mxu0 0.0
    %175 = vmatpush1.msra.mxu0 0.0
    %176 = vmatprep.subr.mxu0 0.0
    %177 = vmatpush1.msra.mxu0 0.0
    %178 = vmatprep.subr.mxu0 0.0
    %179 = vmatpush1.msra.mxu0 0.0
    %180 = vmatprep.subr.mxu0 0.0
    %181 = vmatpush1.msra.mxu0 0.0
    %182 = vmatprep.subr.mxu0 0.0
    %183 = vmatpush1.msra.mxu0 0.0
    %184 = vmatprep.subr.mxu0 0.0
    %185 = vmatpush1.msra.mxu0 0.0
    %186 = vmatprep.subr.mxu0 0.0
    %187 = vmatpush1.msra.mxu0 0.0
    %188 = vmatprep.subr.mxu0 0.0
    %189 = vmatpush1.msra.mxu0 0.0
    %190 = vmatprep.subr.mxu0 0.0
    %191 = vmatpush1.msra.mxu0 0.0
    %192 = vmatprep.mubr.f32.mxu0 0.0
    %193 = vmatmul.mubr.f32.gmra.mrb[0].mxu0 %v123
    %v194 = vpop.f32.mrb[0].mxu0
    %v195 = vadd.f32 %v121, %v194
    %v196 = vpop.f32.mrb[0].mxu0
    %197 = vmatprep.mubr.f32.mxu0 0.0
    %198 = vmatmul.mubr.f32.gmra.mrb[0].mxu0 %v126
    %v199 = vpop.f32.mrb[0].mxu0
    %v200 = vadd.f32 %v121, %v199
    %v201 = vpop.f32.mrb[0].mxu0
    %202 = vdwg.mxu0
    %v203 = vmul.f32 %v195, 0.35355338
    %v204 = vmul.f32 %v200, 0.35355338
    %207 = vrot.lane.b32.xlu0 %v203, 120
    %v208 = vpop.permute.xlu0 %207
    %209 = vrot.lane.b32.xlu0 %v204, 120
    %v210 = vpop.permute.xlu0 %209
    %211 = vrot.lane.b32.xlu0 %v203, 112
    %v212 = vpop.permute.xlu0 %211
    %213 = vrot.lane.b32.xlu0 %v204, 112
    %v214 = vpop.permute.xlu0 %213
    %215 = vrot.lane.b32.xlu0 %v203, 104
    %v216 = vpop.permute.xlu0 %215
    %217 = vrot.lane.b32.xlu0 %v204, 104
    %v218 = vpop.permute.xlu0 %217
    %221 = vrot.lane.b32.xlu0 %v195, 120
    %v222 = vpop.permute.xlu0 %221
    %223 = vrot.lane.b32.xlu0 %v200, 120
    %v224 = vpop.permute.xlu0 %223
    %225 = vrot.lane.b32.xlu0 %v195, 112
    %v226 = vpop.permute.xlu0 %225
    %227 = vrot.lane.b32.xlu0 %v200, 112
    %v228 = vpop.permute.xlu0 %227
    %229 = vrot.lane.b32.xlu0 %v195, 104
    %v230 = vpop.permute.xlu0 %229
    %231 = vrot.lane.b32.xlu0 %v200, 104
    %v232 = vpop.permute.xlu0 %231
    %233 = vrot.lane.b32.xlu0 %v195, 96
    %v234 = vpop.permute.xlu0 %233
    %vm235 = vcmask 64512
    %v236 = vsel %vm235, %v203, 0
    %v238 = vsel %vm235, %v234, 0
    %240 = vmatprep.subr.mxu0 0.0
    %241 = vmatpush1.xpose.msra.mxu0 %v238
    %242 = vmatprep.subr.mxu0 0.0
    %243 = vmatpush1.xpose.msra.mxu0 0.0
    %244 = vmatprep.subr.mxu0 0.0
    %245 = vmatpush1.xpose.msra.mxu0 0.0
    %246 = vmatprep.subr.mxu0 0.0
    %247 = vmatpush1.xpose.msra.mxu0 0.0
    %248 = vmatprep.subr.mxu0 0.0
    %249 = vmatpush1.xpose.msra.mxu0 0.0
    %250 = vmatprep.subr.mxu0 0.0
    %251 = vmatpush1.xpose.msra.mxu0 0.0
    %252 = vmatprep.subr.mxu0 0.0
    %253 = vmatpush1.xpose.msra.mxu0 0.0
    %254 = vmatprep.subr.mxu0 0.0
    %255 = vmatpush1.xpose.msra.mxu0 0.0
    %256 = vmatprep.subr.mxu0 0.0
    %257 = vmatpush1.xpose.msra.mxu0 0.0
    %258 = vmatprep.subr.mxu0 0.0
    %259 = vmatpush1.xpose.msra.mxu0 0.0
    %260 = vmatprep.subr.mxu0 0.0
    %261 = vmatpush1.xpose.msra.mxu0 0.0
    %262 = vmatprep.subr.mxu0 0.0
    %263 = vmatpush1.xpose.msra.mxu0 0.0
    %264 = vmatprep.subr.mxu0 0.0
    %265 = vmatpush1.xpose.msra.mxu0 0.0
    %266 = vmatprep.subr.mxu0 0.0
    %267 = vmatpush1.xpose.msra.mxu0 0.0
    %268 = vmatprep.subr.mxu0 0.0
    %269 = vmatpush1.xpose.msra.mxu0 0.0
    %270 = vmatprep.subr.mxu0 0.0
    %271 = vmatpush1.xpose.msra.mxu0 0.0
    %272 = vmatprep.subr.mxu0 0.0
    %273 = vmatpush1.xpose.msra.mxu0 0.0
    %274 = vmatprep.subr.mxu0 0.0
    %275 = vmatpush1.xpose.msra.mxu0 0.0
    %276 = vmatprep.subr.mxu0 0.0
    %277 = vmatpush1.xpose.msra.mxu0 0.0
    %278 = vmatprep.subr.mxu0 0.0
    %279 = vmatpush1.xpose.msra.mxu0 0.0
    %280 = vmatprep.subr.mxu0 0.0
    %281 = vmatpush1.xpose.msra.mxu0 0.0
    %282 = vmatprep.subr.mxu0 0.0
    %283 = vmatpush1.xpose.msra.mxu0 0.0
    %284 = vmatprep.subr.mxu0 0.0
    %285 = vmatpush1.xpose.msra.mxu0 0.0
    %286 = vmatprep.subr.mxu0 0.0
    %287 = vmatpush1.xpose.msra.mxu0 0.0
    %288 = vmatprep.subr.mxu0 0.0
    %289 = vmatpush1.xpose.msra.mxu0 0.0
    %290 = vmatprep.subr.mxu0 0.0
    %291 = vmatpush1.xpose.msra.mxu0 0.0
    %292 = vmatprep.subr.mxu0 0.0
    %293 = vmatpush1.xpose.msra.mxu0 0.0
    %294 = vmatprep.subr.mxu0 0.0
    %295 = vmatpush1.xpose.msra.mxu0 0.0
    %296 = vmatprep.subr.mxu0 0.0
    %297 = vmatpush1.xpose.msra.mxu0 0.0
    %298 = vmatprep.subr.mxu0 0.0
    %299 = vmatpush1.xpose.msra.mxu0 0.0
    %300 = vmatprep.subr.mxu0 0.0
    %301 = vmatpush1.xpose.msra.mxu0 0.0
    %302 = vmatprep.subr.mxu0 0.0
    %303 = vmatpush1.xpose.msra.mxu0 0.0
    %304 = vmatprep.mubr.f32.mxu0 0.0
    %305 = vmatmul.mubr.f32.gmra.mrb[0].mxu0 %v236
    %v306 = vpop.f32.mrb[0].mxu0
    %v307 = vadd.f32 0.0, %v306
    %v308 = vpop.f32.mrb[0].mxu0
    %309 = vdwg.mxu0
    %310 = vrot.lane.b32.xlu0 %v200, 96
    %v311 = vpop.permute.xlu0 %310
    %v312 = vsel %vm235, %v204, 0
    %v314 = vsel %vm235, %v311, 0
    %316 = vmatprep.subr.mxu0 0.0
    %317 = vmatpush1.xpose.msra.mxu0 %v314
    %318 = vmatprep.subr.mxu0 0.0
    %319 = vmatpush1.xpose.msra.mxu0 0.0
    %320 = vmatprep.subr.mxu0 0.0
    %321 = vmatpush1.xpose.msra.mxu0 0.0
    %322 = vmatprep.subr.mxu0 0.0
    %323 = vmatpush1.xpose.msra.mxu0 0.0
    %324 = vmatprep.subr.mxu0 0.0
    %325 = vmatpush1.xpose.msra.mxu0 0.0
    %326 = vmatprep.subr.mxu0 0.0
    %327 = vmatpush1.xpose.msra.mxu0 0.0
    %328 = vmatprep.subr.mxu0 0.0
    %329 = vmatpush1.xpose.msra.mxu0 0.0
    %330 = vmatprep.subr.mxu0 0.0
    %331 = vmatpush1.xpose.msra.mxu0 0.0
    %332 = vmatprep.subr.mxu0 0.0
    %333 = vmatpush1.xpose.msra.mxu0 0.0
    %334 = vmatprep.subr.mxu0 0.0
    %335 = vmatpush1.xpose.msra.mxu0 0.0
    %336 = vmatprep.subr.mxu0 0.0
    %337 = vmatpush1.xpose.msra.mxu0 0.0
    %338 = vmatprep.subr.mxu0 0.0
    %339 = vmatpush1.xpose.msra.mxu0 0.0
    %340 = vmatprep.subr.mxu0 0.0
    %341 = vmatpush1.xpose.msra.mxu0 0.0
    %342 = vmatprep.subr.mxu0 0.0
    %343 = vmatpush1.xpose.msra.mxu0 0.0
    %344 = vmatprep.subr.mxu0 0.0
    %345 = vmatpush1.xpose.msra.mxu0 0.0
    %346 = vmatprep.subr.mxu0 0.0
    %347 = vmatpush1.xpose.msra.mxu0 0.0
    %348 = vmatprep.subr.mxu0 0.0
    %349 = vmatpush1.xpose.msra.mxu0 0.0
    %350 = vmatprep.subr.mxu0 0.0
    %351 = vmatpush1.xpose.msra.mxu0 0.0
    %352 = vmatprep.subr.mxu0 0.0
    %353 = vmatpush1.xpose.msra.mxu0 0.0
    %354 = vmatprep.subr.mxu0 0.0
    %355 = vmatpush1.xpose.msra.mxu0 0.0
    %356 = vmatprep.subr.mxu0 0.0
    %357 = vmatpush1.xpose.msra.mxu0 0.0
    %358 = vmatprep.subr.mxu0 0.0
    %359 = vmatpush1.xpose.msra.mxu0 0.0
    %360 = vmatprep.subr.mxu0 0.0
    %361 = vmatpush1.xpose.msra.mxu0 0.0
    %362 = vmatprep.subr.mxu0 0.0
    %363 = vmatpush1.xpose.msra.mxu0 0.0
    %364 = vmatprep.subr.mxu0 0.0
    %365 = vmatpush1.xpose.msra.mxu0 0.0
    %366 = vmatprep.subr.mxu0 0.0
    %367 = vmatpush1.xpose.msra.mxu0 0.0
    %368 = vmatprep.subr.mxu0 0.0
    %369 = vmatpush1.xpose.msra.mxu0 0.0
    %370 = vmatprep.subr.mxu0 0.0
    %371 = vmatpush1.xpose.msra.mxu0 0.0
    %372 = vmatprep.subr.mxu0 0.0
    %373 = vmatpush1.xpose.msra.mxu0 0.0
    %374 = vmatprep.subr.mxu0 0.0
    %375 = vmatpush1.xpose.msra.mxu0 0.0
    %376 = vmatprep.subr.mxu0 0.0
    %377 = vmatpush1.xpose.msra.mxu0 0.0
    %378 = vmatprep.subr.mxu0 0.0
    %379 = vmatpush1.xpose.msra.mxu0 0.0
    %380 = vmatprep.mubr.f32.mxu0 0.0
    %381 = vmatmul.mubr.f32.gmra.mrb[0].mxu0 %v312
    %v382 = vpop.f32.mrb[0].mxu0
    %v383 = vadd.f32 0.0, %v382
    %v384 = vpop.f32.mrb[0].mxu0
    %385 = vdwg.mxu0
    %386 = vrot.lane.b32.xlu0 %v222, 96
    %v387 = vpop.permute.xlu0 %386
    %v388 = vsel %vm235, %v208, 0
    %v390 = vsel %vm235, %v387, 0
    %392 = vmatprep.subr.mxu0 0.0
    %393 = vmatpush1.xpose.msra.mxu0 %v390
    %394 = vmatprep.subr.mxu0 0.0
    %395 = vmatpush1.xpose.msra.mxu0 0.0
    %396 = vmatprep.subr.mxu0 0.0
    %397 = vmatpush1.xpose.msra.mxu0 0.0
    %398 = vmatprep.subr.mxu0 0.0
    %399 = vmatpush1.xpose.msra.mxu0 0.0
    %400 = vmatprep.subr.mxu0 0.0
    %401 = vmatpush1.xpose.msra.mxu0 0.0
    %402 = vmatprep.subr.mxu0 0.0
    %403 = vmatpush1.xpose.msra.mxu0 0.0
    %404 = vmatprep.subr.mxu0 0.0
    %405 = vmatpush1.xpose.msra.mxu0 0.0
    %406 = vmatprep.subr.mxu0 0.0
    %407 = vmatpush1.xpose.msra.mxu0 0.0
    %408 = vmatprep.subr.mxu0 0.0
    %409 = vmatpush1.xpose.msra.mxu0 0.0
    %410 = vmatprep.subr.mxu0 0.0
    %411 = vmatpush1.xpose.msra.mxu0 0.0
    %412 = vmatprep.subr.mxu0 0.0
    %413 = vmatpush1.xpose.msra.mxu0 0.0
    %414 = vmatprep.subr.mxu0 0.0
    %415 = vmatpush1.xpose.msra.mxu0 0.0
    %416 = vmatprep.subr.mxu0 0.0
    %417 = vmatpush1.xpose.msra.mxu0 0.0
    %418 = vmatprep.subr.mxu0 0.0
    %419 = vmatpush1.xpose.msra.mxu0 0.0
    %420 = vmatprep.subr.mxu0 0.0
    %421 = vmatpush1.xpose.msra.mxu0 0.0
    %422 = vmatprep.subr.mxu0 0.0
    %423 = vmatpush1.xpose.msra.mxu0 0.0
    %424 = vmatprep.subr.mxu0 0.0
    %425 = vmatpush1.xpose.msra.mxu0 0.0
    %426 = vmatprep.subr.mxu0 0.0
    %427 = vmatpush1.xpose.msra.mxu0 0.0
    %428 = vmatprep.subr.mxu0 0.0
    %429 = vmatpush1.xpose.msra.mxu0 0.0
    %430 = vmatprep.subr.mxu0 0.0
    %431 = vmatpush1.xpose.msra.mxu0 0.0
    %432 = vmatprep.subr.mxu0 0.0
    %433 = vmatpush1.xpose.msra.mxu0 0.0
    %434 = vmatprep.subr.mxu0 0.0
    %435 = vmatpush1.xpose.msra.mxu0 0.0
    %436 = vmatprep.subr.mxu0 0.0
    %437 = vmatpush1.xpose.msra.mxu0 0.0
    %438 = vmatprep.subr.mxu0 0.0
    %439 = vmatpush1.xpose.msra.mxu0 0.0
    %440 = vmatprep.subr.mxu0 0.0
    %441 = vmatpush1.xpose.msra.mxu0 0.0
    %442 = vmatprep.subr.mxu0 0.0
    %443 = vmatpush1.xpose.msra.mxu0 0.0
    %444 = vmatprep.subr.mxu0 0.0
    %445 = vmatpush1.xpose.msra.mxu0 0.0
    %446 = vmatprep.subr.mxu0 0.0
    %447 = vmatpush1.xpose.msra.mxu0 0.0
    %448 = vmatprep.subr.mxu0 0.0
    %449 = vmatpush1.xpose.msra.mxu0 0.0
    %450 = vmatprep.subr.mxu0 0.0
    %451 = vmatpush1.xpose.msra.mxu0 0.0
    %452 = vmatprep.subr.mxu0 0.0
    %453 = vmatpush1.xpose.msra.mxu0 0.0
    %454 = vmatprep.subr.mxu0 0.0
    %455 = vmatpush1.xpose.msra.mxu0 0.0
    %456 = vmatprep.mubr.f32.mxu0 0.0
    %457 = vmatmul.mubr.f32.gmra.mrb[0].mxu0 %v388
    %v458 = vpop.f32.mrb[0].mxu0
    %v459 = vadd.f32 0.0, %v458
    %v460 = vpop.f32.mrb[0].mxu0
    %461 = vdwg.mxu0
    %462 = vrot.lane.b32.xlu0 %v224, 96
    %v463 = vpop.permute.xlu0 %462
    %v464 = vsel %vm235, %v210, 0
    %v466 = vsel %vm235, %v463, 0
    %468 = vmatprep.subr.mxu0 0.0
    %469 = vmatpush1.xpose.msra.mxu0 %v466
    %470 = vmatprep.subr.mxu0 0.0
    %471 = vmatpush1.xpose.msra.mxu0 0.0
    %472 = vmatprep.subr.mxu0 0.0
    %473 = vmatpush1.xpose.msra.mxu0 0.0
    %474 = vmatprep.subr.mxu0 0.0
    %475 = vmatpush1.xpose.msra.mxu0 0.0
    %476 = vmatprep.subr.mxu0 0.0
    %477 = vmatpush1.xpose.msra.mxu0 0.0
    %478 = vmatprep.subr.mxu0 0.0
    %479 = vmatpush1.xpose.msra.mxu0 0.0
    %480 = vmatprep.subr.mxu0 0.0
    %481 = vmatpush1.xpose.msra.mxu0 0.0
    %482 = vmatprep.subr.mxu0 0.0
    %483 = vmatpush1.xpose.msra.mxu0 0.0
    %484 = vmatprep.subr.mxu0 0.0
    %485 = vmatpush1.xpose.msra.mxu0 0.0
    %486 = vmatprep.subr.mxu0 0.0
    %487 = vmatpush1.xpose.msra.mxu0 0.0
    %488 = vmatprep.subr.mxu0 0.0
    %489 = vmatpush1.xpose.msra.mxu0 0.0
    %490 = vmatprep.subr.mxu0 0.0
    %491 = vmatpush1.xpose.msra.mxu0 0.0
    %492 = vmatprep.subr.mxu0 0.0
    %493 = vmatpush1.xpose.msra.mxu0 0.0
    %494 = vmatprep.subr.mxu0 0.0
    %495 = vmatpush1.xpose.msra.mxu0 0.0
    %496 = vmatprep.subr.mxu0 0.0
    %497 = vmatpush1.xpose.msra.mxu0 0.0
    %498 = vmatprep.subr.mxu0 0.0
    %499 = vmatpush1.xpose.msra.mxu0 0.0
    %500 = vmatprep.subr.mxu0 0.0
    %501 = vmatpush1.xpose.msra.mxu0 0.0
    %502 = vmatprep.subr.mxu0 0.0
    %503 = vmatpush1.xpose.msra.mxu0 0.0
    %504 = vmatprep.subr.mxu0 0.0
    %505 = vmatpush1.xpose.msra.mxu0 0.0
    %506 = vmatprep.subr.mxu0 0.0
    %507 = vmatpush1.xpose.msra.mxu0 0.0
    %508 = vmatprep.subr.mxu0 0.0
    %509 = vmatpush1.xpose.msra.mxu0 0.0
    %510 = vmatprep.subr.mxu0 0.0
    %511 = vmatpush1.xpose.msra.mxu0 0.0
    %512 = vmatprep.subr.mxu0 0.0
    %513 = vmatpush1.xpose.msra.mxu0 0.0
    %514 = vmatprep.subr.mxu0 0.0
    %515 = vmatpush1.xpose.msra.mxu0 0.0
    %516 = vmatprep.subr.mxu0 0.0
    %517 = vmatpush1.xpose.msra.mxu0 0.0
    %518 = vmatprep.subr.mxu0 0.0
    %519 = vmatpush1.xpose.msra.mxu0 0.0
    %520 = vmatprep.subr.mxu0 0.0
    %521 = vmatpush1.xpose.msra.mxu0 0.0
    %522 = vmatprep.subr.mxu0 0.0
    %523 = vmatpush1.xpose.msra.mxu0 0.0
    %524 = vmatprep.subr.mxu0 0.0
    %525 = vmatpush1.xpose.msra.mxu0 0.0
    %526 = vmatprep.subr.mxu0 0.0
    %527 = vmatpush1.xpose.msra.mxu0 0.0
    %528 = vmatprep.subr.mxu0 0.0
    %529 = vmatpush1.xpose.msra.mxu0 0.0
    %530 = vmatprep.subr.mxu0 0.0
    %531 = vmatpush1.xpose.msra.mxu0 0.0
    %532 = vmatprep.mubr.f32.mxu0 0.0
    %533 = vmatmul.mubr.f32.gmra.mrb[0].mxu0 %v464
    %v534 = vpop.f32.mrb[0].mxu0
    %v535 = vadd.f32 0.0, %v534
    %v536 = vpop.f32.mrb[0].mxu0
    %537 = vdwg.mxu0
    %538 = vrot.lane.b32.xlu0 %v226, 96
    %v539 = vpop.permute.xlu0 %538
    %v540 = vsel %vm235, %v212, 0
    %v542 = vsel %vm235, %v539, 0
    %544 = vmatprep.subr.mxu0 0.0
    %545 = vmatpush1.xpose.msra.mxu0 %v542
    %546 = vmatprep.subr.mxu0 0.0
    %547 = vmatpush1.xpose.msra.mxu0 0.0
    %548 = vmatprep.subr.mxu0 0.0
    %549 = vmatpush1.xpose.msra.mxu0 0.0
    %550 = vmatprep.subr.mxu0 0.0
    %551 = vmatpush1.xpose.msra.mxu0 0.0
    %552 = vmatprep.subr.mxu0 0.0
    %553 = vmatpush1.xpose.msra.mxu0 0.0
    %554 = vmatprep.subr.mxu0 0.0
    %555 = vmatpush1.xpose.msra.mxu0 0.0
    %556 = vmatprep.subr.mxu0 0.0
    %557 = vmatpush1.xpose.msra.mxu0 0.0
    %558 = vmatprep.subr.mxu0 0.0
    %559 = vmatpush1.xpose.msra.mxu0 0.0
    %560 = vmatprep.subr.mxu0 0.0
    %561 = vmatpush1.xpose.msra.mxu0 0.0
    %562 = vmatprep.subr.mxu0 0.0
    %563 = vmatpush1.xpose.msra.mxu0 0.0
    %564 = vmatprep.subr.mxu0 0.0
    %565 = vmatpush1.xpose.msra.mxu0 0.0
    %566 = vmatprep.subr.mxu0 0.0
    %567 = vmatpush1.xpose.msra.mxu0 0.0
    %568 = vmatprep.subr.mxu0 0.0
    %569 = vmatpush1.xpose.msra.mxu0 0.0
    %570 = vmatprep.subr.mxu0 0.0
    %571 = vmatpush1.xpose.msra.mxu0 0.0
    %572 = vmatprep.subr.mxu0 0.0
    %573 = vmatpush1.xpose.msra.mxu0 0.0
    %574 = vmatprep.subr.mxu0 0.0
    %575 = vmatpush1.xpose.msra.mxu0 0.0
    %576 = vmatprep.subr.mxu0 0.0
    %577 = vmatpush1.xpose.msra.mxu0 0.0
    %578 = vmatprep.subr.mxu0 0.0
    %579 = vmatpush1.xpose.msra.mxu0 0.0
    %580 = vmatprep.subr.mxu0 0.0
    %581 = vmatpush1.xpose.msra.mxu0 0.0
    %582 = vmatprep.subr.mxu0 0.0
    %583 = vmatpush1.xpose.msra.mxu0 0.0
    %584 = vmatprep.subr.mxu0 0.0
    %585 = vmatpush1.xpose.msra.mxu0 0.0
    %586 = vmatprep.subr.mxu0 0.0
    %587 = vmatpush1.xpose.msra.mxu0 0.0
    %588 = vmatprep.subr.mxu0 0.0
    %589 = vmatpush1.xpose.msra.mxu0 0.0
    %590 = vmatprep.subr.mxu0 0.0
    %591 = vmatpush1.xpose.msra.mxu0 0.0
    %592 = vmatprep.subr.mxu0 0.0
    %593 = vmatpush1.xpose.msra.mxu0 0.0
    %594 = vmatprep.subr.mxu0 0.0
    %595 = vmatpush1.xpose.msra.mxu0 0.0
    %596 = vmatprep.subr.mxu0 0.0
    %597 = vmatpush1.xpose.msra.mxu0 0.0
    %598 = vmatprep.subr.mxu0 0.0
    %599 = vmatpush1.xpose.msra.mxu0 0.0
    %600 = vmatprep.subr.mxu0 0.0
    %601 = vmatpush1.xpose.msra.mxu0 0.0
    %602 = vmatprep.subr.mxu0 0.0
    %603 = vmatpush1.xpose.msra.mxu0 0.0
    %604 = vmatprep.subr.mxu0 0.0
    %605 = vmatpush1.xpose.msra.mxu0 0.0
    %606 = vmatprep.subr.mxu0 0.0
    %607 = vmatpush1.xpose.msra.mxu0 0.0
    %608 = vmatprep.mubr.f32.mxu0 0.0
    %609 = vmatmul.mubr.f32.gmra.mrb[0].mxu0 %v540
    %v610 = vpop.f32.mrb[0].mxu0
    %v611 = vadd.f32 0.0, %v610
    %v612 = vpop.f32.mrb[0].mxu0
    %613 = vdwg.mxu0
    %614 = vrot.lane.b32.xlu0 %v228, 96
    %v615 = vpop.permute.xlu0 %614
    %v616 = vsel %vm235, %v214, 0
    %v618 = vsel %vm235, %v615, 0
    %620 = vmatprep.subr.mxu0 0.0
    %621 = vmatpush1.xpose.msra.mxu0 %v618
    %622 = vmatprep.subr.mxu0 0.0
    %623 = vmatpush1.xpose.msra.mxu0 0.0
    %624 = vmatprep.subr.mxu0 0.0
    %625 = vmatpush1.xpose.msra.mxu0 0.0
    %626 = vmatprep.subr.mxu0 0.0
    %627 = vmatpush1.xpose.msra.mxu0 0.0
    %628 = vmatprep.subr.mxu0 0.0
    %629 = vmatpush1.xpose.msra.mxu0 0.0
    %630 = vmatprep.subr.mxu0 0.0
    %631 = vmatpush1.xpose.msra.mxu0 0.0
    %632 = vmatprep.subr.mxu0 0.0
    %633 = vmatpush1.xpose.msra.mxu0 0.0
    %634 = vmatprep.subr.mxu0 0.0
    %635 = vmatpush1.xpose.msra.mxu0 0.0
    %636 = vmatprep.subr.mxu0 0.0
    %637 = vmatpush1.xpose.msra.mxu0 0.0
    %638 = vmatprep.subr.mxu0 0.0
    %639 = vmatpush1.xpose.msra.mxu0 0.0
    %640 = vmatprep.subr.mxu0 0.0
    %641 = vmatpush1.xpose.msra.mxu0 0.0
    %642 = vmatprep.subr.mxu0 0.0
    %643 = vmatpush1.xpose.msra.mxu0 0.0
    %644 = vmatprep.subr.mxu0 0.0
    %645 = vmatpush1.xpose.msra.mxu0 0.0
    %646 = vmatprep.subr.mxu0 0.0
    %647 = vmatpush1.xpose.msra.mxu0 0.0
    %648 = vmatprep.subr.mxu0 0.0
    %649 = vmatpush1.xpose.msra.mxu0 0.0
    %650 = vmatprep.subr.mxu0 0.0
    %651 = vmatpush1.xpose.msra.mxu0 0.0
    %652 = vmatprep.subr.mxu0 0.0
    %653 = vmatpush1.xpose.msra.mxu0 0.0
    %654 = vmatprep.subr.mxu0 0.0
    %655 = vmatpush1.xpose.msra.mxu0 0.0
    %656 = vmatprep.subr.mxu0 0.0
    %657 = vmatpush1.xpose.msra.mxu0 0.0
    %658 = vmatprep.subr.mxu0 0.0
    %659 = vmatpush1.xpose.msra.mxu0 0.0
    %660 = vmatprep.subr.mxu0 0.0
    %661 = vmatpush1.xpose.msra.mxu0 0.0
    %662 = vmatprep.subr.mxu0 0.0
    %663 = vmatpush1.xpose.msra.mxu0 0.0
    %664 = vmatprep.subr.mxu0 0.0
    %665 = vmatpush1.xpose.msra.mxu0 0.0
    %666 = vmatprep.subr.mxu0 0.0
    %667 = vmatpush1.xpose.msra.mxu0 0.0
    %668 = vmatprep.subr.mxu0 0.0
    %669 = vmatpush1.xpose.msra.mxu0 0.0
    %670 = vmatprep.subr.mxu0 0.0
    %671 = vmatpush1.xpose.msra.mxu0 0.0
    %672 = vmatprep.subr.mxu0 0.0
    %673 = vmatpush1.xpose.msra.mxu0 0.0
    %674 = vmatprep.subr.mxu0 0.0
    %675 = vmatpush1.xpose.msra.mxu0 0.0
    %676 = vmatprep.subr.mxu0 0.0
    %677 = vmatpush1.xpose.msra.mxu0 0.0
    %678 = vmatprep.subr.mxu0 0.0
    %679 = vmatpush1.xpose.msra.mxu0 0.0
    %680 = vmatprep.subr.mxu0 0.0
    %681 = vmatpush1.xpose.msra.mxu0 0.0
    %682 = vmatprep.subr.mxu0 0.0
    %683 = vmatpush1.xpose.msra.mxu0 0.0
    %684 = vmatprep.mubr.f32.mxu0 0.0
    %685 = vmatmul.mubr.f32.gmra.mrb[0].mxu0 %v616
    %v686 = vpop.f32.mrb[0].mxu0
    %v687 = vadd.f32 0.0, %v686
    %v688 = vpop.f32.mrb[0].mxu0
    %689 = vdwg.mxu0
    %690 = vrot.lane.b32.xlu0 %v230, 96
    %v691 = vpop.permute.xlu0 %690
    %v692 = vsel %vm235, %v216, 0
    %v694 = vsel %vm235, %v691, 0
    %696 = vmatprep.subr.mxu0 0.0
    %697 = vmatpush1.xpose.msra.mxu0 %v694
    %698 = vmatprep.subr.mxu0 0.0
    %699 = vmatpush1.xpose.msra.mxu0 0.0
    %700 = vmatprep.subr.mxu0 0.0
    %701 = vmatpush1.xpose.msra.mxu0 0.0
    %702 = vmatprep.subr.mxu0 0.0
    %703 = vmatpush1.xpose.msra.mxu0 0.0
    %704 = vmatprep.subr.mxu0 0.0
    %705 = vmatpush1.xpose.msra.mxu0 0.0
    %706 = vmatprep.subr.mxu0 0.0
    %707 = vmatpush1.xpose.msra.mxu0 0.0
    %708 = vmatprep.subr.mxu0 0.0
    %709 = vmatpush1.xpose.msra.mxu0 0.0
    %710 = vmatprep.subr.mxu0 0.0
    %711 = vmatpush1.xpose.msra.mxu0 0.0
    %712 = vmatprep.subr.mxu0 0.0
    %713 = vmatpush1.xpose.msra.mxu0 0.0
    %714 = vmatprep.subr.mxu0 0.0
    %715 = vmatpush1.xpose.msra.mxu0 0.0
    %716 = vmatprep.subr.mxu0 0.0
    %717 = vmatpush1.xpose.msra.mxu0 0.0
    %718 = vmatprep.subr.mxu0 0.0
    %719 = vmatpush1.xpose.msra.mxu0 0.0
    %720 = vmatprep.subr.mxu0 0.0
    %721 = vmatpush1.xpose.msra.mxu0 0.0
    %722 = vmatprep.subr.mxu0 0.0
    %723 = vmatpush1.xpose.msra.mxu0 0.0
    %724 = vmatprep.subr.mxu0 0.0
    %725 = vmatpush1.xpose.msra.mxu0 0.0
    %726 = vmatprep.subr.mxu0 0.0
    %727 = vmatpush1.xpose.msra.mxu0 0.0
    %728 = vmatprep.subr.mxu0 0.0
    %729 = vmatpush1.xpose.msra.mxu0 0.0
    %730 = vmatprep.subr.mxu0 0.0
    %731 = vmatpush1.xpose.msra.mxu0 0.0
    %732 = vmatprep.subr.mxu0 0.0
    %733 = vmatpush1.xpose.msra.mxu0 0.0
    %734 = vmatprep.subr.mxu0 0.0
    %735 = vmatpush1.xpose.msra.mxu0 0.0
    %736 = vmatprep.subr.mxu0 0.0
    %737 = vmatpush1.xpose.msra.mxu0 0.0
    %738 = vmatprep.subr.mxu0 0.0
    %739 = vmatpush1.xpose.msra.mxu0 0.0
    %740 = vmatprep.subr.mxu0 0.0
    %741 = vmatpush1.xpose.msra.mxu0 0.0
    %742 = vmatprep.subr.mxu0 0.0
    %743 = vmatpush1.xpose.msra.mxu0 0.0
    %744 = vmatprep.subr.mxu0 0.0
    %745 = vmatpush1.xpose.msra.mxu0 0.0
    %746 = vmatprep.subr.mxu0 0.0
    %747 = vmatpush1.xpose.msra.mxu0 0.0
    %748 = vmatprep.subr.mxu0 0.0
    %749 = vmatpush1.xpose.msra.mxu0 0.0
    %750 = vmatprep.subr.mxu0 0.0
    %751 = vmatpush1.xpose.msra.mxu0 0.0
    %752 = vmatprep.subr.mxu0 0.0
    %753 = vmatpush1.xpose.msra.mxu0 0.0
    %754 = vmatprep.subr.mxu0 0.0
    %755 = vmatpush1.xpose.msra.mxu0 0.0
    %756 = vmatprep.subr.mxu0 0.0
    %757 = vmatpush1.xpose.msra.mxu0 0.0
    %758 = vmatprep.subr.mxu0 0.0
    %759 = vmatpush1.xpose.msra.mxu0 0.0
    %760 = vmatprep.mubr.f32.mxu0 0.0
    %761 = vmatmul.mubr.f32.gmra.mrb[0].mxu0 %v692
    %v762 = vpop.f32.mrb[0].mxu0
    %v763 = vadd.f32 0.0, %v762
    %v764 = vpop.f32.mrb[0].mxu0
    %765 = vdwg.mxu0
    %766 = vrot.lane.b32.xlu0 %v232, 96
    %v767 = vpop.permute.xlu0 %766
    %v768 = vsel %vm235, %v218, 0
    %v770 = vsel %vm235, %v767, 0
    %772 = vmatprep.subr.mxu0 0.0
    %773 = vmatpush1.xpose.msra.mxu0 %v770
    %774 = vmatprep.subr.mxu0 0.0
    %775 = vmatpush1.xpose.msra.mxu0 0.0
    %776 = vmatprep.subr.mxu0 0.0
    %777 = vmatpush1.xpose.msra.mxu0 0.0
    %778 = vmatprep.subr.mxu0 0.0
    %779 = vmatpush1.xpose.msra.mxu0 0.0
    %780 = vmatprep.subr.mxu0 0.0
    %781 = vmatpush1.xpose.msra.mxu0 0.0
    %782 = vmatprep.subr.mxu0 0.0
    %783 = vmatpush1.xpose.msra.mxu0 0.0
    %784 = vmatprep.subr.mxu0 0.0
    %785 = vmatpush1.xpose.msra.mxu0 0.0
    %786 = vmatprep.subr.mxu0 0.0
    %787 = vmatpush1.xpose.msra.mxu0 0.0
    %788 = vmatprep.subr.mxu0 0.0
    %789 = vmatpush1.xpose.msra.mxu0 0.0
    %790 = vmatprep.subr.mxu0 0.0
    %791 = vmatpush1.xpose.msra.mxu0 0.0
    %792 = vmatprep.subr.mxu0 0.0
    %793 = vmatpush1.xpose.msra.mxu0 0.0
    %794 = vmatprep.subr.mxu0 0.0
    %795 = vmatpush1.xpose.msra.mxu0 0.0
    %796 = vmatprep.subr.mxu0 0.0
    %797 = vmatpush1.xpose.msra.mxu0 0.0
    %798 = vmatprep.subr.mxu0 0.0
    %799 = vmatpush1.xpose.msra.mxu0 0.0
    %800 = vmatprep.subr.mxu0 0.0
    %801 = vmatpush1.xpose.msra.mxu0 0.0
    %802 = vmatprep.subr.mxu0 0.0
    %803 = vmatpush1.xpose.msra.mxu0 0.0
    %804 = vmatprep.subr.mxu0 0.0
    %805 = vmatpush1.xpose.msra.mxu0 0.0
    %806 = vmatprep.subr.mxu0 0.0
    %807 = vmatpush1.xpose.msra.mxu0 0.0
    %808 = vmatprep.subr.mxu0 0.0
    %809 = vmatpush1.xpose.msra.mxu0 0.0
    %810 = vmatprep.subr.mxu0 0.0
    %811 = vmatpush1.xpose.msra.mxu0 0.0
    %812 = vmatprep.subr.mxu0 0.0
    %813 = vmatpush1.xpose.msra.mxu0 0.0
    %814 = vmatprep.subr.mxu0 0.0
    %815 = vmatpush1.xpose.msra.mxu0 0.0
    %816 = vmatprep.subr.mxu0 0.0
    %817 = vmatpush1.xpose.msra.mxu0 0.0
    %818 = vmatprep.subr.mxu0 0.0
    %819 = vmatpush1.xpose.msra.mxu0 0.0
    %820 = vmatprep.subr.mxu0 0.0
    %821 = vmatpush1.xpose.msra.mxu0 0.0
    %822 = vmatprep.subr.mxu0 0.0
    %823 = vmatpush1.xpose.msra.mxu0 0.0
    %824 = vmatprep.subr.mxu0 0.0
    %825 = vmatpush1.xpose.msra.mxu0 0.0
    %826 = vmatprep.subr.mxu0 0.0
    %827 = vmatpush1.xpose.msra.mxu0 0.0
    %828 = vmatprep.subr.mxu0 0.0
    %829 = vmatpush1.xpose.msra.mxu0 0.0
    %830 = vmatprep.subr.mxu0 0.0
    %831 = vmatpush1.xpose.msra.mxu0 0.0
    %832 = vmatprep.subr.mxu0 0.0
    %833 = vmatpush1.xpose.msra.mxu0 0.0
    %834 = vmatprep.subr.mxu0 0.0
    %835 = vmatpush1.xpose.msra.mxu0 0.0
    %836 = vmatprep.mubr.f32.mxu0 0.0
    %837 = vmatmul.mubr.f32.gmra.mrb[0].mxu0 %v768
    %v838 = vpop.f32.mrb[0].mxu0
    %v839 = vadd.f32 0.0, %v838
    %v840 = vpop.f32.mrb[0].mxu0
    %841 = vdwg.mxu0
    %v842 = vsel %vm235, %v307, -inf
    %843 = vmax.xlane.f32.xlu0 %v842
    %v844 = vpop.xlane.xlu0 %843
    %v845 = vsel %vm235, %v383, -inf
    %846 = vmax.xlane.f32.xlu0 %v845
    %v847 = vpop.xlane.xlu0 %846
    %v848 = vsel %vm235, %v459, -inf
    %849 = vmax.xlane.f32.xlu0 %v848
    %v850 = vpop.xlane.xlu0 %849
    %v851 = vsel %vm235, %v535, -inf
    %852 = vmax.xlane.f32.xlu0 %v851
    %v853 = vpop.xlane.xlu0 %852
    %v854 = vsel %vm235, %v611, -inf
    %855 = vmax.xlane.f32.xlu0 %v854
    %v856 = vpop.xlane.xlu0 %855
    %v857 = vsel %vm235, %v687, -inf
    %858 = vmax.xlane.f32.xlu0 %v857
    %v859 = vpop.xlane.xlu0 %858
    %v860 = vsel %vm235, %v763, -inf
    %861 = vmax.xlane.f32.xlu0 %v860
    %v862 = vpop.xlane.xlu0 %861
    %v863 = vsel %vm235, %v839, -inf
    %864 = vmax.xlane.f32.xlu0 %v863
    %v865 = vpop.xlane.xlu0 %864
    %v866 = vsub.f32 %v307, %v844
    %v867 = vsub.f32 %v383, %v847
    %v868 = vsub.f32 %v459, %v850
    %v869 = vsub.f32 %v535, %v853
    %v870 = vsub.f32 %v611, %v856
    %v871 = vsub.f32 %v687, %v859
    %v872 = vsub.f32 %v763, %v862
    %v873 = vsub.f32 %v839, %v865
    %v874 = vmul.f32 %v866, 1.442695
    %v875 = vpow.pop %v874
    %v876 = vmul.f32 %v867, 1.442695
    %v877 = vpow.pop %v876
    %v878 = vmul.f32 %v868, 1.442695
    %v879 = vpow.pop %v878
    %v880 = vmul.f32 %v869, 1.442695
    %v881 = vpow.pop %v880
    %v882 = vmul.f32 %v870, 1.442695
    %v883 = vpow.pop %v882
    %v884 = vmul.f32 %v871, 1.442695
    %v885 = vpow.pop %v884
    %v886 = vmul.f32 %v872, 1.442695
    %v887 = vpow.pop %v886
    %v888 = vmul.f32 %v873, 1.442695
    %v889 = vpow.pop %v888
    %v890 = vsel %vm235, %v875, 0.0
    %891 = vadd.xlane.f32.xlu0 %v890
    %v892 = vpop.xlane.xlu0 %891
    %v893 = vsel %vm235, %v877, 0.0
    %894 = vadd.xlane.f32.xlu0 %v893
    %v895 = vpop.xlane.xlu0 %894
    %v896 = vsel %vm235, %v879, 0.0
    %897 = vadd.xlane.f32.xlu0 %v896
    %v898 = vpop.xlane.xlu0 %897
    %v899 = vsel %vm235, %v881, 0.0
    %900 = vadd.xlane.f32.xlu0 %v899
    %v901 = vpop.xlane.xlu0 %900
    %v902 = vsel %vm235, %v883, 0.0
    %903 = vadd.xlane.f32.xlu0 %v902
    %v904 = vpop.xlane.xlu0 %903
    %v905 = vsel %vm235, %v885, 0.0
    %906 = vadd.xlane.f32.xlu0 %v905
    %v907 = vpop.xlane.xlu0 %906
    %v908 = vsel %vm235, %v887, 0.0
    %909 = vadd.xlane.f32.xlu0 %v908
    %v910 = vpop.xlane.xlu0 %909
    %v911 = vsel %vm235, %v889, 0.0
    %912 = vadd.xlane.f32.xlu0 %v911
    %v913 = vpop.xlane.xlu0 %912
    %v914 = vrcp.pop %v892
    %v915 = vrcp.pop %v895
    %v916 = vrcp.pop %v898
    %v917 = vrcp.pop %v901
    %v918 = vrcp.pop %v904
    %v919 = vrcp.pop %v907
    %v920 = vrcp.pop %v910
    %v921 = vrcp.pop %v913
    %v922 = vmul.f32 %v875, %v914
    %v923 = vmul.f32 %v877, %v915
    %v924 = vmul.f32 %v879, %v916
    %v925 = vmul.f32 %v881, %v917
    %v926 = vmul.f32 %v883, %v918
    %v927 = vmul.f32 %v885, %v919
    %v928 = vmul.f32 %v887, %v920
    %v929 = vmul.f32 %v889, %v921
    %930 = vrot.lane.b32.xlu0 %v195, 64
    %v931 = vpop.permute.xlu0 %930
    %v934 = vsel %vm235, %v922, 0
    %936 = vmatprep.subr.mxu0 0.0
    %937 = vmatpush1.msra.mxu0 %v931
    %938 = vmatprep.subr.mxu0 0.0
    %939 = vmatpush1.msra.mxu0 0.0
    %940 = vmatprep.subr.mxu0 0.0
    %941 = vmatpush1.msra.mxu0 0.0
    %942 = vmatprep.subr.mxu0 0.0
    %943 = vmatpush1.msra.mxu0 0.0
    %944 = vmatprep.subr.mxu0 0.0
    %945 = vmatpush1.msra.mxu0 0.0
    %946 = vmatprep.subr.mxu0 0.0
    %947 = vmatpush1.msra.mxu0 0.0
    %948 = vmatprep.subr.mxu0 0.0
    %949 = vmatpush1.msra.mxu0 0.0
    %950 = vmatprep.subr.mxu0 0.0
    %951 = vmatpush1.msra.mxu0 0.0
    %952 = vmatprep.subr.mxu0 0.0
    %953 = vmatpush1.msra.mxu0 0.0
    %954 = vmatprep.subr.mxu0 0.0
    %955 = vmatpush1.msra.mxu0 0.0
    %956 = vmatprep.subr.mxu0 0.0
    %957 = vmatpush1.msra.mxu0 0.0
    %958 = vmatprep.subr.mxu0 0.0
    %959 = vmatpush1.msra.mxu0 0.0
    %960 = vmatprep.subr.mxu0 0.0
    %961 = vmatpush1.msra.mxu0 0.0
    %962 = vmatprep.subr.mxu0 0.0
    %963 = vmatpush1.msra.mxu0 0.0
    %964 = vmatprep.subr.mxu0 0.0
    %965 = vmatpush1.msra.mxu0 0.0
    %966 = vmatprep.subr.mxu0 0.0
    %967 = vmatpush1.msra.mxu0 0.0
    %968 = vmatprep.subr.mxu0 0.0
    %969 = vmatpush1.msra.mxu0 0.0
    %970 = vmatprep.subr.mxu0 0.0
    %971 = vmatpush1.msra.mxu0 0.0
    %972 = vmatprep.subr.mxu0 0.0
    %973 = vmatpush1.msra.mxu0 0.0
    %974 = vmatprep.subr.mxu0 0.0
    %975 = vmatpush1.msra.mxu0 0.0
    %976 = vmatprep.subr.mxu0 0.0
    %977 = vmatpush1.msra.mxu0 0.0
    %978 = vmatprep.subr.mxu0 0.0
    %979 = vmatpush1.msra.mxu0 0.0
    %980 = vmatprep.subr.mxu0 0.0
    %981 = vmatpush1.msra.mxu0 0.0
    %982 = vmatprep.subr.mxu0 0.0
    %983 = vmatpush1.msra.mxu0 0.0
    %984 = vmatprep.subr.mxu0 0.0
    %985 = vmatpush1.msra.mxu0 0.0
    %986 = vmatprep.subr.mxu0 0.0
    %987 = vmatpush1.msra.mxu0 0.0
    %988 = vmatprep.subr.mxu0 0.0
    %989 = vmatpush1.msra.mxu0 0.0
    %990 = vmatprep.subr.mxu0 0.0
    %991 = vmatpush1.msra.mxu0 0.0
    %992 = vmatprep.subr.mxu0 0.0
    %993 = vmatpush1.msra.mxu0 0.0
    %994 = vmatprep.subr.mxu0 0.0
    %995 = vmatpush1.msra.mxu0 0.0
    %996 = vmatprep.subr.mxu0 0.0
    %997 = vmatpush1.msra.mxu0 0.0
    %998 = vmatprep.subr.mxu0 0.0
    %999 = vmatpush1.msra.mxu0 0.0
    %1000 = vmatprep.mubr.f32.mxu0 0.0
    %1001 = vmatmul.mubr.f32.gmra.mrb[0].mxu0 %v934
    %v1002 = vpop.f32.mrb[0].mxu0
    %v1003 = vadd.f32 0.0, %v1002
    %v1004 = vpop.f32.mrb[0].mxu0
    %1005 = vdwg.mxu0
    %1006 = vrot.lane.b32.xlu0 %v200, 64
    %v1007 = vpop.permute.xlu0 %1006
    %v1010 = vsel %vm235, %v923, 0
    %1012 = vmatprep.subr.mxu0 0.0
    %1013 = vmatpush1.msra.mxu0 %v1007
    %1014 = vmatprep.subr.mxu0 0.0
    %1015 = vmatpush1.msra.mxu0 0.0
    %1016 = vmatprep.subr.mxu0 0.0
    %1017 = vmatpush1.msra.mxu0 0.0
    %1018 = vmatprep.subr.mxu0 0.0
    %1019 = vmatpush1.msra.mxu0 0.0
    %1020 = vmatprep.subr.mxu0 0.0
    %1021 = vmatpush1.msra.mxu0 0.0
    %1022 = vmatprep.subr.mxu0 0.0
    %1023 = vmatpush1.msra.mxu0 0.0
    %1024 = vmatprep.subr.mxu0 0.0
    %1025 = vmatpush1.msra.mxu0 0.0
    %1026 = vmatprep.subr.mxu0 0.0
    %1027 = vmatpush1.msra.mxu0 0.0
    %1028 = vmatprep.subr.mxu0 0.0
    %1029 = vmatpush1.msra.mxu0 0.0
    %1030 = vmatprep.subr.mxu0 0.0
    %1031 = vmatpush1.msra.mxu0 0.0
    %1032 = vmatprep.subr.mxu0 0.0
    %1033 = vmatpush1.msra.mxu0 0.0
    %1034 = vmatprep.subr.mxu0 0.0
    %1035 = vmatpush1.msra.mxu0 0.0
    %1036 = vmatprep.subr.mxu0 0.0
    %1037 = vmatpush1.msra.mxu0 0.0
    %1038 = vmatprep.subr.mxu0 0.0
    %1039 = vmatpush1.msra.mxu0 0.0
    %1040 = vmatprep.subr.mxu0 0.0
    %1041 = vmatpush1.msra.mxu0 0.0
    %1042 = vmatprep.subr.mxu0 0.0
    %1043 = vmatpush1.msra.mxu0 0.0
    %1044 = vmatprep.subr.mxu0 0.0
    %1045 = vmatpush1.msra.mxu0 0.0
    %1046 = vmatprep.subr.mxu0 0.0
    %1047 = vmatpush1.msra.mxu0 0.0
    %1048 = vmatprep.subr.mxu0 0.0
    %1049 = vmatpush1.msra.mxu0 0.0
    %1050 = vmatprep.subr.mxu0 0.0
    %1051 = vmatpush1.msra.mxu0 0.0
    %1052 = vmatprep.subr.mxu0 0.0
    %1053 = vmatpush1.msra.mxu0 0.0
    %1054 = vmatprep.subr.mxu0 0.0
    %1055 = vmatpush1.msra.mxu0 0.0
    %1056 = vmatprep.subr.mxu0 0.0
    %1057 = vmatpush1.msra.mxu0 0.0
    %1058 = vmatprep.subr.mxu0 0.0
    %1059 = vmatpush1.msra.mxu0 0.0
    %1060 = vmatprep.subr.mxu0 0.0
    %1061 = vmatpush1.msra.mxu0 0.0
    %1062 = vmatprep.subr.mxu0 0.0
    %1063 = vmatpush1.msra.mxu0 0.0
    %1064 = vmatprep.subr.mxu0 0.0
    %1065 = vmatpush1.msra.mxu0 0.0
    %1066 = vmatprep.subr.mxu0 0.0
    %1067 = vmatpush1.msra.mxu0 0.0
    %1068 = vmatprep.subr.mxu0 0.0
    %1069 = vmatpush1.msra.mxu0 0.0
    %1070 = vmatprep.subr.mxu0 0.0
    %1071 = vmatpush1.msra.mxu0 0.0
    %1072 = vmatprep.subr.mxu0 0.0
    %1073 = vmatpush1.msra.mxu0 0.0
    %1074 = vmatprep.subr.mxu0 0.0
    %1075 = vmatpush1.msra.mxu0 0.0
    %1076 = vmatprep.mubr.f32.mxu0 0.0
    %1077 = vmatmul.mubr.f32.gmra.mrb[0].mxu0 %v1010
    %v1078 = vpop.f32.mrb[0].mxu0
    %v1079 = vadd.f32 0.0, %v1078
    %v1080 = vpop.f32.mrb[0].mxu0
    %1081 = vdwg.mxu0
    %1082 = vrot.lane.b32.xlu0 %v222, 64
    %v1083 = vpop.permute.xlu0 %1082
    %v1086 = vsel %vm235, %v924, 0
    %1088 = vmatprep.subr.mxu0 0.0
    %1089 = vmatpush1.msra.mxu0 %v1083
    %1090 = vmatprep.subr.mxu0 0.0
    %1091 = vmatpush1.msra.mxu0 0.0
    %1092 = vmatprep.subr.mxu0 0.0
    %1093 = vmatpush1.msra.mxu0 0.0
    %1094 = vmatprep.subr.mxu0 0.0
    %1095 = vmatpush1.msra.mxu0 0.0
    %1096 = vmatprep.subr.mxu0 0.0
    %1097 = vmatpush1.msra.mxu0 0.0
    %1098 = vmatprep.subr.mxu0 0.0
    %1099 = vmatpush1.msra.mxu0 0.0
    %1100 = vmatprep.subr.mxu0 0.0
    %1101 = vmatpush1.msra.mxu0 0.0
    %1102 = vmatprep.subr.mxu0 0.0
    %1103 = vmatpush1.msra.mxu0 0.0
    %1104 = vmatprep.subr.mxu0 0.0
    %1105 = vmatpush1.msra.mxu0 0.0
    %1106 = vmatprep.subr.mxu0 0.0
    %1107 = vmatpush1.msra.mxu0 0.0
    %1108 = vmatprep.subr.mxu0 0.0
    %1109 = vmatpush1.msra.mxu0 0.0
    %1110 = vmatprep.subr.mxu0 0.0
    %1111 = vmatpush1.msra.mxu0 0.0
    %1112 = vmatprep.subr.mxu0 0.0
    %1113 = vmatpush1.msra.mxu0 0.0
    %1114 = vmatprep.subr.mxu0 0.0
    %1115 = vmatpush1.msra.mxu0 0.0
    %1116 = vmatprep.subr.mxu0 0.0
    %1117 = vmatpush1.msra.mxu0 0.0
    %1118 = vmatprep.subr.mxu0 0.0
    %1119 = vmatpush1.msra.mxu0 0.0
    %1120 = vmatprep.subr.mxu0 0.0
    %1121 = vmatpush1.msra.mxu0 0.0
    %1122 = vmatprep.subr.mxu0 0.0
    %1123 = vmatpush1.msra.mxu0 0.0
    %1124 = vmatprep.subr.mxu0 0.0
    %1125 = vmatpush1.msra.mxu0 0.0
    %1126 = vmatprep.subr.mxu0 0.0
    %1127 = vmatpush1.msra.mxu0 0.0
    %1128 = vmatprep.subr.mxu0 0.0
    %1129 = vmatpush1.msra.mxu0 0.0
    %1130 = vmatprep.subr.mxu0 0.0
    %1131 = vmatpush1.msra.mxu0 0.0
    %1132 = vmatprep.subr.mxu0 0.0
    %1133 = vmatpush1.msra.mxu0 0.0
    %1134 = vmatprep.subr.mxu0 0.0
    %1135 = vmatpush1.msra.mxu0 0.0
    %1136 = vmatprep.subr.mxu0 0.0
    %1137 = vmatpush1.msra.mxu0 0.0
    %1138 = vmatprep.subr.mxu0 0.0
    %1139 = vmatpush1.msra.mxu0 0.0
    %1140 = vmatprep.subr.mxu0 0.0
    %1141 = vmatpush1.msra.mxu0 0.0
    %1142 = vmatprep.subr.mxu0 0.0
    %1143 = vmatpush1.msra.mxu0 0.0
    %1144 = vmatprep.subr.mxu0 0.0
    %1145 = vmatpush1.msra.mxu0 0.0
    %1146 = vmatprep.subr.mxu0 0.0
    %1147 = vmatpush1.msra.mxu0 0.0
    %1148 = vmatprep.subr.mxu0 0.0
    %1149 = vmatpush1.msra.mxu0 0.0
    %1150 = vmatprep.subr.mxu0 0.0
    %1151 = vmatpush1.msra.mxu0 0.0
    %1152 = vmatprep.mubr.f32.mxu0 0.0
    %1153 = vmatmul.mubr.f32.gmra.mrb[0].mxu0 %v1086
    %v1154 = vpop.f32.mrb[0].mxu0
    %v1155 = vadd.f32 0.0, %v1154
    %v1156 = vpop.f32.mrb[0].mxu0
    %1157 = vdwg.mxu0
    %1158 = vrot.lane.b32.xlu0 %v224, 64
    %v1159 = vpop.permute.xlu0 %1158
    %v1162 = vsel %vm235, %v925, 0
    %1164 = vmatprep.subr.mxu0 0.0
    %1165 = vmatpush1.msra.mxu0 %v1159
    %1166 = vmatprep.subr.mxu0 0.0
    %1167 = vmatpush1.msra.mxu0 0.0
    %1168 = vmatprep.subr.mxu0 0.0
    %1169 = vmatpush1.msra.mxu0 0.0
    %1170 = vmatprep.subr.mxu0 0.0
    %1171 = vmatpush1.msra.mxu0 0.0
    %1172 = vmatprep.subr.mxu0 0.0
    %1173 = vmatpush1.msra.mxu0 0.0
    %1174 = vmatprep.subr.mxu0 0.0
    %1175 = vmatpush1.msra.mxu0 0.0
    %1176 = vmatprep.subr.mxu0 0.0
    %1177 = vmatpush1.msra.mxu0 0.0
    %1178 = vmatprep.subr.mxu0 0.0
    %1179 = vmatpush1.msra.mxu0 0.0
    %1180 = vmatprep.subr.mxu0 0.0
    %1181 = vmatpush1.msra.mxu0 0.0
    %1182 = vmatprep.subr.mxu0 0.0
    %1183 = vmatpush1.msra.mxu0 0.0
    %1184 = vmatprep.subr.mxu0 0.0
    %1185 = vmatpush1.msra.mxu0 0.0
    %1186 = vmatprep.subr.mxu0 0.0
    %1187 = vmatpush1.msra.mxu0 0.0
    %1188 = vmatprep.subr.mxu0 0.0
    %1189 = vmatpush1.msra.mxu0 0.0
    %1190 = vmatprep.subr.mxu0 0.0
    %1191 = vmatpush1.msra.mxu0 0.0
    %1192 = vmatprep.subr.mxu0 0.0
    %1193 = vmatpush1.msra.mxu0 0.0
    %1194 = vmatprep.subr.mxu0 0.0
    %1195 = vmatpush1.msra.mxu0 0.0
    %1196 = vmatprep.subr.mxu0 0.0
    %1197 = vmatpush1.msra.mxu0 0.0
    %1198 = vmatprep.subr.mxu0 0.0
    %1199 = vmatpush1.msra.mxu0 0.0
    %1200 = vmatprep.subr.mxu0 0.0
    %1201 = vmatpush1.msra.mxu0 0.0
    %1202 = vmatprep.subr.mxu0 0.0
    %1203 = vmatpush1.msra.mxu0 0.0
    %1204 = vmatprep.subr.mxu0 0.0
    %1205 = vmatpush1.msra.mxu0 0.0
    %1206 = vmatprep.subr.mxu0 0.0
    %1207 = vmatpush1.msra.mxu0 0.0
    %1208 = vmatprep.subr.mxu0 0.0
    %1209 = vmatpush1.msra.mxu0 0.0
    %1210 = vmatprep.subr.mxu0 0.0
    %1211 = vmatpush1.msra.mxu0 0.0
    %1212 = vmatprep.subr.mxu0 0.0
    %1213 = vmatpush1.msra.mxu0 0.0
    %1214 = vmatprep.subr.mxu0 0.0
    %1215 = vmatpush1.msra.mxu0 0.0
    %1216 = vmatprep.subr.mxu0 0.0
    %1217 = vmatpush1.msra.mxu0 0.0
    %1218 = vmatprep.subr.mxu0 0.0
    %1219 = vmatpush1.msra.mxu0 0.0
    %1220 = vmatprep.subr.mxu0 0.0
    %1221 = vmatpush1.msra.mxu0 0.0
    %1222 = vmatprep.subr.mxu0 0.0
    %1223 = vmatpush1.msra.mxu0 0.0
    %1224 = vmatprep.subr.mxu0 0.0
    %1225 = vmatpush1.msra.mxu0 0.0
    %1226 = vmatprep.subr.mxu0 0.0
    %1227 = vmatpush1.msra.mxu0 0.0
    %1228 = vmatprep.mubr.f32.mxu0 0.0
    %1229 = vmatmul.mubr.f32.gmra.mrb[0].mxu0 %v1162
    %v1230 = vpop.f32.mrb[0].mxu0
    %v1231 = vadd.f32 0.0, %v1230
    %v1232 = vpop.f32.mrb[0].mxu0
    %1233 = vdwg.mxu0
    %1234 = vrot.lane.b32.xlu0 %v226, 64
    %v1235 = vpop.permute.xlu0 %1234
    %v1238 = vsel %vm235, %v926, 0
    %1240 = vmatprep.subr.mxu0 0.0
    %1241 = vmatpush1.msra.mxu0 %v1235
    %1242 = vmatprep.subr.mxu0 0.0
    %1243 = vmatpush1.msra.mxu0 0.0
    %1244 = vmatprep.subr.mxu0 0.0
    %1245 = vmatpush1.msra.mxu0 0.0
    %1246 = vmatprep.subr.mxu0 0.0
    %1247 = vmatpush1.msra.mxu0 0.0
    %1248 = vmatprep.subr.mxu0 0.0
    %1249 = vmatpush1.msra.mxu0 0.0
    %1250 = vmatprep.subr.mxu0 0.0
    %1251 = vmatpush1.msra.mxu0 0.0
    %1252 = vmatprep.subr.mxu0 0.0
    %1253 = vmatpush1.msra.mxu0 0.0
    %1254 = vmatprep.subr.mxu0 0.0
    %1255 = vmatpush1.msra.mxu0 0.0
    %1256 = vmatprep.subr.mxu0 0.0
    %1257 = vmatpush1.msra.mxu0 0.0
    %1258 = vmatprep.subr.mxu0 0.0
    %1259 = vmatpush1.msra.mxu0 0.0
    %1260 = vmatprep.subr.mxu0 0.0
    %1261 = vmatpush1.msra.mxu0 0.0
    %1262 = vmatprep.subr.mxu0 0.0
    %1263 = vmatpush1.msra.mxu0 0.0
    %1264 = vmatprep.subr.mxu0 0.0
    %1265 = vmatpush1.msra.mxu0 0.0
    %1266 = vmatprep.subr.mxu0 0.0
    %1267 = vmatpush1.msra.mxu0 0.0
    %1268 = vmatprep.subr.mxu0 0.0
    %1269 = vmatpush1.msra.mxu0 0.0
    %1270 = vmatprep.subr.mxu0 0.0
    %1271 = vmatpush1.msra.mxu0 0.0
    %1272 = vmatprep.subr.mxu0 0.0
    %1273 = vmatpush1.msra.mxu0 0.0
    %1274 = vmatprep.subr.mxu0 0.0
    %1275 = vmatpush1.msra.mxu0 0.0
    %1276 = vmatprep.subr.mxu0 0.0
    %1277 = vmatpush1.msra.mxu0 0.0
    %1278 = vmatprep.subr.mxu0 0.0
    %1279 = vmatpush1.msra.mxu0 0.0
    %1280 = vmatprep.subr.mxu0 0.0
    %1281 = vmatpush1.msra.mxu0 0.0
    %1282 = vmatprep.subr.mxu0 0.0
    %1283 = vmatpush1.msra.mxu0 0.0
    %1284 = vmatprep.subr.mxu0 0.0
    %1285 = vmatpush1.msra.mxu0 0.0
    %1286 = vmatprep.subr.mxu0 0.0
    %1287 = vmatpush1.msra.mxu0 0.0
    %1288 = vmatprep.subr.mxu0 0.0
    %1289 = vmatpush1.msra.mxu0 0.0
    %1290 = vmatprep.subr.mxu0 0.0
    %1291 = vmatpush1.msra.mxu0 0.0
    %1292 = vmatprep.subr.mxu0 0.0
    %1293 = vmatpush1.msra.mxu0 0.0
    %1294 = vmatprep.subr.mxu0 0.0
    %1295 = vmatpush1.msra.mxu0 0.0
    %1296 = vmatprep.subr.mxu0 0.0
    %1297 = vmatpush1.msra.mxu0 0.0
    %1298 = vmatprep.subr.mxu0 0.0
    %1299 = vmatpush1.msra.mxu0 0.0
    %1300 = vmatprep.subr.mxu0 0.0
    %1301 = vmatpush1.msra.mxu0 0.0
    %1302 = vmatprep.subr.mxu0 0.0
    %1303 = vmatpush1.msra.mxu0 0.0
    %1304 = vmatprep.mubr.f32.mxu0 0.0
    %1305 = vmatmul.mubr.f32.gmra.mrb[0].mxu0 %v1238
    %v1306 = vpop.f32.mrb[0].mxu0
    %v1307 = vadd.f32 0.0, %v1306
    %v1308 = vpop.f32.mrb[0].mxu0
    %1309 = vdwg.mxu0
    %1310 = vrot.lane.b32.xlu0 %v228, 64
    %v1311 = vpop.permute.xlu0 %1310
    %v1314 = vsel %vm235, %v927, 0
    %1316 = vmatprep.subr.mxu0 0.0
    %1317 = vmatpush1.msra.mxu0 %v1311
    %1318 = vmatprep.subr.mxu0 0.0
    %1319 = vmatpush1.msra.mxu0 0.0
    %1320 = vmatprep.subr.mxu0 0.0
    %1321 = vmatpush1.msra.mxu0 0.0
    %1322 = vmatprep.subr.mxu0 0.0
    %1323 = vmatpush1.msra.mxu0 0.0
    %1324 = vmatprep.subr.mxu0 0.0
    %1325 = vmatpush1.msra.mxu0 0.0
    %1326 = vmatprep.subr.mxu0 0.0
    %1327 = vmatpush1.msra.mxu0 0.0
    %1328 = vmatprep.subr.mxu0 0.0
    %1329 = vmatpush1.msra.mxu0 0.0
    %1330 = vmatprep.subr.mxu0 0.0
    %1331 = vmatpush1.msra.mxu0 0.0
    %1332 = vmatprep.subr.mxu0 0.0
    %1333 = vmatpush1.msra.mxu0 0.0
    %1334 = vmatprep.subr.mxu0 0.0
    %1335 = vmatpush1.msra.mxu0 0.0
    %1336 = vmatprep.subr.mxu0 0.0
    %1337 = vmatpush1.msra.mxu0 0.0
    %1338 = vmatprep.subr.mxu0 0.0
    %1339 = vmatpush1.msra.mxu0 0.0
    %1340 = vmatprep.subr.mxu0 0.0
    %1341 = vmatpush1.msra.mxu0 0.0
    %1342 = vmatprep.subr.mxu0 0.0
    %1343 = vmatpush1.msra.mxu0 0.0
    %1344 = vmatprep.subr.mxu0 0.0
    %1345 = vmatpush1.msra.mxu0 0.0
    %1346 = vmatprep.subr.mxu0 0.0
    %1347 = vmatpush1.msra.mxu0 0.0
    %1348 = vmatprep.subr.mxu0 0.0
    %1349 = vmatpush1.msra.mxu0 0.0
    %1350 = vmatprep.subr.mxu0 0.0
    %1351 = vmatpush1.msra.mxu0 0.0
    %1352 = vmatprep.subr.mxu0 0.0
    %1353 = vmatpush1.msra.mxu0 0.0
    %1354 = vmatprep.subr.mxu0 0.0
    %1355 = vmatpush1.msra.mxu0 0.0
    %1356 = vmatprep.subr.mxu0 0.0
    %1357 = vmatpush1.msra.mxu0 0.0
    %1358 = vmatprep.subr.mxu0 0.0
    %1359 = vmatpush1.msra.mxu0 0.0
    %1360 = vmatprep.subr.mxu0 0.0
    %1361 = vmatpush1.msra.mxu0 0.0
    %1362 = vmatprep.subr.mxu0 0.0
    %1363 = vmatpush1.msra.mxu0 0.0
    %1364 = vmatprep.subr.mxu0 0.0
    %1365 = vmatpush1.msra.mxu0 0.0
    %1366 = vmatprep.subr.mxu0 0.0
    %1367 = vmatpush1.msra.mxu0 0.0
    %1368 = vmatprep.subr.mxu0 0.0
    %1369 = vmatpush1.msra.mxu0 0.0
    %1370 = vmatprep.subr.mxu0 0.0
    %1371 = vmatpush1.msra.mxu0 0.0
    %1372 = vmatprep.subr.mxu0 0.0
    %1373 = vmatpush1.msra.mxu0 0.0
    %1374 = vmatprep.subr.mxu0 0.0
    %1375 = vmatpush1.msra.mxu0 0.0
    %1376 = vmatprep.subr.mxu0 0.0
    %1377 = vmatpush1.msra.mxu0 0.0
    %1378 = vmatprep.subr.mxu0 0.0
    %1379 = vmatpush1.msra.mxu0 0.0
    %1380 = vmatprep.mubr.f32.mxu0 0.0
    %1381 = vmatmul.mubr.f32.gmra.mrb[0].mxu0 %v1314
    %v1382 = vpop.f32.mrb[0].mxu0
    %v1383 = vadd.f32 0.0, %v1382
    %v1384 = vpop.f32.mrb[0].mxu0
    %1385 = vdwg.mxu0
    %1386 = vrot.lane.b32.xlu0 %v230, 64
    %v1387 = vpop.permute.xlu0 %1386
    %v1390 = vsel %vm235, %v928, 0
    %1392 = vmatprep.subr.mxu0 0.0
    %1393 = vmatpush1.msra.mxu0 %v1387
    %1394 = vmatprep.subr.mxu0 0.0
    %1395 = vmatpush1.msra.mxu0 0.0
    %1396 = vmatprep.subr.mxu0 0.0
    %1397 = vmatpush1.msra.mxu0 0.0
    %1398 = vmatprep.subr.mxu0 0.0
    %1399 = vmatpush1.msra.mxu0 0.0
    %1400 = vmatprep.subr.mxu0 0.0
    %1401 = vmatpush1.msra.mxu0 0.0
    %1402 = vmatprep.subr.mxu0 0.0
    %1403 = vmatpush1.msra.mxu0 0.0
    %1404 = vmatprep.subr.mxu0 0.0
    %1405 = vmatpush1.msra.mxu0 0.0
    %1406 = vmatprep.subr.mxu0 0.0
    %1407 = vmatpush1.msra.mxu0 0.0
    %1408 = vmatprep.subr.mxu0 0.0
    %1409 = vmatpush1.msra.mxu0 0.0
    %1410 = vmatprep.subr.mxu0 0.0
    %1411 = vmatpush1.msra.mxu0 0.0
    %1412 = vmatprep.subr.mxu0 0.0
    %1413 = vmatpush1.msra.mxu0 0.0
    %1414 = vmatprep.subr.mxu0 0.0
    %1415 = vmatpush1.msra.mxu0 0.0
    %1416 = vmatprep.subr.mxu0 0.0
    %1417 = vmatpush1.msra.mxu0 0.0
    %1418 = vmatprep.subr.mxu0 0.0
    %1419 = vmatpush1.msra.mxu0 0.0
    %1420 = vmatprep.subr.mxu0 0.0
    %1421 = vmatpush1.msra.mxu0 0.0
    %1422 = vmatprep.subr.mxu0 0.0
    %1423 = vmatpush1.msra.mxu0 0.0
    %1424 = vmatprep.subr.mxu0 0.0
    %1425 = vmatpush1.msra.mxu0 0.0
    %1426 = vmatprep.subr.mxu0 0.0
    %1427 = vmatpush1.msra.mxu0 0.0
    %1428 = vmatprep.subr.mxu0 0.0
    %1429 = vmatpush1.msra.mxu0 0.0
    %1430 = vmatprep.subr.mxu0 0.0
    %1431 = vmatpush1.msra.mxu0 0.0
    %1432 = vmatprep.subr.mxu0 0.0
    %1433 = vmatpush1.msra.mxu0 0.0
    %1434 = vmatprep.subr.mxu0 0.0
    %1435 = vmatpush1.msra.mxu0 0.0
    %1436 = vmatprep.subr.mxu0 0.0
    %1437 = vmatpush1.msra.mxu0 0.0
    %1438 = vmatprep.subr.mxu0 0.0
    %1439 = vmatpush1.msra.mxu0 0.0
    %1440 = vmatprep.subr.mxu0 0.0
    %1441 = vmatpush1.msra.mxu0 0.0
    %1442 = vmatprep.subr.mxu0 0.0
    %1443 = vmatpush1.msra.mxu0 0.0
    %1444 = vmatprep.subr.mxu0 0.0
    %1445 = vmatpush1.msra.mxu0 0.0
    %1446 = vmatprep.subr.mxu0 0.0
    %1447 = vmatpush1.msra.mxu0 0.0
    %1448 = vmatprep.subr.mxu0 0.0
    %1449 = vmatpush1.msra.mxu0 0.0
    %1450 = vmatprep.subr.mxu0 0.0
    %1451 = vmatpush1.msra.mxu0 0.0
    %1452 = vmatprep.subr.mxu0 0.0
    %1453 = vmatpush1.msra.mxu0 0.0
    %1454 = vmatprep.subr.mxu0 0.0
    %1455 = vmatpush1.msra.mxu0 0.0
    %1456 = vmatprep.mubr.f32.mxu0 0.0
    %1457 = vmatmul.mubr.f32.gmra.mrb[0].mxu0 %v1390
    %v1458 = vpop.f32.mrb[0].mxu0
    %v1459 = vadd.f32 0.0, %v1458
    %v1460 = vpop.f32.mrb[0].mxu0
    %1461 = vdwg.mxu0
    %1462 = vrot.lane.b32.xlu0 %v232, 64
    %v1463 = vpop.permute.xlu0 %1462
    %v1466 = vsel %vm235, %v929, 0
    %1468 = vmatprep.subr.mxu0 0.0
    %1469 = vmatpush1.msra.mxu0 %v1463
    %1470 = vmatprep.subr.mxu0 0.0
    %1471 = vmatpush1.msra.mxu0 0.0
    %1472 = vmatprep.subr.mxu0 0.0
    %1473 = vmatpush1.msra.mxu0 0.0
    %1474 = vmatprep.subr.mxu0 0.0
    %1475 = vmatpush1.msra.mxu0 0.0
    %1476 = vmatprep.subr.mxu0 0.0
    %1477 = vmatpush1.msra.mxu0 0.0
    %1478 = vmatprep.subr.mxu0 0.0
    %1479 = vmatpush1.msra.mxu0 0.0
    %1480 = vmatprep.subr.mxu0 0.0
    %1481 = vmatpush1.msra.mxu0 0.0
    %1482 = vmatprep.subr.mxu0 0.0
    %1483 = vmatpush1.msra.mxu0 0.0
    %1484 = vmatprep.subr.mxu0 0.0
    %1485 = vmatpush1.msra.mxu0 0.0
    %1486 = vmatprep.subr.mxu0 0.0
    %1487 = vmatpush1.msra.mxu0 0.0
    %1488 = vmatprep.subr.mxu0 0.0
    %1489 = vmatpush1.msra.mxu0 0.0
    %1490 = vmatprep.subr.mxu0 0.0
    %1491 = vmatpush1.msra.mxu0 0.0
    %1492 = vmatprep.subr.mxu0 0.0
    %1493 = vmatpush1.msra.mxu0 0.0
    %1494 = vmatprep.subr.mxu0 0.0
    %1495 = vmatpush1.msra.mxu0 0.0
    %1496 = vmatprep.subr.mxu0 0.0
    %1497 = vmatpush1.msra.mxu0 0.0
    %1498 = vmatprep.subr.mxu0 0.0
    %1499 = vmatpush1.msra.mxu0 0.0
    %1500 = vmatprep.subr.mxu0 0.0
    %1501 = vmatpush1.msra.mxu0 0.0
    %1502 = vmatprep.subr.mxu0 0.0
    %1503 = vmatpush1.msra.mxu0 0.0
    %1504 = vmatprep.subr.mxu0 0.0
    %1505 = vmatpush1.msra.mxu0 0.0
    %1506 = vmatprep.subr.mxu0 0.0
    %1507 = vmatpush1.msra.mxu0 0.0
    %1508 = vmatprep.subr.mxu0 0.0
    %1509 = vmatpush1.msra.mxu0 0.0
    %1510 = vmatprep.subr.mxu0 0.0
    %1511 = vmatpush1.msra.mxu0 0.0
    %1512 = vmatprep.subr.mxu0 0.0
    %1513 = vmatpush1.msra.mxu0 0.0
    %1514 = vmatprep.subr.mxu0 0.0
    %1515 = vmatpush1.msra.mxu0 0.0
    %1516 = vmatprep.subr.mxu0 0.0
    %1517 = vmatpush1.msra.mxu0 0.0
    %1518 = vmatprep.subr.mxu0 0.0
    %1519 = vmatpush1.msra.mxu0 0.0
    %1520 = vmatprep.subr.mxu0 0.0
    %1521 = vmatpush1.msra.mxu0 0.0
    %1522 = vmatprep.subr.mxu0 0.0
    %1523 = vmatpush1.msra.mxu0 0.0
    %1524 = vmatprep.subr.mxu0 0.0
    %1525 = vmatpush1.msra.mxu0 0.0
    %1526 = vmatprep.subr.mxu0 0.0
    %1527 = vmatpush1.msra.mxu0 0.0
    %1528 = vmatprep.subr.mxu0 0.0
    %1529 = vmatpush1.msra.mxu0 0.0
    %1530 = vmatprep.subr.mxu0 0.0
    %1531 = vmatpush1.msra.mxu0 0.0
    %1532 = vmatprep.mubr.f32.mxu0 0.0
    %1533 = vmatmul.mubr.f32.gmra.mrb[0].mxu0 %v1466
    %v1534 = vpop.f32.mrb[0].mxu0
    %v1535 = vadd.f32 0.0, %v1534
    %v1536 = vpop.f32.mrb[0].mxu0
    %1537 = vdwg.mxu0
    %1540 = vrot.lane.b32.xlu0 %v1155, 8
    %v1541 = vpop.permute.xlu0 %1540
    %1542 = vrot.lane.b32.xlu0 %v1231, 8
    %v1543 = vpop.permute.xlu0 %1542
    %1548 = vrot.lane.b32.xlu0 %v1307, 16
    %v1549 = vpop.permute.xlu0 %1548
    %1550 = vrot.lane.b32.xlu0 %v1383, 16
    %v1551 = vpop.permute.xlu0 %1550
    %1556 = vrot.lane.b32.xlu0 %v1459, 24
    %v1557 = vpop.permute.xlu0 %1556
    %1558 = vrot.lane.b32.xlu0 %v1535, 24
    %v1559 = vpop.permute.xlu0 %1558
    %v1562 = vsel %vm235, %v1003, %v1541
    %v1563 = vsel %vm235, %v1079, %v1543
    %vm1564 = vcmask 130048
    %v1565 = vsel %vm1564, %v1562, %v1549
    %v1566 = vsel %vm1564, %v1563, %v1551
    %vm1567 = vcmask 195584
    %v1568 = vsel %vm1567, %v1565, %v1557
    %v1569 = vsel %vm1567, %v1566, %v1559
    %v1570 = vlaneseq
    %v1571 = vshrl.u32 %v1570, 7
    %v1572 = vsub.s32 3, %v1571
    %v1573 = vrot.slane %v77, %v1572
    %v1575 = vsel %vm78, %v1568, 0
    %v1578 = vsel %vm78, %v1569, 0
    %1580 = vmatprep.subr.mxu0 0.0
    %1581 = vmatpush1.msra.mxu0 %v61
    %1582 = vmatprep.subr.mxu0 0.0
    %1583 = vmatpush1.msra.mxu0 %v62
    %1584 = vmatprep.subr.mxu0 0.0
    %1585 = vmatpush1.msra.mxu0 %v63
    %1586 = vmatprep.subr.mxu0 0.0
    %1587 = vmatpush1.msra.mxu0 %v64
    %1588 = vmatprep.subr.mxu0 0.0
    %1589 = vmatpush1.msra.mxu0 0.0
    %1590 = vmatprep.subr.mxu0 0.0
    %1591 = vmatpush1.msra.mxu0 0.0
    %1592 = vmatprep.subr.mxu0 0.0
    %1593 = vmatpush1.msra.mxu0 0.0
    %1594 = vmatprep.subr.mxu0 0.0
    %1595 = vmatpush1.msra.mxu0 0.0
    %1596 = vmatprep.subr.mxu0 0.0
    %1597 = vmatpush1.msra.mxu0 0.0
    %1598 = vmatprep.subr.mxu0 0.0
    %1599 = vmatpush1.msra.mxu0 0.0
    %1600 = vmatprep.subr.mxu0 0.0
    %1601 = vmatpush1.msra.mxu0 0.0
    %1602 = vmatprep.subr.mxu0 0.0
    %1603 = vmatpush1.msra.mxu0 0.0
    %1604 = vmatprep.subr.mxu0 0.0
    %1605 = vmatpush1.msra.mxu0 0.0
    %1606 = vmatprep.subr.mxu0 0.0
    %1607 = vmatpush1.msra.mxu0 0.0
    %1608 = vmatprep.subr.mxu0 0.0
    %1609 = vmatpush1.msra.mxu0 0.0
    %1610 = vmatprep.subr.mxu0 0.0
    %1611 = vmatpush1.msra.mxu0 0.0
    %1612 = vmatprep.subr.mxu0 0.0
    %1613 = vmatpush1.msra.mxu0 0.0
    %1614 = vmatprep.subr.mxu0 0.0
    %1615 = vmatpush1.msra.mxu0 0.0
    %1616 = vmatprep.subr.mxu0 0.0
    %1617 = vmatpush1.msra.mxu0 0.0
    %1618 = vmatprep.subr.mxu0 0.0
    %1619 = vmatpush1.msra.mxu0 0.0
    %1620 = vmatprep.subr.mxu0 0.0
    %1621 = vmatpush1.msra.mxu0 0.0
    %1622 = vmatprep.subr.mxu0 0.0
    %1623 = vmatpush1.msra.mxu0 0.0
    %1624 = vmatprep.subr.mxu0 0.0
    %1625 = vmatpush1.msra.mxu0 0.0
    %1626 = vmatprep.subr.mxu0 0.0
    %1627 = vmatpush1.msra.mxu0 0.0
    %1628 = vmatprep.subr.mxu0 0.0
    %1629 = vmatpush1.msra.mxu0 0.0
    %1630 = vmatprep.subr.mxu0 0.0
    %1631 = vmatpush1.msra.mxu0 0.0
    %1632 = vmatprep.subr.mxu0 0.0
    %1633 = vmatpush1.msra.mxu0 0.0
    %1634 = vmatprep.subr.mxu0 0.0
    %1635 = vmatpush1.msra.mxu0 0.0
    %1636 = vmatprep.subr.mxu0 0.0
    %1637 = vmatpush1.msra.mxu0 0.0
    %1638 = vmatprep.subr.mxu0 0.0
    %1639 = vmatpush1.msra.mxu0 0.0
    %1640 = vmatprep.subr.mxu0 0.0
    %1641 = vmatpush1.msra.mxu0 0.0
    %1642 = vmatprep.subr.mxu0 0.0
    %1643 = vmatpush1.msra.mxu0 0.0
    %1644 = vmatprep.mubr.f32.mxu0 0.0
    %1645 = vmatmul.mubr.f32.gmra.mrb[0].mxu0 %v1575
    %v1646 = vpop.f32.mrb[0].mxu0
    %v1647 = vadd.f32 %v1573, %v1646
    %v1648 = vpop.f32.mrb[0].mxu0
    %1649 = vmatprep.mubr.f32.mxu0 0.0
    %1650 = vmatmul.mubr.f32.gmra.mrb[0].mxu0 %v1578
    %v1651 = vpop.f32.mrb[0].mxu0
    %v1652 = vadd.f32 %v1573, %v1651
    %v1653 = vpop.f32.mrb[0].mxu0
    %1654 = vdwg.mxu0
    %v1655 = vadd.f32 %v55, %v1647
    %v1656 = vadd.f32 %v56, %v1652
    %v1657 = vsel %vm78, %v1655, 0.0
    %1658 = vadd.xlane.f32.xlu0 %v1657
    %v1659 = vpop.xlane.xlu0 %1658
    %v1660 = vsel %vm78, %v1656, 0.0
    %1661 = vadd.xlane.f32.xlu0 %v1660
    %v1662 = vpop.xlane.xlu0 %1661
    %v1663 = vmul.f32 %v1659, %v85
    %v1664 = vmul.f32 %v1662, %v85
    %v1665 = vsub.f32 %v1655, %v1663
    %v1666 = vsub.f32 %v1656, %v1664
    %v1667 = vmul.f32 %v1665, %v1665
    %v1668 = vmul.f32 %v1666, %v1666
    %v1669 = vsel %vm78, %v1667, 0.0
    %1670 = vadd.xlane.f32.xlu0 %v1669
    %v1671 = vpop.xlane.xlu0 %1670
    %v1672 = vsel %vm78, %v1668, 0.0
    %1673 = vadd.xlane.f32.xlu0 %v1672
    %v1674 = vpop.xlane.xlu0 %1673
    %v1675 = vmul.f32 %v1671, %v85
    %v1676 = vmul.f32 %v1674, %v85
    %v1677 = vadd.f32 %v1675, 1e-05
    %v1678 = vadd.f32 %v1676, 1e-05
    %v1679 = vrsqrt.pop %v1677
    %v1680 = vrsqrt.pop %v1678
    %v1681 = vmul.f32 %v1665, %v1679
    %v1682 = vmul.f32 %v1666, %v1680
    %v1683 = vlaneseq
    %v1684 = vshrl.u32 %v1683, 7
    %v1685 = vsub.s32 4, %v1684
    %v1686 = vrot.slane %v77, %v1685
    %v1687 = vmul.f32 %v1681, %v1686
    %v1688 = vmul.f32 %v1682, %v1686
    %v1689 = vlaneseq
    %v1690 = vshrl.u32 %v1689, 7
    %v1691 = vsub.s32 5, %v1690
    %v1692 = vrot.slane %v77, %v1691
    %v1693 = vadd.f32 %v1687, %v1692
    %v1694 = vadd.f32 %v1688, %v1692
    %v1695 = vlaneseq
    %v1696 = vshrl.u32 %v1695, 7
    %v1697 = vsub.s32 6, %v1696
    %v1698 = vrot.slane %v77, %v1697
    %v1700 = vsel %vm78, %v1693, 0
    %v1703 = vsel %vm78, %v1694, 0
    %1705 = vmatprep.subr.mxu0 0.0
    %1706 = vmatpush1.msra.mxu0 %v65
    %1707 = vmatprep.subr.mxu0 0.0
    %1708 = vmatpush1.msra.mxu0 %v66
    %1709 = vmatprep.subr.mxu0 0.0
    %1710 = vmatpush1.msra.mxu0 %v67
    %1711 = vmatprep.subr.mxu0 0.0
    %1712 = vmatpush1.msra.mxu0 %v68
    %1713 = vmatprep.subr.mxu0 0.0
    %1714 = vmatpush1.msra.mxu0 0.0
    %1715 = vmatprep.subr.mxu0 0.0
    %1716 = vmatpush1.msra.mxu0 0.0
    %1717 = vmatprep.subr.mxu0 0.0
    %1718 = vmatpush1.msra.mxu0 0.0
    %1719 = vmatprep.subr.mxu0 0.0
    %1720 = vmatpush1.msra.mxu0 0.0
    %1721 = vmatprep.subr.mxu0 0.0
    %1722 = vmatpush1.msra.mxu0 0.0
    %1723 = vmatprep.subr.mxu0 0.0
    %1724 = vmatpush1.msra.mxu0 0.0
    %1725 = vmatprep.subr.mxu0 0.0
    %1726 = vmatpush1.msra.mxu0 0.0
    %1727 = vmatprep.subr.mxu0 0.0
    %1728 = vmatpush1.msra.mxu0 0.0
    %1729 = vmatprep.subr.mxu0 0.0
    %1730 = vmatpush1.msra.mxu0 0.0
    %1731 = vmatprep.subr.mxu0 0.0
    %1732 = vmatpush1.msra.mxu0 0.0
    %1733 = vmatprep.subr.mxu0 0.0
    %1734 = vmatpush1.msra.mxu0 0.0
    %1735 = vmatprep.subr.mxu0 0.0
    %1736 = vmatpush1.msra.mxu0 0.0
    %1737 = vmatprep.subr.mxu0 0.0
    %1738 = vmatpush1.msra.mxu0 0.0
    %1739 = vmatprep.subr.mxu0 0.0
    %1740 = vmatpush1.msra.mxu0 0.0
    %1741 = vmatprep.subr.mxu0 0.0
    %1742 = vmatpush1.msra.mxu0 0.0
    %1743 = vmatprep.subr.mxu0 0.0
    %1744 = vmatpush1.msra.mxu0 0.0
    %1745 = vmatprep.subr.mxu0 0.0
    %1746 = vmatpush1.msra.mxu0 0.0
    %1747 = vmatprep.subr.mxu0 0.0
    %1748 = vmatpush1.msra.mxu0 0.0
    %1749 = vmatprep.subr.mxu0 0.0
    %1750 = vmatpush1.msra.mxu0 0.0
    %1751 = vmatprep.subr.mxu0 0.0
    %1752 = vmatpush1.msra.mxu0 0.0
    %1753 = vmatprep.subr.mxu0 0.0
    %1754 = vmatpush1.msra.mxu0 0.0
    %1755 = vmatprep.subr.mxu0 0.0
    %1756 = vmatpush1.msra.mxu0 0.0
    %1757 = vmatprep.subr.mxu0 0.0
    %1758 = vmatpush1.msra.mxu0 0.0
    %1759 = vmatprep.subr.mxu0 0.0
    %1760 = vmatpush1.msra.mxu0 0.0
    %1761 = vmatprep.subr.mxu0 0.0
    %1762 = vmatpush1.msra.mxu0 0.0
    %1763 = vmatprep.subr.mxu0 0.0
    %1764 = vmatpush1.msra.mxu0 0.0
    %1765 = vmatprep.subr.mxu0 0.0
    %1766 = vmatpush1.msra.mxu0 0.0
    %1767 = vmatprep.subr.mxu0 0.0
    %1768 = vmatpush1.msra.mxu0 0.0
    %1769 = vmatprep.mubr.f32.mxu0 0.0
    %1770 = vmatmul.mubr.f32.gmra.mrb[0].mxu0 %v1700
    %v1771 = vpop.f32.mrb[0].mxu0
    %v1772 = vadd.f32 %v1698, %v1771
    %v1773 = vpop.f32.mrb[0].mxu0
    %1774 = vmatprep.mubr.f32.mxu0 0.0
    %1775 = vmatmul.mubr.f32.gmra.mrb[0].mxu0 %v1703
    %v1776 = vpop.f32.mrb[0].mxu0
    %v1777 = vadd.f32 %v1698, %v1776
    %v1778 = vpop.f32.mrb[0].mxu0
    %1779 = vdwg.mxu0
    %v1780 = vmul.f32 %v1772, 0.5
    %v1781 = vmul.f32 %v1777, 0.5
    %v1782 = vmul.f32 %v1772, 0.70710677
    %v1783 = vmul.f32 %v1777, 0.70710677
    %v1784 = vand.u32 2147483647, %v1782
    %v1785 = vand.u32 2147483647, %v1783
    %v1786 = vmul.f32 %v1784, 0.3275911
    %v1787 = vmul.f32 %v1785, 0.3275911
    %v1788 = vadd.f32 %v1786, 1.0
    %v1789 = vadd.f32 %v1787, 1.0
    %v1790 = vrcp.pop %v1788
    %v1791 = vrcp.pop %v1789
    %v1792 = vmul.f32 %v1790, 1.0614054
    %v1793 = vmul.f32 %v1791, 1.0614054
    %v1794 = vadd.f32 %v1792, -1.4531521
    %v1795 = vadd.f32 %v1793, -1.4531521
    %v1796 = vmul.f32 %v1794, %v1790
    %v1797 = vmul.f32 %v1795, %v1791
    %v1798 = vadd.f32 %v1796, 1.4214138
    %v1799 = vadd.f32 %v1797, 1.4214138
    %v1800 = vmul.f32 %v1798, %v1790
    %v1801 = vmul.f32 %v1799, %v1791
    %v1802 = vadd.f32 %v1800, -0.28449672
    %v1803 = vadd.f32 %v1801, -0.28449672
    %v1804 = vmul.f32 %v1802, %v1790
    %v1805 = vmul.f32 %v1803, %v1791
    %v1806 = vadd.f32 %v1804, 0.2548296
    %v1807 = vadd.f32 %v1805, 0.2548296
    %v1808 = vmul.f32 %v1806, %v1790
    %v1809 = vmul.f32 %v1807, %v1791
    %v1810 = vsub.f32 0.0, %v1784
    %v1811 = vsub.f32 0.0, %v1785
    %v1812 = vmul.f32 %v1810, %v1784
    %v1813 = vmul.f32 %v1811, %v1785
    %v1814 = vmul.f32 %v1812, 1.442695
    %v1815 = vpow.pop %v1814
    %v1816 = vmul.f32 %v1813, 1.442695
    %v1817 = vpow.pop %v1816
    %v1818 = vmul.f32 %v1808, %v1815
    %v1819 = vmul.f32 %v1809, %v1817
    %v1820 = vsub.f32 1.0, %v1818
    %v1821 = vsub.f32 1.0, %v1819
    %vm1822 = vcmp.lt.f32.partialorder %v1782, 0.0
    %vm1823 = vcmp.lt.f32.partialorder %v1783, 0.0
    %v1824 = vsub.f32 0.0, %v1820
    %v1825 = vsub.f32 0.0, %v1821
    %v1826 = vsel %vm1822, %v1824, %v1820
    %v1827 = vsel %vm1823, %v1825, %v1821
    %v1828 = vadd.f32 %v1826, 1.0
    %v1829 = vadd.f32 %v1827, 1.0
    %v1830 = vmul.f32 %v1780, %v1828
    %v1831 = vmul.f32 %v1781, %v1829
    %v1832 = vlaneseq
    %v1833 = vshrl.u32 %v1832, 7
    %v1834 = vsub.s32 7, %v1833
    %v1835 = vrot.slane %v77, %v1834
    %vm1836 = vcmask 523264
    %v1838 = vsel %vm1836, %v1830, 0
    %v1841 = vsel %vm1836, %v1831, 0
    %1843 = vmatprep.subr.mxu0 0.0
    %1844 = vmatpush1.msra.mxu0 %v69
    %1845 = vmatprep.subr.mxu0 0.0
    %1846 = vmatpush1.msra.mxu0 %v70
    %1847 = vmatprep.subr.mxu0 0.0
    %1848 = vmatpush1.msra.mxu0 %v71
    %1849 = vmatprep.subr.mxu0 0.0
    %1850 = vmatpush1.msra.mxu0 %v72
    %1851 = vmatprep.subr.mxu0 0.0
    %1852 = vmatpush1.msra.mxu0 %v73
    %1853 = vmatprep.subr.mxu0 0.0
    %1854 = vmatpush1.msra.mxu0 %v74
    %1855 = vmatprep.subr.mxu0 0.0
    %1856 = vmatpush1.msra.mxu0 %v75
    %1857 = vmatprep.subr.mxu0 0.0
    %1858 = vmatpush1.msra.mxu0 %v76
    %1859 = vmatprep.subr.mxu0 0.0
    %1860 = vmatpush1.msra.mxu0 0.0
    %1861 = vmatprep.subr.mxu0 0.0
    %1862 = vmatpush1.msra.mxu0 0.0
    %1863 = vmatprep.subr.mxu0 0.0
    %1864 = vmatpush1.msra.mxu0 0.0
    %1865 = vmatprep.subr.mxu0 0.0
    %1866 = vmatpush1.msra.mxu0 0.0
    %1867 = vmatprep.subr.mxu0 0.0
    %1868 = vmatpush1.msra.mxu0 0.0
    %1869 = vmatprep.subr.mxu0 0.0
    %1870 = vmatpush1.msra.mxu0 0.0
    %1871 = vmatprep.subr.mxu0 0.0
    %1872 = vmatpush1.msra.mxu0 0.0
    %1873 = vmatprep.subr.mxu0 0.0
    %1874 = vmatpush1.msra.mxu0 0.0
    %1875 = vmatprep.subr.mxu0 0.0
    %1876 = vmatpush1.msra.mxu0 0.0
    %1877 = vmatprep.subr.mxu0 0.0
    %1878 = vmatpush1.msra.mxu0 0.0
    %1879 = vmatprep.subr.mxu0 0.0
    %1880 = vmatpush1.msra.mxu0 0.0
    %1881 = vmatprep.subr.mxu0 0.0
    %1882 = vmatpush1.msra.mxu0 0.0
    %1883 = vmatprep.subr.mxu0 0.0
    %1884 = vmatpush1.msra.mxu0 0.0
    %1885 = vmatprep.subr.mxu0 0.0
    %1886 = vmatpush1.msra.mxu0 0.0
    %1887 = vmatprep.subr.mxu0 0.0
    %1888 = vmatpush1.msra.mxu0 0.0
    %1889 = vmatprep.subr.mxu0 0.0
    %1890 = vmatpush1.msra.mxu0 0.0
    %1891 = vmatprep.subr.mxu0 0.0
    %1892 = vmatpush1.msra.mxu0 0.0
    %1893 = vmatprep.subr.mxu0 0.0
    %1894 = vmatpush1.msra.mxu0 0.0
    %1895 = vmatprep.subr.mxu0 0.0
    %1896 = vmatpush1.msra.mxu0 0.0
    %1897 = vmatprep.subr.mxu0 0.0
    %1898 = vmatpush1.msra.mxu0 0.0
    %1899 = vmatprep.subr.mxu0 0.0
    %1900 = vmatpush1.msra.mxu0 0.0
    %1901 = vmatprep.subr.mxu0 0.0
    %1902 = vmatpush1.msra.mxu0 0.0
    %1903 = vmatprep.subr.mxu0 0.0
    %1904 = vmatpush1.msra.mxu0 0.0
    %1905 = vmatprep.subr.mxu0 0.0
    %1906 = vmatpush1.msra.mxu0 0.0
    %1907 = vmatprep.mubr.f32.mxu0 0.0
    %1908 = vmatmul.mubr.f32.gmra.mrb[0].mxu0 %v1838
    %v1909 = vpop.f32.mrb[0].mxu0
    %v1910 = vadd.f32 %v1835, %v1909
    %v1911 = vpop.f32.mrb[0].mxu0
    %1912 = vmatprep.mubr.f32.mxu0 0.0
    %1913 = vmatmul.mubr.f32.gmra.mrb[0].mxu0 %v1841
    %v1914 = vpop.f32.mrb[0].mxu0
    %v1915 = vadd.f32 %v1835, %v1914
    %v1916 = vpop.f32.mrb[0].mxu0
    %1917 = vdwg.mxu0
    %v1918 = vadd.f32 %v1655, %v1910
    %v1919 = vadd.f32 %v1656, %v1915
    %s1920 = scalar_lea.vmem [#allocation4], 160
    %v1921 = vld [vmem:[%s1920] sm:$0xff]
    %v1922 = vld [vmem:[%s1920 + $0x8] sm:$0xff]
    %v1923 = vld [vmem:[%s1920 + $0x10] sm:$0xff]
    %v1924 = vld [vmem:[%s1920 + $0x18] sm:$0xff]
    %v1925 = vld [vmem:[%s1920 + $0x20] sm:$0xff]
    %v1926 = vld [vmem:[%s1920 + $0x28] sm:$0xff]
    %v1927 = vld [vmem:[%s1920 + $0x30] sm:$0xff]
    %v1928 = vld [vmem:[%s1920 + $0x38] sm:$0xff]
    %v1929 = vld [vmem:[%s1920 + $0x40] sm:$0xff]
    %v1930 = vld [vmem:[%s1920 + $0x48] sm:$0xff]
    %v1931 = vld [vmem:[%s1920 + $0x50] sm:$0xff]
    %v1932 = vld [vmem:[%s1920 + $0x58] sm:$0xff]
    %v1933 = vld [vmem:[%s1920 + $0x60] sm:$0xff]
    %v1934 = vld [vmem:[%s1920 + $0x68] sm:$0xff]
    %v1935 = vld [vmem:[%s1920 + $0x70] sm:$0xff]
    %v1936 = vld [vmem:[%s1920 + $0x78] sm:$0xff]
    %v1937 = vld [vmem:[%s1920 + $0x80] sm:$0xff]
    %v1938 = vld [vmem:[%s1920 + $0x88] sm:$0xff]
    %v1939 = vld [vmem:[%s1920 + $0x90] sm:$0xff]
    %v1940 = vld [vmem:[%s1920 + $0x98] sm:$0xff]
    %s1941 = scalar_lea.vmem [#allocation6], 8
    %v1942 = vld [vmem:[%s1941] sm:$0xff]
    %v1943 = vsel %vm78, %v1918, 0.0
    %1944 = vadd.xlane.f32.xlu0 %v1943
    %v1945 = vpop.xlane.xlu0 %1944
    %v1946 = vsel %vm78, %v1919, 0.0
    %1947 = vadd.xlane.f32.xlu0 %v1946
    %v1948 = vpop.xlane.xlu0 %1947
    %v1949 = vmul.f32 %v1945, %v85
    %v1950 = vmul.f32 %v1948, %v85
    %v1951 = vsub.f32 %v1918, %v1949
    %v1952 = vsub.f32 %v1919, %v1950
    %v1953 = vmul.f32 %v1951, %v1951
    %v1954 = vmul.f32 %v1952, %v1952
    %v1955 = vsel %vm78, %v1953, 0.0
    %1956 = vadd.xlane.f32.xlu0 %v1955
    %v1957 = vpop.xlane.xlu0 %1956
    %v1958 = vsel %vm78, %v1954, 0.0
    %1959 = vadd.xlane.f32.xlu0 %v1958
    %v1960 = vpop.xlane.xlu0 %1959
    %v1961 = vmul.f32 %v1957, %v85
    %v1962 = vmul.f32 %v1960, %v85
    %v1963 = vadd.f32 %v1961, 1e-05
    %v1964 = vadd.f32 %v1962, 1e-05
    %v1965 = vrsqrt.pop %v1963
    %v1966 = vrsqrt.pop %v1964
    %v1967 = vmul.f32 %v1951, %v1965
    %v1968 = vmul.f32 %v1952, %v1966
    %v1969 = vlaneseq
    %v1970 = vshrl.u32 %v1969, 7
    %v1971 = vsub.s32 1, %v1970
    %v1972 = vrot.slane %v1942, %v1971
    %v1973 = vmul.f32 %v1967, %v1972
    %v1974 = vmul.f32 %v1968, %v1972
    %v1975 = vlaneseq
    %v1976 = vshrl.u32 %v1975, 7
    %v1977 = vsub.s32 2, %v1976
    %v1978 = vrot.slane %v1942, %v1977
    %v1979 = vadd.f32 %v1973, %v1978
    %v1980 = vadd.f32 %v1974, %v1978
    %v1981 = vlaneseq
    %v1982 = vshrl.u32 %v1981, 7
    %v1983 = vsub.s32 0, %v1982
    %v1984 = vrot.slane %v1942, %v1983
    %v1986 = vsel %vm78, %v1979, 0
    %v1989 = vsel %vm78, %v1980, 0
    %1991 = vmatprep.subr.mxu0 0.0
    %1992 = vmatpush1.msra.mxu0 %v1921
    %1993 = vmatprep.subr.mxu0 0.0
    %1994 = vmatpush1.msra.mxu0 %v1922
    %1995 = vmatprep.subr.mxu0 0.0
    %1996 = vmatpush1.msra.mxu0 %v1923
    %1997 = vmatprep.subr.mxu0 0.0
    %1998 = vmatpush1.msra.mxu0 %v1924
    %1999 = vmatprep.subr.mxu0 0.0
    %2000 = vmatpush1.msra.mxu0 0.0
    %2001 = vmatprep.subr.mxu0 0.0
    %2002 = vmatpush1.msra.mxu0 0.0
    %2003 = vmatprep.subr.mxu0 0.0
    %2004 = vmatpush1.msra.mxu0 0.0
    %2005 = vmatprep.subr.mxu0 0.0
    %2006 = vmatpush1.msra.mxu0 0.0
    %2007 = vmatprep.subr.mxu0 0.0
    %2008 = vmatpush1.msra.mxu0 0.0
    %2009 = vmatprep.subr.mxu0 0.0
    %2010 = vmatpush1.msra.mxu0 0.0
    %2011 = vmatprep.subr.mxu0 0.0
    %2012 = vmatpush1.msra.mxu0 0.0
    %2013 = vmatprep.subr.mxu0 0.0
    %2014 = vmatpush1.msra.mxu0 0.0
    %2015 = vmatprep.subr.mxu0 0.0
    %2016 = vmatpush1.msra.mxu0 0.0
    %2017 = vmatprep.subr.mxu0 0.0
    %2018 = vmatpush1.msra.mxu0 0.0
    %2019 = vmatprep.subr.mxu0 0.0
    %2020 = vmatpush1.msra.mxu0 0.0
    %2021 = vmatprep.subr.mxu0 0.0
    %2022 = vmatpush1.msra.mxu0 0.0
    %2023 = vmatprep.subr.mxu0 0.0
    %2024 = vmatpush1.msra.mxu0 0.0
    %2025 = vmatprep.subr.mxu0 0.0
    %2026 = vmatpush1.msra.mxu0 0.0
    %2027 = vmatprep.subr.mxu0 0.0
    %2028 = vmatpush1.msra.mxu0 0.0
    %2029 = vmatprep.subr.mxu0 0.0
    %2030 = vmatpush1.msra.mxu0 0.0
    %2031 = vmatprep.subr.mxu0 0.0
    %2032 = vmatpush1.msra.mxu0 0.0
    %2033 = vmatprep.subr.mxu0 0.0
    %2034 = vmatpush1.msra.mxu0 0.0
    %2035 = vmatprep.subr.mxu0 0.0
    %2036 = vmatpush1.msra.mxu0 0.0
    %2037 = vmatprep.subr.mxu0 0.0
    %2038 = vmatpush1.msra.mxu0 0.0
    %2039 = vmatprep.subr.mxu0 0.0
    %2040 = vmatpush1.msra.mxu0 0.0
    %2041 = vmatprep.subr.mxu0 0.0
    %2042 = vmatpush1.msra.mxu0 0.0
    %2043 = vmatprep.subr.mxu0 0.0
    %2044 = vmatpush1.msra.mxu0 0.0
    %2045 = vmatprep.subr.mxu0 0.0
    %2046 = vmatpush1.msra.mxu0 0.0
    %2047 = vmatprep.subr.mxu0 0.0
    %2048 = vmatpush1.msra.mxu0 0.0
    %2049 = vmatprep.subr.mxu0 0.0
    %2050 = vmatpush1.msra.mxu0 0.0
    %2051 = vmatprep.subr.mxu0 0.0
    %2052 = vmatpush1.msra.mxu0 0.0
    %2053 = vmatprep.subr.mxu0 0.0
    %2054 = vmatpush1.msra.mxu0 0.0
    %2055 = vmatprep.mubr.f32.mxu0 0.0
    %2056 = vmatmul.mubr.f32.gmra.mrb[0].mxu0 %v1986
    %v2057 = vpop.f32.mrb[0].mxu0
    %v2058 = vadd.f32 %v1984, %v2057
    %v2059 = vpop.f32.mrb[0].mxu0
    %2060 = vmatprep.mubr.f32.mxu0 0.0
    %2061 = vmatmul.mubr.f32.gmra.mrb[0].mxu0 %v1989
    %v2062 = vpop.f32.mrb[0].mxu0
    %v2063 = vadd.f32 %v1984, %v2062
    %v2064 = vpop.f32.mrb[0].mxu0
    %2065 = vdwg.mxu0
    %v2066 = vmul.f32 %v2058, 0.35355338
    %v2067 = vmul.f32 %v2063, 0.35355338
    %2070 = vrot.lane.b32.xlu0 %v2066, 120
    %v2071 = vpop.permute.xlu0 %2070
    %2072 = vrot.lane.b32.xlu0 %v2067, 120
    %v2073 = vpop.permute.xlu0 %2072
    %2074 = vrot.lane.b32.xlu0 %v2066, 112
    %v2075 = vpop.permute.xlu0 %2074
    %2076 = vrot.lane.b32.xlu0 %v2067, 112
    %v2077 = vpop.permute.xlu0 %2076
    %2078 = vrot.lane.b32.xlu0 %v2066, 104
    %v2079 = vpop.permute.xlu0 %2078
    %2080 = vrot.lane.b32.xlu0 %v2067, 104
    %v2081 = vpop.permute.xlu0 %2080
    %2084 = vrot.lane.b32.xlu0 %v2058, 120
    %v2085 = vpop.permute.xlu0 %2084
    %2086 = vrot.lane.b32.xlu0 %v2063, 120
    %v2087 = vpop.permute.xlu0 %2086
    %2088 = vrot.lane.b32.xlu0 %v2058, 112
    %v2089 = vpop.permute.xlu0 %2088
    %2090 = vrot.lane.b32.xlu0 %v2063, 112
    %v2091 = vpop.permute.xlu0 %2090
    %2092 = vrot.lane.b32.xlu0 %v2058, 104
    %v2093 = vpop.permute.xlu0 %2092
    %2094 = vrot.lane.b32.xlu0 %v2063, 104
    %v2095 = vpop.permute.xlu0 %2094
    %2096 = vrot.lane.b32.xlu0 %v2058, 96
    %v2097 = vpop.permute.xlu0 %2096
    %v2098 = vsel %vm235, %v2066, 0
    %v2100 = vsel %vm235, %v2097, 0
    %2102 = vmatprep.subr.mxu0 0.0
    %2103 = vmatpush1.xpose.msra.mxu0 %v2100
    %2104 = vmatprep.subr.mxu0 0.0
    %2105 = vmatpush1.xpose.msra.mxu0 0.0
    %2106 = vmatprep.subr.mxu0 0.0
    %2107 = vmatpush1.xpose.msra.mxu0 0.0
    %2108 = vmatprep.subr.mxu0 0.0
    %2109 = vmatpush1.xpose.msra.mxu0 0.0
    %2110 = vmatprep.subr.mxu0 0.0
    %2111 = vmatpush1.xpose.msra.mxu0 0.0
    %2112 = vmatprep.subr.mxu0 0.0
    %2113 = vmatpush1.xpose.msra.mxu0 0.0
    %2114 = vmatprep.subr.mxu0 0.0
    %2115 = vmatpush1.xpose.msra.mxu0 0.0
    %2116 = vmatprep.subr.mxu0 0.0
    %2117 = vmatpush1.xpose.msra.mxu0 0.0
    %2118 = vmatprep.subr.mxu0 0.0
    %2119 = vmatpush1.xpose.msra.mxu0 0.0
    %2120 = vmatprep.subr.mxu0 0.0
    %2121 = vmatpush1.xpose.msra.mxu0 0.0
    %2122 = vmatprep.subr.mxu0 0.0
    %2123 = vmatpush1.xpose.msra.mxu0 0.0
    %2124 = vmatprep.subr.mxu0 0.0
    %2125 = vmatpush1.xpose.msra.mxu0 0.0
    %2126 = vmatprep.subr.mxu0 0.0
    %2127 = vmatpush1.xpose.msra.mxu0 0.0
    %2128 = vmatprep.subr.mxu0 0.0
    %2129 = vmatpush1.xpose.msra.mxu0 0.0
    %2130 = vmatprep.subr.mxu0 0.0
    %2131 = vmatpush1.xpose.msra.mxu0 0.0
    %2132 = vmatprep.subr.mxu0 0.0
    %2133 = vmatpush1.xpose.msra.mxu0 0.0
    %2134 = vmatprep.subr.mxu0 0.0
    %2135 = vmatpush1.xpose.msra.mxu0 0.0
    %2136 = vmatprep.subr.mxu0 0.0
    %2137 = vmatpush1.xpose.msra.mxu0 0.0
    %2138 = vmatprep.subr.mxu0 0.0
    %2139 = vmatpush1.xpose.msra.mxu0 0.0
    %2140 = vmatprep.subr.mxu0 0.0
    %2141 = vmatpush1.xpose.msra.mxu0 0.0
    %2142 = vmatprep.subr.mxu0 0.0
    %2143 = vmatpush1.xpose.msra.mxu0 0.0
    %2144 = vmatprep.subr.mxu0 0.0
    %2145 = vmatpush1.xpose.msra.mxu0 0.0
    %2146 = vmatprep.subr.mxu0 0.0
    %2147 = vmatpush1.xpose.msra.mxu0 0.0
    %2148 = vmatprep.subr.mxu0 0.0
    %2149 = vmatpush1.xpose.msra.mxu0 0.0
    %2150 = vmatprep.subr.mxu0 0.0
    %2151 = vmatpush1.xpose.msra.mxu0 0.0
    %2152 = vmatprep.subr.mxu0 0.0
    %2153 = vmatpush1.xpose.msra.mxu0 0.0
    %2154 = vmatprep.subr.mxu0 0.0
    %2155 = vmatpush1.xpose.msra.mxu0 0.0
    %2156 = vmatprep.subr.mxu0 0.0
    %2157 = vmatpush1.xpose.msra.mxu0 0.0
    %2158 = vmatprep.subr.mxu0 0.0
    %2159 = vmatpush1.xpose.msra.mxu0 0.0
    %2160 = vmatprep.subr.mxu0 0.0
    %2161 = vmatpush1.xpose.msra.mxu0 0.0
    %2162 = vmatprep.subr.mxu0 0.0
    %2163 = vmatpush1.xpose.msra.mxu0 0.0
    %2164 = vmatprep.subr.mxu0 0.0
    %2165 = vmatpush1.xpose.msra.mxu0 0.0
    %2166 = vmatprep.mubr.f32.mxu0 0.0
    %2167 = vmatmul.mubr.f32.gmra.mrb[0].mxu0 %v2098
    %v2168 = vpop.f32.mrb[0].mxu0
    %v2169 = vadd.f32 0.0, %v2168
    %v2170 = vpop.f32.mrb[0].mxu0
    %2171 = vdwg.mxu0
    %2172 = vrot.lane.b32.xlu0 %v2063, 96
    %v2173 = vpop.permute.xlu0 %2172
    %v2174 = vsel %vm235, %v2067, 0
    %v2176 = vsel %vm235, %v2173, 0
    %2178 = vmatprep.subr.mxu0 0.0
    %2179 = vmatpush1.xpose.msra.mxu0 %v2176
    %2180 = vmatprep.subr.mxu0 0.0
    %2181 = vmatpush1.xpose.msra.mxu0 0.0
    %2182 = vmatprep.subr.mxu0 0.0
    %2183 = vmatpush1.xpose.msra.mxu0 0.0
    %2184 = vmatprep.subr.mxu0 0.0
    %2185 = vmatpush1.xpose.msra.mxu0 0.0
    %2186 = vmatprep.subr.mxu0 0.0
    %2187 = vmatpush1.xpose.msra.mxu0 0.0
    %2188 = vmatprep.subr.mxu0 0.0
    %2189 = vmatpush1.xpose.msra.mxu0 0.0
    %2190 = vmatprep.subr.mxu0 0.0
    %2191 = vmatpush1.xpose.msra.mxu0 0.0
    %2192 = vmatprep.subr.mxu0 0.0
    %2193 = vmatpush1.xpose.msra.mxu0 0.0
    %2194 = vmatprep.subr.mxu0 0.0
    %2195 = vmatpush1.xpose.msra.mxu0 0.0
    %2196 = vmatprep.subr.mxu0 0.0
    %2197 = vmatpush1.xpose.msra.mxu0 0.0
    %2198 = vmatprep.subr.mxu0 0.0
    %2199 = vmatpush1.xpose.msra.mxu0 0.0
    %2200 = vmatprep.subr.mxu0 0.0
    %2201 = vmatpush1.xpose.msra.mxu0 0.0
    %2202 = vmatprep.subr.mxu0 0.0
    %2203 = vmatpush1.xpose.msra.mxu0 0.0
    %2204 = vmatprep.subr.mxu0 0.0
    %2205 = vmatpush1.xpose.msra.mxu0 0.0
    %2206 = vmatprep.subr.mxu0 0.0
    %2207 = vmatpush1.xpose.msra.mxu0 0.0
    %2208 = vmatprep.subr.mxu0 0.0
    %2209 = vmatpush1.xpose.msra.mxu0 0.0
    %2210 = vmatprep.subr.mxu0 0.0
    %2211 = vmatpush1.xpose.msra.mxu0 0.0
    %2212 = vmatprep.subr.mxu0 0.0
    %2213 = vmatpush1.xpose.msra.mxu0 0.0
    %2214 = vmatprep.subr.mxu0 0.0
    %2215 = vmatpush1.xpose.msra.mxu0 0.0
    %2216 = vmatprep.subr.mxu0 0.0
    %2217 = vmatpush1.xpose.msra.mxu0 0.0
    %2218 = vmatprep.subr.mxu0 0.0
    %2219 = vmatpush1.xpose.msra.mxu0 0.0
    %2220 = vmatprep.subr.mxu0 0.0
    %2221 = vmatpush1.xpose.msra.mxu0 0.0
    %2222 = vmatprep.subr.mxu0 0.0
    %2223 = vmatpush1.xpose.msra.mxu0 0.0
    %2224 = vmatprep.subr.mxu0 0.0
    %2225 = vmatpush1.xpose.msra.mxu0 0.0
    %2226 = vmatprep.subr.mxu0 0.0
    %2227 = vmatpush1.xpose.msra.mxu0 0.0
    %2228 = vmatprep.subr.mxu0 0.0
    %2229 = vmatpush1.xpose.msra.mxu0 0.0
    %2230 = vmatprep.subr.mxu0 0.0
    %2231 = vmatpush1.xpose.msra.mxu0 0.0
    %2232 = vmatprep.subr.mxu0 0.0
    %2233 = vmatpush1.xpose.msra.mxu0 0.0
    %2234 = vmatprep.subr.mxu0 0.0
    %2235 = vmatpush1.xpose.msra.mxu0 0.0
    %2236 = vmatprep.subr.mxu0 0.0
    %2237 = vmatpush1.xpose.msra.mxu0 0.0
    %2238 = vmatprep.subr.mxu0 0.0
    %2239 = vmatpush1.xpose.msra.mxu0 0.0
    %2240 = vmatprep.subr.mxu0 0.0
    %2241 = vmatpush1.xpose.msra.mxu0 0.0
    %2242 = vmatprep.mubr.f32.mxu0 0.0
    %2243 = vmatmul.mubr.f32.gmra.mrb[0].mxu0 %v2174
    %v2244 = vpop.f32.mrb[0].mxu0
    %v2245 = vadd.f32 0.0, %v2244
    %v2246 = vpop.f32.mrb[0].mxu0
    %2247 = vdwg.mxu0
    %2248 = vrot.lane.b32.xlu0 %v2085, 96
    %v2249 = vpop.permute.xlu0 %2248
    %v2250 = vsel %vm235, %v2071, 0
    %v2252 = vsel %vm235, %v2249, 0
    %2254 = vmatprep.subr.mxu0 0.0
    %2255 = vmatpush1.xpose.msra.mxu0 %v2252
    %2256 = vmatprep.subr.mxu0 0.0
    %2257 = vmatpush1.xpose.msra.mxu0 0.0
    %2258 = vmatprep.subr.mxu0 0.0
    %2259 = vmatpush1.xpose.msra.mxu0 0.0
    %2260 = vmatprep.subr.mxu0 0.0
    %2261 = vmatpush1.xpose.msra.mxu0 0.0
    %2262 = vmatprep.subr.mxu0 0.0
    %2263 = vmatpush1.xpose.msra.mxu0 0.0
    %2264 = vmatprep.subr.mxu0 0.0
    %2265 = vmatpush1.xpose.msra.mxu0 0.0
    %2266 = vmatprep.subr.mxu0 0.0
    %2267 = vmatpush1.xpose.msra.mxu0 0.0
    %2268 = vmatprep.subr.mxu0 0.0
    %2269 = vmatpush1.xpose.msra.mxu0 0.0
    %2270 = vmatprep.subr.mxu0 0.0
    %2271 = vmatpush1.xpose.msra.mxu0 0.0
    %2272 = vmatprep.subr.mxu0 0.0
    %2273 = vmatpush1.xpose.msra.mxu0 0.0
    %2274 = vmatprep.subr.mxu0 0.0
    %2275 = vmatpush1.xpose.msra.mxu0 0.0
    %2276 = vmatprep.subr.mxu0 0.0
    %2277 = vmatpush1.xpose.msra.mxu0 0.0
    %2278 = vmatprep.subr.mxu0 0.0
    %2279 = vmatpush1.xpose.msra.mxu0 0.0
    %2280 = vmatprep.subr.mxu0 0.0
    %2281 = vmatpush1.xpose.msra.mxu0 0.0
    %2282 = vmatprep.subr.mxu0 0.0
    %2283 = vmatpush1.xpose.msra.mxu0 0.0
    %2284 = vmatprep.subr.mxu0 0.0
    %2285 = vmatpush1.xpose.msra.mxu0 0.0
    %2286 = vmatprep.subr.mxu0 0.0
    %2287 = vmatpush1.xpose.msra.mxu0 0.0
    %2288 = vmatprep.subr.mxu0 0.0
    %2289 = vmatpush1.xpose.msra.mxu0 0.0
    %2290 = vmatprep.subr.mxu0 0.0
    %2291 = vmatpush1.xpose.msra.mxu0 0.0
    %2292 = vmatprep.subr.mxu0 0.0
    %2293 = vmatpush1.xpose.msra.mxu0 0.0
    %2294 = vmatprep.subr.mxu0 0.0
    %2295 = vmatpush1.xpose.msra.mxu0 0.0
    %2296 = vmatprep.subr.mxu0 0.0
    %2297 = vmatpush1.xpose.msra.mxu0 0.0
    %2298 = vmatprep.subr.mxu0 0.0
    %2299 = vmatpush1.xpose.msra.mxu0 0.0
    %2300 = vmatprep.subr.mxu0 0.0
    %2301 = vmatpush1.xpose.msra.mxu0 0.0
    %2302 = vmatprep.subr.mxu0 0.0
    %2303 = vmatpush1.xpose.msra.mxu0 0.0
    %2304 = vmatprep.subr.mxu0 0.0
    %2305 = vmatpush1.xpose.msra.mxu0 0.0
    %2306 = vmatprep.subr.mxu0 0.0
    %2307 = vmatpush1.xpose.msra.mxu0 0.0
    %2308 = vmatprep.subr.mxu0 0.0
    %2309 = vmatpush1.xpose.msra.mxu0 0.0
    %2310 = vmatprep.subr.mxu0 0.0
    %2311 = vmatpush1.xpose.msra.mxu0 0.0
    %2312 = vmatprep.subr.mxu0 0.0
    %2313 = vmatpush1.xpose.msra.mxu0 0.0
    %2314 = vmatprep.subr.mxu0 0.0
    %2315 = vmatpush1.xpose.msra.mxu0 0.0
    %2316 = vmatprep.subr.mxu0 0.0
    %2317 = vmatpush1.xpose.msra.mxu0 0.0
    %2318 = vmatprep.mubr.f32.mxu0 0.0
    %2319 = vmatmul.mubr.f32.gmra.mrb[0].mxu0 %v2250
    %v2320 = vpop.f32.mrb[0].mxu0
    %v2321 = vadd.f32 0.0, %v2320
    %v2322 = vpop.f32.mrb[0].mxu0
    %2323 = vdwg.mxu0
    %2324 = vrot.lane.b32.xlu0 %v2087, 96
    %v2325 = vpop.permute.xlu0 %2324
    %v2326 = vsel %vm235, %v2073, 0
    %v2328 = vsel %vm235, %v2325, 0
    %2330 = vmatprep.subr.mxu0 0.0
    %2331 = vmatpush1.xpose.msra.mxu0 %v2328
    %2332 = vmatprep.subr.mxu0 0.0
    %2333 = vmatpush1.xpose.msra.mxu0 0.0
    %2334 = vmatprep.subr.mxu0 0.0
    %2335 = vmatpush1.xpose.msra.mxu0 0.0
    %2336 = vmatprep.subr.mxu0 0.0
    %2337 = vmatpush1.xpose.msra.mxu0 0.0
    %2338 = vmatprep.subr.mxu0 0.0
    %2339 = vmatpush1.xpose.msra.mxu0 0.0
    %2340 = vmatprep.subr.mxu0 0.0
    %2341 = vmatpush1.xpose.msra.mxu0 0.0
    %2342 = vmatprep.subr.mxu0 0.0
    %2343 = vmatpush1.xpose.msra.mxu0 0.0
    %2344 = vmatprep.subr.mxu0 0.0
    %2345 = vmatpush1.xpose.msra.mxu0 0.0
    %2346 = vmatprep.subr.mxu0 0.0
    %2347 = vmatpush1.xpose.msra.mxu0 0.0
    %2348 = vmatprep.subr.mxu0 0.0
    %2349 = vmatpush1.xpose.msra.mxu0 0.0
    %2350 = vmatprep.subr.mxu0 0.0
    %2351 = vmatpush1.xpose.msra.mxu0 0.0
    %2352 = vmatprep.subr.mxu0 0.0
    %2353 = vmatpush1.xpose.msra.mxu0 0.0
    %2354 = vmatprep.subr.mxu0 0.0
    %2355 = vmatpush1.xpose.msra.mxu0 0.0
    %2356 = vmatprep.subr.mxu0 0.0
    %2357 = vmatpush1.xpose.msra.mxu0 0.0
    %2358 = vmatprep.subr.mxu0 0.0
    %2359 = vmatpush1.xpose.msra.mxu0 0.0
    %2360 = vmatprep.subr.mxu0 0.0
    %2361 = vmatpush1.xpose.msra.mxu0 0.0
    %2362 = vmatprep.subr.mxu0 0.0
    %2363 = vmatpush1.xpose.msra.mxu0 0.0
    %2364 = vmatprep.subr.mxu0 0.0
    %2365 = vmatpush1.xpose.msra.mxu0 0.0
    %2366 = vmatprep.subr.mxu0 0.0
    %2367 = vmatpush1.xpose.msra.mxu0 0.0
    %2368 = vmatprep.subr.mxu0 0.0
    %2369 = vmatpush1.xpose.msra.mxu0 0.0
    %2370 = vmatprep.subr.mxu0 0.0
    %2371 = vmatpush1.xpose.msra.mxu0 0.0
    %2372 = vmatprep.subr.mxu0 0.0
    %2373 = vmatpush1.xpose.msra.mxu0 0.0
    %2374 = vmatprep.subr.mxu0 0.0
    %2375 = vmatpush1.xpose.msra.mxu0 0.0
    %2376 = vmatprep.subr.mxu0 0.0
    %2377 = vmatpush1.xpose.msra.mxu0 0.0
    %2378 = vmatprep.subr.mxu0 0.0
    %2379 = vmatpush1.xpose.msra.mxu0 0.0
    %2380 = vmatprep.subr.mxu0 0.0
    %2381 = vmatpush1.xpose.msra.mxu0 0.0
    %2382 = vmatprep.subr.mxu0 0.0
    %2383 = vmatpush1.xpose.msra.mxu0 0.0
    %2384 = vmatprep.subr.mxu0 0.0
    %2385 = vmatpush1.xpose.msra.mxu0 0.0
    %2386 = vmatprep.subr.mxu0 0.0
    %2387 = vmatpush1.xpose.msra.mxu0 0.0
    %2388 = vmatprep.subr.mxu0 0.0
    %2389 = vmatpush1.xpose.msra.mxu0 0.0
    %2390 = vmatprep.subr.mxu0 0.0
    %2391 = vmatpush1.xpose.msra.mxu0 0.0
    %2392 = vmatprep.subr.mxu0 0.0
    %2393 = vmatpush1.xpose.msra.mxu0 0.0
    %2394 = vmatprep.mubr.f32.mxu0 0.0
    %2395 = vmatmul.mubr.f32.gmra.mrb[0].mxu0 %v2326
    %v2396 = vpop.f32.mrb[0].mxu0
    %v2397 = vadd.f32 0.0, %v2396
    %v2398 = vpop.f32.mrb[0].mxu0
    %2399 = vdwg.mxu0
    %2400 = vrot.lane.b32.xlu0 %v2089, 96
    %v2401 = vpop.permute.xlu0 %2400
    %v2402 = vsel %vm235, %v2075, 0
    %v2404 = vsel %vm235, %v2401, 0
    %2406 = vmatprep.subr.mxu0 0.0
    %2407 = vmatpush1.xpose.msra.mxu0 %v2404
    %2408 = vmatprep.subr.mxu0 0.0
    %2409 = vmatpush1.xpose.msra.mxu0 0.0
    %2410 = vmatprep.subr.mxu0 0.0
    %2411 = vmatpush1.xpose.msra.mxu0 0.0
    %2412 = vmatprep.subr.mxu0 0.0
    %2413 = vmatpush1.xpose.msra.mxu0 0.0
    %2414 = vmatprep.subr.mxu0 0.0
    %2415 = vmatpush1.xpose.msra.mxu0 0.0
    %2416 = vmatprep.subr.mxu0 0.0
    %2417 = vmatpush1.xpose.msra.mxu0 0.0
    %2418 = vmatprep.subr.mxu0 0.0
    %2419 = vmatpush1.xpose.msra.mxu0 0.0
    %2420 = vmatprep.subr.mxu0 0.0
    %2421 = vmatpush1.xpose.msra.mxu0 0.0
    %2422 = vmatprep.subr.mxu0 0.0
    %2423 = vmatpush1.xpose.msra.mxu0 0.0
    %2424 = vmatprep.subr.mxu0 0.0
    %2425 = vmatpush1.xpose.msra.mxu0 0.0
    %2426 = vmatprep.subr.mxu0 0.0
    %2427 = vmatpush1.xpose.msra.mxu0 0.0
    %2428 = vmatprep.subr.mxu0 0.0
    %2429 = vmatpush1.xpose.msra.mxu0 0.0
    %2430 = vmatprep.subr.mxu0 0.0
    %2431 = vmatpush1.xpose.msra.mxu0 0.0
    %2432 = vmatprep.subr.mxu0 0.0
    %2433 = vmatpush1.xpose.msra.mxu0 0.0
    %2434 = vmatprep.subr.mxu0 0.0
    %2435 = vmatpush1.xpose.msra.mxu0 0.0
    %2436 = vmatprep.subr.mxu0 0.0
    %2437 = vmatpush1.xpose.msra.mxu0 0.0
    %2438 = vmatprep.subr.mxu0 0.0
    %2439 = vmatpush1.xpose.msra.mxu0 0.0
    %2440 = vmatprep.subr.mxu0 0.0
    %2441 = vmatpush1.xpose.msra.mxu0 0.0
    %2442 = vmatprep.subr.mxu0 0.0
    %2443 = vmatpush1.xpose.msra.mxu0 0.0
    %2444 = vmatprep.subr.mxu0 0.0
    %2445 = vmatpush1.xpose.msra.mxu0 0.0
    %2446 = vmatprep.subr.mxu0 0.0
    %2447 = vmatpush1.xpose.msra.mxu0 0.0
    %2448 = vmatprep.subr.mxu0 0.0
    %2449 = vmatpush1.xpose.msra.mxu0 0.0
    %2450 = vmatprep.subr.mxu0 0.0
    %2451 = vmatpush1.xpose.msra.mxu0 0.0
    %2452 = vmatprep.subr.mxu0 0.0
    %2453 = vmatpush1.xpose.msra.mxu0 0.0
    %2454 = vmatprep.subr.mxu0 0.0
    %2455 = vmatpush1.xpose.msra.mxu0 0.0
    %2456 = vmatprep.subr.mxu0 0.0
    %2457 = vmatpush1.xpose.msra.mxu0 0.0
    %2458 = vmatprep.subr.mxu0 0.0
    %2459 = vmatpush1.xpose.msra.mxu0 0.0
    %2460 = vmatprep.subr.mxu0 0.0
    %2461 = vmatpush1.xpose.msra.mxu0 0.0
    %2462 = vmatprep.subr.mxu0 0.0
    %2463 = vmatpush1.xpose.msra.mxu0 0.0
    %2464 = vmatprep.subr.mxu0 0.0
    %2465 = vmatpush1.xpose.msra.mxu0 0.0
    %2466 = vmatprep.subr.mxu0 0.0
    %2467 = vmatpush1.xpose.msra.mxu0 0.0
    %2468 = vmatprep.subr.mxu0 0.0
    %2469 = vmatpush1.xpose.msra.mxu0 0.0
    %2470 = vmatprep.mubr.f32.mxu0 0.0
    %2471 = vmatmul.mubr.f32.gmra.mrb[0].mxu0 %v2402
    %v2472 = vpop.f32.mrb[0].mxu0
    %v2473 = vadd.f32 0.0, %v2472
    %v2474 = vpop.f32.mrb[0].mxu0
    %2475 = vdwg.mxu0
    %2476 = vrot.lane.b32.xlu0 %v2091, 96
    %v2477 = vpop.permute.xlu0 %2476
    %v2478 = vsel %vm235, %v2077, 0
    %v2480 = vsel %vm235, %v2477, 0
    %2482 = vmatprep.subr.mxu0 0.0
    %2483 = vmatpush1.xpose.msra.mxu0 %v2480
    %2484 = vmatprep.subr.mxu0 0.0
    %2485 = vmatpush1.xpose.msra.mxu0 0.0
    %2486 = vmatprep.subr.mxu0 0.0
    %2487 = vmatpush1.xpose.msra.mxu0 0.0
    %2488 = vmatprep.subr.mxu0 0.0
    %2489 = vmatpush1.xpose.msra.mxu0 0.0
    %2490 = vmatprep.subr.mxu0 0.0
    %2491 = vmatpush1.xpose.msra.mxu0 0.0
    %2492 = vmatprep.subr.mxu0 0.0
    %2493 = vmatpush1.xpose.msra.mxu0 0.0
    %2494 = vmatprep.subr.mxu0 0.0
    %2495 = vmatpush1.xpose.msra.mxu0 0.0
    %2496 = vmatprep.subr.mxu0 0.0
    %2497 = vmatpush1.xpose.msra.mxu0 0.0
    %2498 = vmatprep.subr.mxu0 0.0
    %2499 = vmatpush1.xpose.msra.mxu0 0.0
    %2500 = vmatprep.subr.mxu0 0.0
    %2501 = vmatpush1.xpose.msra.mxu0 0.0
    %2502 = vmatprep.subr.mxu0 0.0
    %2503 = vmatpush1.xpose.msra.mxu0 0.0
    %2504 = vmatprep.subr.mxu0 0.0
    %2505 = vmatpush1.xpose.msra.mxu0 0.0
    %2506 = vmatprep.subr.mxu0 0.0
    %2507 = vmatpush1.xpose.msra.mxu0 0.0
    %2508 = vmatprep.subr.mxu0 0.0
    %2509 = vmatpush1.xpose.msra.mxu0 0.0
    %2510 = vmatprep.subr.mxu0 0.0
    %2511 = vmatpush1.xpose.msra.mxu0 0.0
    %2512 = vmatprep.subr.mxu0 0.0
    %2513 = vmatpush1.xpose.msra.mxu0 0.0
    %2514 = vmatprep.subr.mxu0 0.0
    %2515 = vmatpush1.xpose.msra.mxu0 0.0
    %2516 = vmatprep.subr.mxu0 0.0
    %2517 = vmatpush1.xpose.msra.mxu0 0.0
    %2518 = vmatprep.subr.mxu0 0.0
    %2519 = vmatpush1.xpose.msra.mxu0 0.0
    %2520 = vmatprep.subr.mxu0 0.0
    %2521 = vmatpush1.xpose.msra.mxu0 0.0
    %2522 = vmatprep.subr.mxu0 0.0
    %2523 = vmatpush1.xpose.msra.mxu0 0.0
    %2524 = vmatprep.subr.mxu0 0.0
    %2525 = vmatpush1.xpose.msra.mxu0 0.0
    %2526 = vmatprep.subr.mxu0 0.0
    %2527 = vmatpush1.xpose.msra.mxu0 0.0
    %2528 = vmatprep.subr.mxu0 0.0
    %2529 = vmatpush1.xpose.msra.mxu0 0.0
    %2530 = vmatprep.subr.mxu0 0.0
    %2531 = vmatpush1.xpose.msra.mxu0 0.0
    %2532 = vmatprep.subr.mxu0 0.0
    %2533 = vmatpush1.xpose.msra.mxu0 0.0
    %2534 = vmatprep.subr.mxu0 0.0
    %2535 = vmatpush1.xpose.msra.mxu0 0.0
    %2536 = vmatprep.subr.mxu0 0.0
    %2537 = vmatpush1.xpose.msra.mxu0 0.0
    %2538 = vmatprep.subr.mxu0 0.0
    %2539 = vmatpush1.xpose.msra.mxu0 0.0
    %2540 = vmatprep.subr.mxu0 0.0
    %2541 = vmatpush1.xpose.msra.mxu0 0.0
    %2542 = vmatprep.subr.mxu0 0.0
    %2543 = vmatpush1.xpose.msra.mxu0 0.0
    %2544 = vmatprep.subr.mxu0 0.0
    %2545 = vmatpush1.xpose.msra.mxu0 0.0
    %2546 = vmatprep.mubr.f32.mxu0 0.0
    %2547 = vmatmul.mubr.f32.gmra.mrb[0].mxu0 %v2478
    %v2548 = vpop.f32.mrb[0].mxu0
    %v2549 = vadd.f32 0.0, %v2548
    %v2550 = vpop.f32.mrb[0].mxu0
    %2551 = vdwg.mxu0
    %2552 = vrot.lane.b32.xlu0 %v2093, 96
    %v2553 = vpop.permute.xlu0 %2552
    %v2554 = vsel %vm235, %v2079, 0
    %v2556 = vsel %vm235, %v2553, 0
    %2558 = vmatprep.subr.mxu0 0.0
    %2559 = vmatpush1.xpose.msra.mxu0 %v2556
    %2560 = vmatprep.subr.mxu0 0.0
    %2561 = vmatpush1.xpose.msra.mxu0 0.0
    %2562 = vmatprep.subr.mxu0 0.0
    %2563 = vmatpush1.xpose.msra.mxu0 0.0
    %2564 = vmatprep.subr.mxu0 0.0
    %2565 = vmatpush1.xpose.msra.mxu0 0.0
    %2566 = vmatprep.subr.mxu0 0.0
    %2567 = vmatpush1.xpose.msra.mxu0 0.0
    %2568 = vmatprep.subr.mxu0 0.0
    %2569 = vmatpush1.xpose.msra.mxu0 0.0
    %2570 = vmatprep.subr.mxu0 0.0
    %2571 = vmatpush1.xpose.msra.mxu0 0.0
    %2572 = vmatprep.subr.mxu0 0.0
    %2573 = vmatpush1.xpose.msra.mxu0 0.0
    %2574 = vmatprep.subr.mxu0 0.0
    %2575 = vmatpush1.xpose.msra.mxu0 0.0
    %2576 = vmatprep.subr.mxu0 0.0
    %2577 = vmatpush1.xpose.msra.mxu0 0.0
    %2578 = vmatprep.subr.mxu0 0.0
    %2579 = vmatpush1.xpose.msra.mxu0 0.0
    %2580 = vmatprep.subr.mxu0 0.0
    %2581 = vmatpush1.xpose.msra.mxu0 0.0
    %2582 = vmatprep.subr.mxu0 0.0
    %2583 = vmatpush1.xpose.msra.mxu0 0.0
    %2584 = vmatprep.subr.mxu0 0.0
    %2585 = vmatpush1.xpose.msra.mxu0 0.0
    %2586 = vmatprep.subr.mxu0 0.0
    %2587 = vmatpush1.xpose.msra.mxu0 0.0
    %2588 = vmatprep.subr.mxu0 0.0
    %2589 = vmatpush1.xpose.msra.mxu0 0.0
    %2590 = vmatprep.subr.mxu0 0.0
    %2591 = vmatpush1.xpose.msra.mxu0 0.0
    %2592 = vmatprep.subr.mxu0 0.0
    %2593 = vmatpush1.xpose.msra.mxu0 0.0
    %2594 = vmatprep.subr.mxu0 0.0
    %2595 = vmatpush1.xpose.msra.mxu0 0.0
    %2596 = vmatprep.subr.mxu0 0.0
    %2597 = vmatpush1.xpose.msra.mxu0 0.0
    %2598 = vmatprep.subr.mxu0 0.0
    %2599 = vmatpush1.xpose.msra.mxu0 0.0
    %2600 = vmatprep.subr.mxu0 0.0
    %2601 = vmatpush1.xpose.msra.mxu0 0.0
    %2602 = vmatprep.subr.mxu0 0.0
    %2603 = vmatpush1.xpose.msra.mxu0 0.0
    %2604 = vmatprep.subr.mxu0 0.0
    %2605 = vmatpush1.xpose.msra.mxu0 0.0
    %2606 = vmatprep.subr.mxu0 0.0
    %2607 = vmatpush1.xpose.msra.mxu0 0.0
    %2608 = vmatprep.subr.mxu0 0.0
    %2609 = vmatpush1.xpose.msra.mxu0 0.0
    %2610 = vmatprep.subr.mxu0 0.0
    %2611 = vmatpush1.xpose.msra.mxu0 0.0
    %2612 = vmatprep.subr.mxu0 0.0
    %2613 = vmatpush1.xpose.msra.mxu0 0.0
    %2614 = vmatprep.subr.mxu0 0.0
    %2615 = vmatpush1.xpose.msra.mxu0 0.0
    %2616 = vmatprep.subr.mxu0 0.0
    %2617 = vmatpush1.xpose.msra.mxu0 0.0
    %2618 = vmatprep.subr.mxu0 0.0
    %2619 = vmatpush1.xpose.msra.mxu0 0.0
    %2620 = vmatprep.subr.mxu0 0.0
    %2621 = vmatpush1.xpose.msra.mxu0 0.0
    %2622 = vmatprep.mubr.f32.mxu0 0.0
    %2623 = vmatmul.mubr.f32.gmra.mrb[0].mxu0 %v2554
    %v2624 = vpop.f32.mrb[0].mxu0
    %v2625 = vadd.f32 0.0, %v2624
    %v2626 = vpop.f32.mrb[0].mxu0
    %2627 = vdwg.mxu0
    %2628 = vrot.lane.b32.xlu0 %v2095, 96
    %v2629 = vpop.permute.xlu0 %2628
    %v2630 = vsel %vm235, %v2081, 0
    %v2632 = vsel %vm235, %v2629, 0
    %2634 = vmatprep.subr.mxu0 0.0
    %2635 = vmatpush1.xpose.msra.mxu0 %v2632
    %2636 = vmatprep.subr.mxu0 0.0
    %2637 = vmatpush1.xpose.msra.mxu0 0.0
    %2638 = vmatprep.subr.mxu0 0.0
    %2639 = vmatpush1.xpose.msra.mxu0 0.0
    %2640 = vmatprep.subr.mxu0 0.0
    %2641 = vmatpush1.xpose.msra.mxu0 0.0
    %2642 = vmatprep.subr.mxu0 0.0
    %2643 = vmatpush1.xpose.msra.mxu0 0.0
    %2644 = vmatprep.subr.mxu0 0.0
    %2645 = vmatpush1.xpose.msra.mxu0 0.0
    %2646 = vmatprep.subr.mxu0 0.0
    %2647 = vmatpush1.xpose.msra.mxu0 0.0
    %2648 = vmatprep.subr.mxu0 0.0
    %2649 = vmatpush1.xpose.msra.mxu0 0.0
    %2650 = vmatprep.subr.mxu0 0.0
    %2651 = vmatpush1.xpose.msra.mxu0 0.0
    %2652 = vmatprep.subr.mxu0 0.0
    %2653 = vmatpush1.xpose.msra.mxu0 0.0
    %2654 = vmatprep.subr.mxu0 0.0
    %2655 = vmatpush1.xpose.msra.mxu0 0.0
    %2656 = vmatprep.subr.mxu0 0.0
    %2657 = vmatpush1.xpose.msra.mxu0 0.0
    %2658 = vmatprep.subr.mxu0 0.0
    %2659 = vmatpush1.xpose.msra.mxu0 0.0
    %2660 = vmatprep.subr.mxu0 0.0
    %2661 = vmatpush1.xpose.msra.mxu0 0.0
    %2662 = vmatprep.subr.mxu0 0.0
    %2663 = vmatpush1.xpose.msra.mxu0 0.0
    %2664 = vmatprep.subr.mxu0 0.0
    %2665 = vmatpush1.xpose.msra.mxu0 0.0
    %2666 = vmatprep.subr.mxu0 0.0
    %2667 = vmatpush1.xpose.msra.mxu0 0.0
    %2668 = vmatprep.subr.mxu0 0.0
    %2669 = vmatpush1.xpose.msra.mxu0 0.0
    %2670 = vmatprep.subr.mxu0 0.0
    %2671 = vmatpush1.xpose.msra.mxu0 0.0
    %2672 = vmatprep.subr.mxu0 0.0
    %2673 = vmatpush1.xpose.msra.mxu0 0.0
    %2674 = vmatprep.subr.mxu0 0.0
    %2675 = vmatpush1.xpose.msra.mxu0 0.0
    %2676 = vmatprep.subr.mxu0 0.0
    %2677 = vmatpush1.xpose.msra.mxu0 0.0
    %2678 = vmatprep.subr.mxu0 0.0
    %2679 = vmatpush1.xpose.msra.mxu0 0.0
    %2680 = vmatprep.subr.mxu0 0.0
    %2681 = vmatpush1.xpose.msra.mxu0 0.0
    %2682 = vmatprep.subr.mxu0 0.0
    %2683 = vmatpush1.xpose.msra.mxu0 0.0
    %2684 = vmatprep.subr.mxu0 0.0
    %2685 = vmatpush1.xpose.msra.mxu0 0.0
    %2686 = vmatprep.subr.mxu0 0.0
    %2687 = vmatpush1.xpose.msra.mxu0 0.0
    %2688 = vmatprep.subr.mxu0 0.0
    %2689 = vmatpush1.xpose.msra.mxu0 0.0
    %2690 = vmatprep.subr.mxu0 0.0
    %2691 = vmatpush1.xpose.msra.mxu0 0.0
    %2692 = vmatprep.subr.mxu0 0.0
    %2693 = vmatpush1.xpose.msra.mxu0 0.0
    %2694 = vmatprep.subr.mxu0 0.0
    %2695 = vmatpush1.xpose.msra.mxu0 0.0
    %2696 = vmatprep.subr.mxu0 0.0
    %2697 = vmatpush1.xpose.msra.mxu0 0.0
    %2698 = vmatprep.mubr.f32.mxu0 0.0
    %2699 = vmatmul.mubr.f32.gmra.mrb[0].mxu0 %v2630
    %v2700 = vpop.f32.mrb[0].mxu0
    %v2701 = vadd.f32 0.0, %v2700
    %v2702 = vpop.f32.mrb[0].mxu0
    %2703 = vdwg.mxu0
    %v2704 = vsel %vm235, %v2169, -inf
    %2705 = vmax.xlane.f32.xlu0 %v2704
    %v2706 = vpop.xlane.xlu0 %2705
    %v2707 = vsel %vm235, %v2245, -inf
    %2708 = vmax.xlane.f32.xlu0 %v2707
    %v2709 = vpop.xlane.xlu0 %2708
    %v2710 = vsel %vm235, %v2321, -inf
    %2711 = vmax.xlane.f32.xlu0 %v2710
    %v2712 = vpop.xlane.xlu0 %2711
    %v2713 = vsel %vm235, %v2397, -inf
    %2714 = vmax.xlane.f32.xlu0 %v2713
    %v2715 = vpop.xlane.xlu0 %2714
    %v2716 = vsel %vm235, %v2473, -inf
    %2717 = vmax.xlane.f32.xlu0 %v2716
    %v2718 = vpop.xlane.xlu0 %2717
    %v2719 = vsel %vm235, %v2549, -inf
    %2720 = vmax.xlane.f32.xlu0 %v2719
    %v2721 = vpop.xlane.xlu0 %2720
    %v2722 = vsel %vm235, %v2625, -inf
    %2723 = vmax.xlane.f32.xlu0 %v2722
    %v2724 = vpop.xlane.xlu0 %2723
    %v2725 = vsel %vm235, %v2701, -inf
    %2726 = vmax.xlane.f32.xlu0 %v2725
    %v2727 = vpop.xlane.xlu0 %2726
    %v2728 = vsub.f32 %v2169, %v2706
    %v2729 = vsub.f32 %v2245, %v2709
    %v2730 = vsub.f32 %v2321, %v2712
    %v2731 = vsub.f32 %v2397, %v2715
    %v2732 = vsub.f32 %v2473, %v2718
    %v2733 = vsub.f32 %v2549, %v2721
    %v2734 = vsub.f32 %v2625, %v2724
    %v2735 = vsub.f32 %v2701, %v2727
    %v2736 = vmul.f32 %v2728, 1.442695
    %v2737 = vpow.pop %v2736
    %v2738 = vmul.f32 %v2729, 1.442695
    %v2739 = vpow.pop %v2738
    %v2740 = vmul.f32 %v2730, 1.442695
    %v2741 = vpow.pop %v2740
    %v2742 = vmul.f32 %v2731, 1.442695
    %v2743 = vpow.pop %v2742
    %v2744 = vmul.f32 %v2732, 1.442695
    %v2745 = vpow.pop %v2744
    %v2746 = vmul.f32 %v2733, 1.442695
    %v2747 = vpow.pop %v2746
    %v2748 = vmul.f32 %v2734, 1.442695
    %v2749 = vpow.pop %v2748
    %v2750 = vmul.f32 %v2735, 1.442695
    %v2751 = vpow.pop %v2750
    %v2752 = vsel %vm235, %v2737, 0.0
    %2753 = vadd.xlane.f32.xlu0 %v2752
    %v2754 = vpop.xlane.xlu0 %2753
    %v2755 = vsel %vm235, %v2739, 0.0
    %2756 = vadd.xlane.f32.xlu0 %v2755
    %v2757 = vpop.xlane.xlu0 %2756
    %v2758 = vsel %vm235, %v2741, 0.0
    %2759 = vadd.xlane.f32.xlu0 %v2758
    %v2760 = vpop.xlane.xlu0 %2759
    %v2761 = vsel %vm235, %v2743, 0.0
    %2762 = vadd.xlane.f32.xlu0 %v2761
    %v2763 = vpop.xlane.xlu0 %2762
    %v2764 = vsel %vm235, %v2745, 0.0
    %2765 = vadd.xlane.f32.xlu0 %v2764
    %v2766 = vpop.xlane.xlu0 %2765
    %v2767 = vsel %vm235, %v2747, 0.0
    %2768 = vadd.xlane.f32.xlu0 %v2767
    %v2769 = vpop.xlane.xlu0 %2768
    %v2770 = vsel %vm235, %v2749, 0.0
    %2771 = vadd.xlane.f32.xlu0 %v2770
    %v2772 = vpop.xlane.xlu0 %2771
    %v2773 = vsel %vm235, %v2751, 0.0
    %2774 = vadd.xlane.f32.xlu0 %v2773
    %v2775 = vpop.xlane.xlu0 %2774
    %v2776 = vrcp.pop %v2754
    %v2777 = vrcp.pop %v2757
    %v2778 = vrcp.pop %v2760
    %v2779 = vrcp.pop %v2763
    %v2780 = vrcp.pop %v2766
    %v2781 = vrcp.pop %v2769
    %v2782 = vrcp.pop %v2772
    %v2783 = vrcp.pop %v2775
    %v2784 = vmul.f32 %v2737, %v2776
    %v2785 = vmul.f32 %v2739, %v2777
    %v2786 = vmul.f32 %v2741, %v2778
    %v2787 = vmul.f32 %v2743, %v2779
    %v2788 = vmul.f32 %v2745, %v2780
    %v2789 = vmul.f32 %v2747, %v2781
    %v2790 = vmul.f32 %v2749, %v2782
    %v2791 = vmul.f32 %v2751, %v2783
    %2792 = vrot.lane.b32.xlu0 %v2058, 64
    %v2793 = vpop.permute.xlu0 %2792
    %v2796 = vsel %vm235, %v2784, 0
    %2798 = vmatprep.subr.mxu0 0.0
    %2799 = vmatpush1.msra.mxu0 %v2793
    %2800 = vmatprep.subr.mxu0 0.0
    %2801 = vmatpush1.msra.mxu0 0.0
    %2802 = vmatprep.subr.mxu0 0.0
    %2803 = vmatpush1.msra.mxu0 0.0
    %2804 = vmatprep.subr.mxu0 0.0
    %2805 = vmatpush1.msra.mxu0 0.0
    %2806 = vmatprep.subr.mxu0 0.0
    %2807 = vmatpush1.msra.mxu0 0.0
    %2808 = vmatprep.subr.mxu0 0.0
    %2809 = vmatpush1.msra.mxu0 0.0
    %2810 = vmatprep.subr.mxu0 0.0
    %2811 = vmatpush1.msra.mxu0 0.0
    %2812 = vmatprep.subr.mxu0 0.0
    %2813 = vmatpush1.msra.mxu0 0.0
    %2814 = vmatprep.subr.mxu0 0.0
    %2815 = vmatpush1.msra.mxu0 0.0
    %2816 = vmatprep.subr.mxu0 0.0
    %2817 = vmatpush1.msra.mxu0 0.0
    %2818 = vmatprep.subr.mxu0 0.0
    %2819 = vmatpush1.msra.mxu0 0.0
    %2820 = vmatprep.subr.mxu0 0.0
    %2821 = vmatpush1.msra.mxu0 0.0
    %2822 = vmatprep.subr.mxu0 0.0
    %2823 = vmatpush1.msra.mxu0 0.0
    %2824 = vmatprep.subr.mxu0 0.0
    %2825 = vmatpush1.msra.mxu0 0.0
    %2826 = vmatprep.subr.mxu0 0.0
    %2827 = vmatpush1.msra.mxu0 0.0
    %2828 = vmatprep.subr.mxu0 0.0
    %2829 = vmatpush1.msra.mxu0 0.0
    %2830 = vmatprep.subr.mxu0 0.0
    %2831 = vmatpush1.msra.mxu0 0.0
    %2832 = vmatprep.subr.mxu0 0.0
    %2833 = vmatpush1.msra.mxu0 0.0
    %2834 = vmatprep.subr.mxu0 0.0
    %2835 = vmatpush1.msra.mxu0 0.0
    %2836 = vmatprep.subr.mxu0 0.0
    %2837 = vmatpush1.msra.mxu0 0.0
    %2838 = vmatprep.subr.mxu0 0.0
    %2839 = vmatpush1.msra.mxu0 0.0
    %2840 = vmatprep.subr.mxu0 0.0
    %2841 = vmatpush1.msra.mxu0 0.0
    %2842 = vmatprep.subr.mxu0 0.0
    %2843 = vmatpush1.msra.mxu0 0.0
    %2844 = vmatprep.subr.mxu0 0.0
    %2845 = vmatpush1.msra.mxu0 0.0
    %2846 = vmatprep.subr.mxu0 0.0
    %2847 = vmatpush1.msra.mxu0 0.0
    %2848 = vmatprep.subr.mxu0 0.0
    %2849 = vmatpush1.msra.mxu0 0.0
    %2850 = vmatprep.subr.mxu0 0.0
    %2851 = vmatpush1.msra.mxu0 0.0
    %2852 = vmatprep.subr.mxu0 0.0
    %2853 = vmatpush1.msra.mxu0 0.0
    %2854 = vmatprep.subr.mxu0 0.0
    %2855 = vmatpush1.msra.mxu0 0.0
    %2856 = vmatprep.subr.mxu0 0.0
    %2857 = vmatpush1.msra.mxu0 0.0
    %2858 = vmatprep.subr.mxu0 0.0
    %2859 = vmatpush1.msra.mxu0 0.0
    %2860 = vmatprep.subr.mxu0 0.0
    %2861 = vmatpush1.msra.mxu0 0.0
    %2862 = vmatprep.mubr.f32.mxu0 0.0
    %2863 = vmatmul.mubr.f32.gmra.mrb[0].mxu0 %v2796
    %v2864 = vpop.f32.mrb[0].mxu0
    %v2865 = vadd.f32 0.0, %v2864
    %v2866 = vpop.f32.mrb[0].mxu0
    %2867 = vdwg.mxu0
    %2868 = vrot.lane.b32.xlu0 %v2063, 64
    %v2869 = vpop.permute.xlu0 %2868
    %v2872 = vsel %vm235, %v2785, 0
    %2874 = vmatprep.subr.mxu0 0.0
    %2875 = vmatpush1.msra.mxu0 %v2869
    %2876 = vmatprep.subr.mxu0 0.0
    %2877 = vmatpush1.msra.mxu0 0.0
    %2878 = vmatprep.subr.mxu0 0.0
    %2879 = vmatpush1.msra.mxu0 0.0
    %2880 = vmatprep.subr.mxu0 0.0
    %2881 = vmatpush1.msra.mxu0 0.0
    %2882 = vmatprep.subr.mxu0 0.0
    %2883 = vmatpush1.msra.mxu0 0.0
    %2884 = vmatprep.subr.mxu0 0.0
    %2885 = vmatpush1.msra.mxu0 0.0
    %2886 = vmatprep.subr.mxu0 0.0
    %2887 = vmatpush1.msra.mxu0 0.0
    %2888 = vmatprep.subr.mxu0 0.0
    %2889 = vmatpush1.msra.mxu0 0.0
    %2890 = vmatprep.subr.mxu0 0.0
    %2891 = vmatpush1.msra.mxu0 0.0
    %2892 = vmatprep.subr.mxu0 0.0
    %2893 = vmatpush1.msra.mxu0 0.0
    %2894 = vmatprep.subr.mxu0 0.0
    %2895 = vmatpush1.msra.mxu0 0.0
    %2896 = vmatprep.subr.mxu0 0.0
    %2897 = vmatpush1.msra.mxu0 0.0
    %2898 = vmatprep.subr.mxu0 0.0
    %2899 = vmatpush1.msra.mxu0 0.0
    %2900 = vmatprep.subr.mxu0 0.0
    %2901 = vmatpush1.msra.mxu0 0.0
    %2902 = vmatprep.subr.mxu0 0.0
    %2903 = vmatpush1.msra.mxu0 0.0
    %2904 = vmatprep.subr.mxu0 0.0
    %2905 = vmatpush1.msra.mxu0 0.0
    %2906 = vmatprep.subr.mxu0 0.0
    %2907 = vmatpush1.msra.mxu0 0.0
    %2908 = vmatprep.subr.mxu0 0.0
    %2909 = vmatpush1.msra.mxu0 0.0
    %2910 = vmatprep.subr.mxu0 0.0
    %2911 = vmatpush1.msra.mxu0 0.0
    %2912 = vmatprep.subr.mxu0 0.0
    %2913 = vmatpush1.msra.mxu0 0.0
    %2914 = vmatprep.subr.mxu0 0.0
    %2915 = vmatpush1.msra.mxu0 0.0
    %2916 = vmatprep.subr.mxu0 0.0
    %2917 = vmatpush1.msra.mxu0 0.0
    %2918 = vmatprep.subr.mxu0 0.0
    %2919 = vmatpush1.msra.mxu0 0.0
    %2920 = vmatprep.subr.mxu0 0.0
    %2921 = vmatpush1.msra.mxu0 0.0
    %2922 = vmatprep.subr.mxu0 0.0
    %2923 = vmatpush1.msra.mxu0 0.0
    %2924 = vmatprep.subr.mxu0 0.0
    %2925 = vmatpush1.msra.mxu0 0.0
    %2926 = vmatprep.subr.mxu0 0.0
    %2927 = vmatpush1.msra.mxu0 0.0
    %2928 = vmatprep.subr.mxu0 0.0
    %2929 = vmatpush1.msra.mxu0 0.0
    %2930 = vmatprep.subr.mxu0 0.0
    %2931 = vmatpush1.msra.mxu0 0.0
    %2932 = vmatprep.subr.mxu0 0.0
    %2933 = vmatpush1.msra.mxu0 0.0
    %2934 = vmatprep.subr.mxu0 0.0
    %2935 = vmatpush1.msra.mxu0 0.0
    %2936 = vmatprep.subr.mxu0 0.0
    %2937 = vmatpush1.msra.mxu0 0.0
    %2938 = vmatprep.mubr.f32.mxu0 0.0
    %2939 = vmatmul.mubr.f32.gmra.mrb[0].mxu0 %v2872
    %v2940 = vpop.f32.mrb[0].mxu0
    %v2941 = vadd.f32 0.0, %v2940
    %v2942 = vpop.f32.mrb[0].mxu0
    %2943 = vdwg.mxu0
    %2944 = vrot.lane.b32.xlu0 %v2085, 64
    %v2945 = vpop.permute.xlu0 %2944
    %v2948 = vsel %vm235, %v2786, 0
    %2950 = vmatprep.subr.mxu0 0.0
    %2951 = vmatpush1.msra.mxu0 %v2945
    %2952 = vmatprep.subr.mxu0 0.0
    %2953 = vmatpush1.msra.mxu0 0.0
    %2954 = vmatprep.subr.mxu0 0.0
    %2955 = vmatpush1.msra.mxu0 0.0
    %2956 = vmatprep.subr.mxu0 0.0
    %2957 = vmatpush1.msra.mxu0 0.0
    %2958 = vmatprep.subr.mxu0 0.0
    %2959 = vmatpush1.msra.mxu0 0.0
    %2960 = vmatprep.subr.mxu0 0.0
    %2961 = vmatpush1.msra.mxu0 0.0
    %2962 = vmatprep.subr.mxu0 0.0
    %2963 = vmatpush1.msra.mxu0 0.0
    %2964 = vmatprep.subr.mxu0 0.0
    %2965 = vmatpush1.msra.mxu0 0.0
    %2966 = vmatprep.subr.mxu0 0.0
    %2967 = vmatpush1.msra.mxu0 0.0
    %2968 = vmatprep.subr.mxu0 0.0
    %2969 = vmatpush1.msra.mxu0 0.0
    %2970 = vmatprep.subr.mxu0 0.0
    %2971 = vmatpush1.msra.mxu0 0.0
    %2972 = vmatprep.subr.mxu0 0.0
    %2973 = vmatpush1.msra.mxu0 0.0
    %2974 = vmatprep.subr.mxu0 0.0
    %2975 = vmatpush1.msra.mxu0 0.0
    %2976 = vmatprep.subr.mxu0 0.0
    %2977 = vmatpush1.msra.mxu0 0.0
    %2978 = vmatprep.subr.mxu0 0.0
    %2979 = vmatpush1.msra.mxu0 0.0
    %2980 = vmatprep.subr.mxu0 0.0
    %2981 = vmatpush1.msra.mxu0 0.0
    %2982 = vmatprep.subr.mxu0 0.0
    %2983 = vmatpush1.msra.mxu0 0.0
    %2984 = vmatprep.subr.mxu0 0.0
    %2985 = vmatpush1.msra.mxu0 0.0
    %2986 = vmatprep.subr.mxu0 0.0
    %2987 = vmatpush1.msra.mxu0 0.0
    %2988 = vmatprep.subr.mxu0 0.0
    %2989 = vmatpush1.msra.mxu0 0.0
    %2990 = vmatprep.subr.mxu0 0.0
    %2991 = vmatpush1.msra.mxu0 0.0
    %2992 = vmatprep.subr.mxu0 0.0
    %2993 = vmatpush1.msra.mxu0 0.0
    %2994 = vmatprep.subr.mxu0 0.0
    %2995 = vmatpush1.msra.mxu0 0.0
    %2996 = vmatprep.subr.mxu0 0.0
    %2997 = vmatpush1.msra.mxu0 0.0
    %2998 = vmatprep.subr.mxu0 0.0
    %2999 = vmatpush1.msra.mxu0 0.0
    %3000 = vmatprep.subr.mxu0 0.0
    %3001 = vmatpush1.msra.mxu0 0.0
    %3002 = vmatprep.subr.mxu0 0.0
    %3003 = vmatpush1.msra.mxu0 0.0
    %3004 = vmatprep.subr.mxu0 0.0
    %3005 = vmatpush1.msra.mxu0 0.0
    %3006 = vmatprep.subr.mxu0 0.0
    %3007 = vmatpush1.msra.mxu0 0.0
    %3008 = vmatprep.subr.mxu0 0.0
    %3009 = vmatpush1.msra.mxu0 0.0
    %3010 = vmatprep.subr.mxu0 0.0
    %3011 = vmatpush1.msra.mxu0 0.0
    %3012 = vmatprep.subr.mxu0 0.0
    %3013 = vmatpush1.msra.mxu0 0.0
    %3014 = vmatprep.mubr.f32.mxu0 0.0
    %3015 = vmatmul.mubr.f32.gmra.mrb[0].mxu0 %v2948
    %v3016 = vpop.f32.mrb[0].mxu0
    %v3017 = vadd.f32 0.0, %v3016
    %v3018 = vpop.f32.mrb[0].mxu0
    %3019 = vdwg.mxu0
    %3020 = vrot.lane.b32.xlu0 %v2087, 64
    %v3021 = vpop.permute.xlu0 %3020
    %v3024 = vsel %vm235, %v2787, 0
    %3026 = vmatprep.subr.mxu0 0.0
    %3027 = vmatpush1.msra.mxu0 %v3021
    %3028 = vmatprep.subr.mxu0 0.0
    %3029 = vmatpush1.msra.mxu0 0.0
    %3030 = vmatprep.subr.mxu0 0.0
    %3031 = vmatpush1.msra.mxu0 0.0
    %3032 = vmatprep.subr.mxu0 0.0
    %3033 = vmatpush1.msra.mxu0 0.0
    %3034 = vmatprep.subr.mxu0 0.0
    %3035 = vmatpush1.msra.mxu0 0.0
    %3036 = vmatprep.subr.mxu0 0.0
    %3037 = vmatpush1.msra.mxu0 0.0
    %3038 = vmatprep.subr.mxu0 0.0
    %3039 = vmatpush1.msra.mxu0 0.0
    %3040 = vmatprep.subr.mxu0 0.0
    %3041 = vmatpush1.msra.mxu0 0.0
    %3042 = vmatprep.subr.mxu0 0.0
    %3043 = vmatpush1.msra.mxu0 0.0
    %3044 = vmatprep.subr.mxu0 0.0
    %3045 = vmatpush1.msra.mxu0 0.0
    %3046 = vmatprep.subr.mxu0 0.0
    %3047 = vmatpush1.msra.mxu0 0.0
    %3048 = vmatprep.subr.mxu0 0.0
    %3049 = vmatpush1.msra.mxu0 0.0
    %3050 = vmatprep.subr.mxu0 0.0
    %3051 = vmatpush1.msra.mxu0 0.0
    %3052 = vmatprep.subr.mxu0 0.0
    %3053 = vmatpush1.msra.mxu0 0.0
    %3054 = vmatprep.subr.mxu0 0.0
    %3055 = vmatpush1.msra.mxu0 0.0
    %3056 = vmatprep.subr.mxu0 0.0
    %3057 = vmatpush1.msra.mxu0 0.0
    %3058 = vmatprep.subr.mxu0 0.0
    %3059 = vmatpush1.msra.mxu0 0.0
    %3060 = vmatprep.subr.mxu0 0.0
    %3061 = vmatpush1.msra.mxu0 0.0
    %3062 = vmatprep.subr.mxu0 0.0
    %3063 = vmatpush1.msra.mxu0 0.0
    %3064 = vmatprep.subr.mxu0 0.0
    %3065 = vmatpush1.msra.mxu0 0.0
    %3066 = vmatprep.subr.mxu0 0.0
    %3067 = vmatpush1.msra.mxu0 0.0
    %3068 = vmatprep.subr.mxu0 0.0
    %3069 = vmatpush1.msra.mxu0 0.0
    %3070 = vmatprep.subr.mxu0 0.0
    %3071 = vmatpush1.msra.mxu0 0.0
    %3072 = vmatprep.subr.mxu0 0.0
    %3073 = vmatpush1.msra.mxu0 0.0
    %3074 = vmatprep.subr.mxu0 0.0
    %3075 = vmatpush1.msra.mxu0 0.0
    %3076 = vmatprep.subr.mxu0 0.0
    %3077 = vmatpush1.msra.mxu0 0.0
    %3078 = vmatprep.subr.mxu0 0.0
    %3079 = vmatpush1.msra.mxu0 0.0
    %3080 = vmatprep.subr.mxu0 0.0
    %3081 = vmatpush1.msra.mxu0 0.0
    %3082 = vmatprep.subr.mxu0 0.0
    %3083 = vmatpush1.msra.mxu0 0.0
    %3084 = vmatprep.subr.mxu0 0.0
    %3085 = vmatpush1.msra.mxu0 0.0
    %3086 = vmatprep.subr.mxu0 0.0
    %3087 = vmatpush1.msra.mxu0 0.0
    %3088 = vmatprep.subr.mxu0 0.0
    %3089 = vmatpush1.msra.mxu0 0.0
    %3090 = vmatprep.mubr.f32.mxu0 0.0
    %3091 = vmatmul.mubr.f32.gmra.mrb[0].mxu0 %v3024
    %v3092 = vpop.f32.mrb[0].mxu0
    %v3093 = vadd.f32 0.0, %v3092
    %v3094 = vpop.f32.mrb[0].mxu0
    %3095 = vdwg.mxu0
    %3096 = vrot.lane.b32.xlu0 %v2089, 64
    %v3097 = vpop.permute.xlu0 %3096
    %v3100 = vsel %vm235, %v2788, 0
    %3102 = vmatprep.subr.mxu0 0.0
    %3103 = vmatpush1.msra.mxu0 %v3097
    %3104 = vmatprep.subr.mxu0 0.0
    %3105 = vmatpush1.msra.mxu0 0.0
    %3106 = vmatprep.subr.mxu0 0.0
    %3107 = vmatpush1.msra.mxu0 0.0
    %3108 = vmatprep.subr.mxu0 0.0
    %3109 = vmatpush1.msra.mxu0 0.0
    %3110 = vmatprep.subr.mxu0 0.0
    %3111 = vmatpush1.msra.mxu0 0.0
    %3112 = vmatprep.subr.mxu0 0.0
    %3113 = vmatpush1.msra.mxu0 0.0
    %3114 = vmatprep.subr.mxu0 0.0
    %3115 = vmatpush1.msra.mxu0 0.0
    %3116 = vmatprep.subr.mxu0 0.0
    %3117 = vmatpush1.msra.mxu0 0.0
    %3118 = vmatprep.subr.mxu0 0.0
    %3119 = vmatpush1.msra.mxu0 0.0
    %3120 = vmatprep.subr.mxu0 0.0
    %3121 = vmatpush1.msra.mxu0 0.0
    %3122 = vmatprep.subr.mxu0 0.0
    %3123 = vmatpush1.msra.mxu0 0.0
    %3124 = vmatprep.subr.mxu0 0.0
    %3125 = vmatpush1.msra.mxu0 0.0
    %3126 = vmatprep.subr.mxu0 0.0
    %3127 = vmatpush1.msra.mxu0 0.0
    %3128 = vmatprep.subr.mxu0 0.0
    %3129 = vmatpush1.msra.mxu0 0.0
    %3130 = vmatprep.subr.mxu0 0.0
    %3131 = vmatpush1.msra.mxu0 0.0
    %3132 = vmatprep.subr.mxu0 0.0
    %3133 = vmatpush1.msra.mxu0 0.0
    %3134 = vmatprep.subr.mxu0 0.0
    %3135 = vmatpush1.msra.mxu0 0.0
    %3136 = vmatprep.subr.mxu0 0.0
    %3137 = vmatpush1.msra.mxu0 0.0
    %3138 = vmatprep.subr.mxu0 0.0
    %3139 = vmatpush1.msra.mxu0 0.0
    %3140 = vmatprep.subr.mxu0 0.0
    %3141 = vmatpush1.msra.mxu0 0.0
    %3142 = vmatprep.subr.mxu0 0.0
    %3143 = vmatpush1.msra.mxu0 0.0
    %3144 = vmatprep.subr.mxu0 0.0
    %3145 = vmatpush1.msra.mxu0 0.0
    %3146 = vmatprep.subr.mxu0 0.0
    %3147 = vmatpush1.msra.mxu0 0.0
    %3148 = vmatprep.subr.mxu0 0.0
    %3149 = vmatpush1.msra.mxu0 0.0
    %3150 = vmatprep.subr.mxu0 0.0
    %3151 = vmatpush1.msra.mxu0 0.0
    %3152 = vmatprep.subr.mxu0 0.0
    %3153 = vmatpush1.msra.mxu0 0.0
    %3154 = vmatprep.subr.mxu0 0.0
    %3155 = vmatpush1.msra.mxu0 0.0
    %3156 = vmatprep.subr.mxu0 0.0
    %3157 = vmatpush1.msra.mxu0 0.0
    %3158 = vmatprep.subr.mxu0 0.0
    %3159 = vmatpush1.msra.mxu0 0.0
    %3160 = vmatprep.subr.mxu0 0.0
    %3161 = vmatpush1.msra.mxu0 0.0
    %3162 = vmatprep.subr.mxu0 0.0
    %3163 = vmatpush1.msra.mxu0 0.0
    %3164 = vmatprep.subr.mxu0 0.0
    %3165 = vmatpush1.msra.mxu0 0.0
    %3166 = vmatprep.mubr.f32.mxu0 0.0
    %3167 = vmatmul.mubr.f32.gmra.mrb[0].mxu0 %v3100
    %v3168 = vpop.f32.mrb[0].mxu0
    %v3169 = vadd.f32 0.0, %v3168
    %v3170 = vpop.f32.mrb[0].mxu0
    %3171 = vdwg.mxu0
    %3172 = vrot.lane.b32.xlu0 %v2091, 64
    %v3173 = vpop.permute.xlu0 %3172
    %v3176 = vsel %vm235, %v2789, 0
    %3178 = vmatprep.subr.mxu0 0.0
    %3179 = vmatpush1.msra.mxu0 %v3173
    %3180 = vmatprep.subr.mxu0 0.0
    %3181 = vmatpush1.msra.mxu0 0.0
    %3182 = vmatprep.subr.mxu0 0.0
    %3183 = vmatpush1.msra.mxu0 0.0
    %3184 = vmatprep.subr.mxu0 0.0
    %3185 = vmatpush1.msra.mxu0 0.0
    %3186 = vmatprep.subr.mxu0 0.0
    %3187 = vmatpush1.msra.mxu0 0.0
    %3188 = vmatprep.subr.mxu0 0.0
    %3189 = vmatpush1.msra.mxu0 0.0
    %3190 = vmatprep.subr.mxu0 0.0
    %3191 = vmatpush1.msra.mxu0 0.0
    %3192 = vmatprep.subr.mxu0 0.0
    %3193 = vmatpush1.msra.mxu0 0.0
    %3194 = vmatprep.subr.mxu0 0.0
    %3195 = vmatpush1.msra.mxu0 0.0
    %3196 = vmatprep.subr.mxu0 0.0
    %3197 = vmatpush1.msra.mxu0 0.0
    %3198 = vmatprep.subr.mxu0 0.0
    %3199 = vmatpush1.msra.mxu0 0.0
    %3200 = vmatprep.subr.mxu0 0.0
    %3201 = vmatpush1.msra.mxu0 0.0
    %3202 = vmatprep.subr.mxu0 0.0
    %3203 = vmatpush1.msra.mxu0 0.0
    %3204 = vmatprep.subr.mxu0 0.0
    %3205 = vmatpush1.msra.mxu0 0.0
    %3206 = vmatprep.subr.mxu0 0.0
    %3207 = vmatpush1.msra.mxu0 0.0
    %3208 = vmatprep.subr.mxu0 0.0
    %3209 = vmatpush1.msra.mxu0 0.0
    %3210 = vmatprep.subr.mxu0 0.0
    %3211 = vmatpush1.msra.mxu0 0.0
    %3212 = vmatprep.subr.mxu0 0.0
    %3213 = vmatpush1.msra.mxu0 0.0
    %3214 = vmatprep.subr.mxu0 0.0
    %3215 = vmatpush1.msra.mxu0 0.0
    %3216 = vmatprep.subr.mxu0 0.0
    %3217 = vmatpush1.msra.mxu0 0.0
    %3218 = vmatprep.subr.mxu0 0.0
    %3219 = vmatpush1.msra.mxu0 0.0
    %3220 = vmatprep.subr.mxu0 0.0
    %3221 = vmatpush1.msra.mxu0 0.0
    %3222 = vmatprep.subr.mxu0 0.0
    %3223 = vmatpush1.msra.mxu0 0.0
    %3224 = vmatprep.subr.mxu0 0.0
    %3225 = vmatpush1.msra.mxu0 0.0
    %3226 = vmatprep.subr.mxu0 0.0
    %3227 = vmatpush1.msra.mxu0 0.0
    %3228 = vmatprep.subr.mxu0 0.0
    %3229 = vmatpush1.msra.mxu0 0.0
    %3230 = vmatprep.subr.mxu0 0.0
    %3231 = vmatpush1.msra.mxu0 0.0
    %3232 = vmatprep.subr.mxu0 0.0
    %3233 = vmatpush1.msra.mxu0 0.0
    %3234 = vmatprep.subr.mxu0 0.0
    %3235 = vmatpush1.msra.mxu0 0.0
    %3236 = vmatprep.subr.mxu0 0.0
    %3237 = vmatpush1.msra.mxu0 0.0
    %3238 = vmatprep.subr.mxu0 0.0
    %3239 = vmatpush1.msra.mxu0 0.0
    %3240 = vmatprep.subr.mxu0 0.0
    %3241 = vmatpush1.msra.mxu0 0.0
    %3242 = vmatprep.mubr.f32.mxu0 0.0
    %3243 = vmatmul.mubr.f32.gmra.mrb[0].mxu0 %v3176
    %v3244 = vpop.f32.mrb[0].mxu0
    %v3245 = vadd.f32 0.0, %v3244
    %v3246 = vpop.f32.mrb[0].mxu0
    %3247 = vdwg.mxu0
    %3248 = vrot.lane.b32.xlu0 %v2093, 64
    %v3249 = vpop.permute.xlu0 %3248
    %v3252 = vsel %vm235, %v2790, 0
    %3254 = vmatprep.subr.mxu0 0.0
    %3255 = vmatpush1.msra.mxu0 %v3249
    %3256 = vmatprep.subr.mxu0 0.0
    %3257 = vmatpush1.msra.mxu0 0.0
    %3258 = vmatprep.subr.mxu0 0.0
    %3259 = vmatpush1.msra.mxu0 0.0
    %3260 = vmatprep.subr.mxu0 0.0
    %3261 = vmatpush1.msra.mxu0 0.0
    %3262 = vmatprep.subr.mxu0 0.0
    %3263 = vmatpush1.msra.mxu0 0.0
    %3264 = vmatprep.subr.mxu0 0.0
    %3265 = vmatpush1.msra.mxu0 0.0
    %3266 = vmatprep.subr.mxu0 0.0
    %3267 = vmatpush1.msra.mxu0 0.0
    %3268 = vmatprep.subr.mxu0 0.0
    %3269 = vmatpush1.msra.mxu0 0.0
    %3270 = vmatprep.subr.mxu0 0.0
    %3271 = vmatpush1.msra.mxu0 0.0
    %3272 = vmatprep.subr.mxu0 0.0
    %3273 = vmatpush1.msra.mxu0 0.0
    %3274 = vmatprep.subr.mxu0 0.0
    %3275 = vmatpush1.msra.mxu0 0.0
    %3276 = vmatprep.subr.mxu0 0.0
    %3277 = vmatpush1.msra.mxu0 0.0
    %3278 = vmatprep.subr.mxu0 0.0
    %3279 = vmatpush1.msra.mxu0 0.0
    %3280 = vmatprep.subr.mxu0 0.0
    %3281 = vmatpush1.msra.mxu0 0.0
    %3282 = vmatprep.subr.mxu0 0.0
    %3283 = vmatpush1.msra.mxu0 0.0
    %3284 = vmatprep.subr.mxu0 0.0
    %3285 = vmatpush1.msra.mxu0 0.0
    %3286 = vmatprep.subr.mxu0 0.0
    %3287 = vmatpush1.msra.mxu0 0.0
    %3288 = vmatprep.subr.mxu0 0.0
    %3289 = vmatpush1.msra.mxu0 0.0
    %3290 = vmatprep.subr.mxu0 0.0
    %3291 = vmatpush1.msra.mxu0 0.0
    %3292 = vmatprep.subr.mxu0 0.0
    %3293 = vmatpush1.msra.mxu0 0.0
    %3294 = vmatprep.subr.mxu0 0.0
    %3295 = vmatpush1.msra.mxu0 0.0
    %3296 = vmatprep.subr.mxu0 0.0
    %3297 = vmatpush1.msra.mxu0 0.0
    %3298 = vmatprep.subr.mxu0 0.0
    %3299 = vmatpush1.msra.mxu0 0.0
    %3300 = vmatprep.subr.mxu0 0.0
    %3301 = vmatpush1.msra.mxu0 0.0
    %3302 = vmatprep.subr.mxu0 0.0
    %3303 = vmatpush1.msra.mxu0 0.0
    %3304 = vmatprep.subr.mxu0 0.0
    %3305 = vmatpush1.msra.mxu0 0.0
    %3306 = vmatprep.subr.mxu0 0.0
    %3307 = vmatpush1.msra.mxu0 0.0
    %3308 = vmatprep.subr.mxu0 0.0
    %3309 = vmatpush1.msra.mxu0 0.0
    %3310 = vmatprep.subr.mxu0 0.0
    %3311 = vmatpush1.msra.mxu0 0.0
    %3312 = vmatprep.subr.mxu0 0.0
    %3313 = vmatpush1.msra.mxu0 0.0
    %3314 = vmatprep.subr.mxu0 0.0
    %3315 = vmatpush1.msra.mxu0 0.0
    %3316 = vmatprep.subr.mxu0 0.0
    %3317 = vmatpush1.msra.mxu0 0.0
    %3318 = vmatprep.mubr.f32.mxu0 0.0
    %3319 = vmatmul.mubr.f32.gmra.mrb[0].mxu0 %v3252
    %v3320 = vpop.f32.mrb[0].mxu0
    %v3321 = vadd.f32 0.0, %v3320
    %v3322 = vpop.f32.mrb[0].mxu0
    %3323 = vdwg.mxu0
    %3324 = vrot.lane.b32.xlu0 %v2095, 64
    %v3325 = vpop.permute.xlu0 %3324
    %v3328 = vsel %vm235, %v2791, 0
    %3330 = vmatprep.subr.mxu0 0.0
    %3331 = vmatpush1.msra.mxu0 %v3325
    %3332 = vmatprep.subr.mxu0 0.0
    %3333 = vmatpush1.msra.mxu0 0.0
    %3334 = vmatprep.subr.mxu0 0.0
    %3335 = vmatpush1.msra.mxu0 0.0
    %3336 = vmatprep.subr.mxu0 0.0
    %3337 = vmatpush1.msra.mxu0 0.0
    %3338 = vmatprep.subr.mxu0 0.0
    %3339 = vmatpush1.msra.mxu0 0.0
    %3340 = vmatprep.subr.mxu0 0.0
    %3341 = vmatpush1.msra.mxu0 0.0
    %3342 = vmatprep.subr.mxu0 0.0
    %3343 = vmatpush1.msra.mxu0 0.0
    %3344 = vmatprep.subr.mxu0 0.0
    %3345 = vmatpush1.msra.mxu0 0.0
    %3346 = vmatprep.subr.mxu0 0.0
    %3347 = vmatpush1.msra.mxu0 0.0
    %3348 = vmatprep.subr.mxu0 0.0
    %3349 = vmatpush1.msra.mxu0 0.0
    %3350 = vmatprep.subr.mxu0 0.0
    %3351 = vmatpush1.msra.mxu0 0.0
    %3352 = vmatprep.subr.mxu0 0.0
    %3353 = vmatpush1.msra.mxu0 0.0
    %3354 = vmatprep.subr.mxu0 0.0
    %3355 = vmatpush1.msra.mxu0 0.0
    %3356 = vmatprep.subr.mxu0 0.0
    %3357 = vmatpush1.msra.mxu0 0.0
    %3358 = vmatprep.subr.mxu0 0.0
    %3359 = vmatpush1.msra.mxu0 0.0
    %3360 = vmatprep.subr.mxu0 0.0
    %3361 = vmatpush1.msra.mxu0 0.0
    %3362 = vmatprep.subr.mxu0 0.0
    %3363 = vmatpush1.msra.mxu0 0.0
    %3364 = vmatprep.subr.mxu0 0.0
    %3365 = vmatpush1.msra.mxu0 0.0
    %3366 = vmatprep.subr.mxu0 0.0
    %3367 = vmatpush1.msra.mxu0 0.0
    %3368 = vmatprep.subr.mxu0 0.0
    %3369 = vmatpush1.msra.mxu0 0.0
    %3370 = vmatprep.subr.mxu0 0.0
    %3371 = vmatpush1.msra.mxu0 0.0
    %3372 = vmatprep.subr.mxu0 0.0
    %3373 = vmatpush1.msra.mxu0 0.0
    %3374 = vmatprep.subr.mxu0 0.0
    %3375 = vmatpush1.msra.mxu0 0.0
    %3376 = vmatprep.subr.mxu0 0.0
    %3377 = vmatpush1.msra.mxu0 0.0
    %3378 = vmatprep.subr.mxu0 0.0
    %3379 = vmatpush1.msra.mxu0 0.0
    %3380 = vmatprep.subr.mxu0 0.0
    %3381 = vmatpush1.msra.mxu0 0.0
    %3382 = vmatprep.subr.mxu0 0.0
    %3383 = vmatpush1.msra.mxu0 0.0
    %3384 = vmatprep.subr.mxu0 0.0
    %3385 = vmatpush1.msra.mxu0 0.0
    %3386 = vmatprep.subr.mxu0 0.0
    %3387 = vmatpush1.msra.mxu0 0.0
    %3388 = vmatprep.subr.mxu0 0.0
    %3389 = vmatpush1.msra.mxu0 0.0
    %3390 = vmatprep.subr.mxu0 0.0
    %3391 = vmatpush1.msra.mxu0 0.0
    %3392 = vmatprep.subr.mxu0 0.0
    %3393 = vmatpush1.msra.mxu0 0.0
    %3394 = vmatprep.mubr.f32.mxu0 0.0
    %3395 = vmatmul.mubr.f32.gmra.mrb[0].mxu0 %v3328
    %v3396 = vpop.f32.mrb[0].mxu0
    %v3397 = vadd.f32 0.0, %v3396
    %v3398 = vpop.f32.mrb[0].mxu0
    %3399 = vdwg.mxu0
    %3402 = vrot.lane.b32.xlu0 %v3017, 8
    %v3403 = vpop.permute.xlu0 %3402
    %3404 = vrot.lane.b32.xlu0 %v3093, 8
    %v3405 = vpop.permute.xlu0 %3404
    %3410 = vrot.lane.b32.xlu0 %v3169, 16
    %v3411 = vpop.permute.xlu0 %3410
    %3412 = vrot.lane.b32.xlu0 %v3245, 16
    %v3413 = vpop.permute.xlu0 %3412
    %3418 = vrot.lane.b32.xlu0 %v3321, 24
    %v3419 = vpop.permute.xlu0 %3418
    %3420 = vrot.lane.b32.xlu0 %v3397, 24
    %v3421 = vpop.permute.xlu0 %3420
    %v3424 = vsel %vm235, %v2865, %v3403
    %v3425 = vsel %vm235, %v2941, %v3405
    %v3426 = vsel %vm1564, %v3424, %v3411
    %v3427 = vsel %vm1564, %v3425, %v3413
    %v3428 = vsel %vm1567, %v3426, %v3419
    %v3429 = vsel %vm1567, %v3427, %v3421
    %v3430 = vlaneseq
    %v3431 = vshrl.u32 %v3430, 7
    %v3432 = vsub.s32 3, %v3431
    %v3433 = vrot.slane %v1942, %v3432
    %v3435 = vsel %vm78, %v3428, 0
    %v3438 = vsel %vm78, %v3429, 0
    %3440 = vmatprep.subr.mxu0 0.0
    %3441 = vmatpush1.msra.mxu0 %v1925
    %3442 = vmatprep.subr.mxu0 0.0
    %3443 = vmatpush1.msra.mxu0 %v1926
    %3444 = vmatprep.subr.mxu0 0.0
    %3445 = vmatpush1.msra.mxu0 %v1927
    %3446 = vmatprep.subr.mxu0 0.0
    %3447 = vmatpush1.msra.mxu0 %v1928
    %3448 = vmatprep.subr.mxu0 0.0
    %3449 = vmatpush1.msra.mxu0 0.0
    %3450 = vmatprep.subr.mxu0 0.0
    %3451 = vmatpush1.msra.mxu0 0.0
    %3452 = vmatprep.subr.mxu0 0.0
    %3453 = vmatpush1.msra.mxu0 0.0
    %3454 = vmatprep.subr.mxu0 0.0
    %3455 = vmatpush1.msra.mxu0 0.0
    %3456 = vmatprep.subr.mxu0 0.0
    %3457 = vmatpush1.msra.mxu0 0.0
    %3458 = vmatprep.subr.mxu0 0.0
    %3459 = vmatpush1.msra.mxu0 0.0
    %3460 = vmatprep.subr.mxu0 0.0
    %3461 = vmatpush1.msra.mxu0 0.0
    %3462 = vmatprep.subr.mxu0 0.0
    %3463 = vmatpush1.msra.mxu0 0.0
    %3464 = vmatprep.subr.mxu0 0.0
    %3465 = vmatpush1.msra.mxu0 0.0
    %3466 = vmatprep.subr.mxu0 0.0
    %3467 = vmatpush1.msra.mxu0 0.0
    %3468 = vmatprep.subr.mxu0 0.0
    %3469 = vmatpush1.msra.mxu0 0.0
    %3470 = vmatprep.subr.mxu0 0.0
    %3471 = vmatpush1.msra.mxu0 0.0
    %3472 = vmatprep.subr.mxu0 0.0
    %3473 = vmatpush1.msra.mxu0 0.0
    %3474 = vmatprep.subr.mxu0 0.0
    %3475 = vmatpush1.msra.mxu0 0.0
    %3476 = vmatprep.subr.mxu0 0.0
    %3477 = vmatpush1.msra.mxu0 0.0
    %3478 = vmatprep.subr.mxu0 0.0
    %3479 = vmatpush1.msra.mxu0 0.0
    %3480 = vmatprep.subr.mxu0 0.0
    %3481 = vmatpush1.msra.mxu0 0.0
    %3482 = vmatprep.subr.mxu0 0.0
    %3483 = vmatpush1.msra.mxu0 0.0
    %3484 = vmatprep.subr.mxu0 0.0
    %3485 = vmatpush1.msra.mxu0 0.0
    %3486 = vmatprep.subr.mxu0 0.0
    %3487 = vmatpush1.msra.mxu0 0.0
    %3488 = vmatprep.subr.mxu0 0.0
    %3489 = vmatpush1.msra.mxu0 0.0
    %3490 = vmatprep.subr.mxu0 0.0
    %3491 = vmatpush1.msra.mxu0 0.0
    %3492 = vmatprep.subr.mxu0 0.0
    %3493 = vmatpush1.msra.mxu0 0.0
    %3494 = vmatprep.subr.mxu0 0.0
    %3495 = vmatpush1.msra.mxu0 0.0
    %3496 = vmatprep.subr.mxu0 0.0
    %3497 = vmatpush1.msra.mxu0 0.0
    %3498 = vmatprep.subr.mxu0 0.0
    %3499 = vmatpush1.msra.mxu0 0.0
    %3500 = vmatprep.subr.mxu0 0.0
    %3501 = vmatpush1.msra.mxu0 0.0
    %3502 = vmatprep.subr.mxu0 0.0
    %3503 = vmatpush1.msra.mxu0 0.0
    %3504 = vmatprep.mubr.f32.mxu0 0.0
    %3505 = vmatmul.mubr.f32.gmra.mrb[0].mxu0 %v3435
    %v3506 = vpop.f32.mrb[0].mxu0
    %v3507 = vadd.f32 %v3433, %v3506
    %v3508 = vpop.f32.mrb[0].mxu0
    %3509 = vmatprep.mubr.f32.mxu0 0.0
    %3510 = vmatmul.mubr.f32.gmra.mrb[0].mxu0 %v3438
    %v3511 = vpop.f32.mrb[0].mxu0
    %v3512 = vadd.f32 %v3433, %v3511
    %v3513 = vpop.f32.mrb[0].mxu0
    %3514 = vdwg.mxu0
    %v3515 = vadd.f32 %v1918, %v3507
    %v3516 = vadd.f32 %v1919, %v3512
    %v3517 = vsel %vm78, %v3515, 0.0
    %3518 = vadd.xlane.f32.xlu0 %v3517
    %v3519 = vpop.xlane.xlu0 %3518
    %v3520 = vsel %vm78, %v3516, 0.0
    %3521 = vadd.xlane.f32.xlu0 %v3520
    %v3522 = vpop.xlane.xlu0 %3521
    %v3523 = vmul.f32 %v3519, %v85
    %v3524 = vmul.f32 %v3522, %v85
    %v3525 = vsub.f32 %v3515, %v3523
    %v3526 = vsub.f32 %v3516, %v3524
    %v3527 = vmul.f32 %v3525, %v3525
    %v3528 = vmul.f32 %v3526, %v3526
    %v3529 = vsel %vm78, %v3527, 0.0
    %3530 = vadd.xlane.f32.xlu0 %v3529
    %v3531 = vpop.xlane.xlu0 %3530
    %v3532 = vsel %vm78, %v3528, 0.0
    %3533 = vadd.xlane.f32.xlu0 %v3532
    %v3534 = vpop.xlane.xlu0 %3533
    %v3535 = vmul.f32 %v3531, %v85
    %v3536 = vmul.f32 %v3534, %v85
    %v3537 = vadd.f32 %v3535, 1e-05
    %v3538 = vadd.f32 %v3536, 1e-05
    %v3539 = vrsqrt.pop %v3537
    %v3540 = vrsqrt.pop %v3538
    %v3541 = vmul.f32 %v3525, %v3539
    %v3542 = vmul.f32 %v3526, %v3540
    %v3543 = vlaneseq
    %v3544 = vshrl.u32 %v3543, 7
    %v3545 = vsub.s32 4, %v3544
    %v3546 = vrot.slane %v1942, %v3545
    %v3547 = vmul.f32 %v3541, %v3546
    %v3548 = vmul.f32 %v3542, %v3546
    %v3549 = vlaneseq
    %v3550 = vshrl.u32 %v3549, 7
    %v3551 = vsub.s32 5, %v3550
    %v3552 = vrot.slane %v1942, %v3551
    %v3553 = vadd.f32 %v3547, %v3552
    %v3554 = vadd.f32 %v3548, %v3552
    %v3555 = vlaneseq
    %v3556 = vshrl.u32 %v3555, 7
    %v3557 = vsub.s32 6, %v3556
    %v3558 = vrot.slane %v1942, %v3557
    %v3560 = vsel %vm78, %v3553, 0
    %v3563 = vsel %vm78, %v3554, 0
    %3565 = vmatprep.subr.mxu0 0.0
    %3566 = vmatpush1.msra.mxu0 %v1929
    %3567 = vmatprep.subr.mxu0 0.0
    %3568 = vmatpush1.msra.mxu0 %v1930
    %3569 = vmatprep.subr.mxu0 0.0
    %3570 = vmatpush1.msra.mxu0 %v1931
    %3571 = vmatprep.subr.mxu0 0.0
    %3572 = vmatpush1.msra.mxu0 %v1932
    %3573 = vmatprep.subr.mxu0 0.0
    %3574 = vmatpush1.msra.mxu0 0.0
    %3575 = vmatprep.subr.mxu0 0.0
    %3576 = vmatpush1.msra.mxu0 0.0
    %3577 = vmatprep.subr.mxu0 0.0
    %3578 = vmatpush1.msra.mxu0 0.0
    %3579 = vmatprep.subr.mxu0 0.0
    %3580 = vmatpush1.msra.mxu0 0.0
    %3581 = vmatprep.subr.mxu0 0.0
    %3582 = vmatpush1.msra.mxu0 0.0
    %3583 = vmatprep.subr.mxu0 0.0
    %3584 = vmatpush1.msra.mxu0 0.0
    %3585 = vmatprep.subr.mxu0 0.0
    %3586 = vmatpush1.msra.mxu0 0.0
    %3587 = vmatprep.subr.mxu0 0.0
    %3588 = vmatpush1.msra.mxu0 0.0
    %3589 = vmatprep.subr.mxu0 0.0
    %3590 = vmatpush1.msra.mxu0 0.0
    %3591 = vmatprep.subr.mxu0 0.0
    %3592 = vmatpush1.msra.mxu0 0.0
    %3593 = vmatprep.subr.mxu0 0.0
    %3594 = vmatpush1.msra.mxu0 0.0
    %3595 = vmatprep.subr.mxu0 0.0
    %3596 = vmatpush1.msra.mxu0 0.0
    %3597 = vmatprep.subr.mxu0 0.0
    %3598 = vmatpush1.msra.mxu0 0.0
    %3599 = vmatprep.subr.mxu0 0.0
    %3600 = vmatpush1.msra.mxu0 0.0
    %3601 = vmatprep.subr.mxu0 0.0
    %3602 = vmatpush1.msra.mxu0 0.0
    %3603 = vmatprep.subr.mxu0 0.0
    %3604 = vmatpush1.msra.mxu0 0.0
    %3605 = vmatprep.subr.mxu0 0.0
    %3606 = vmatpush1.msra.mxu0 0.0
    %3607 = vmatprep.subr.mxu0 0.0
    %3608 = vmatpush1.msra.mxu0 0.0
    %3609 = vmatprep.subr.mxu0 0.0
    %3610 = vmatpush1.msra.mxu0 0.0
    %3611 = vmatprep.subr.mxu0 0.0
    %3612 = vmatpush1.msra.mxu0 0.0
    %3613 = vmatprep.subr.mxu0 0.0
    %3614 = vmatpush1.msra.mxu0 0.0
    %3615 = vmatprep.subr.mxu0 0.0
    %3616 = vmatpush1.msra.mxu0 0.0
    %3617 = vmatprep.subr.mxu0 0.0
    %3618 = vmatpush1.msra.mxu0 0.0
    %3619 = vmatprep.subr.mxu0 0.0
    %3620 = vmatpush1.msra.mxu0 0.0
    %3621 = vmatprep.subr.mxu0 0.0
    %3622 = vmatpush1.msra.mxu0 0.0
    %3623 = vmatprep.subr.mxu0 0.0
    %3624 = vmatpush1.msra.mxu0 0.0
    %3625 = vmatprep.subr.mxu0 0.0
    %3626 = vmatpush1.msra.mxu0 0.0
    %3627 = vmatprep.subr.mxu0 0.0
    %3628 = vmatpush1.msra.mxu0 0.0
    %3629 = vmatprep.mubr.f32.mxu0 0.0
    %3630 = vmatmul.mubr.f32.gmra.mrb[0].mxu0 %v3560
    %v3631 = vpop.f32.mrb[0].mxu0
    %v3632 = vadd.f32 %v3558, %v3631
    %v3633 = vpop.f32.mrb[0].mxu0
    %3634 = vmatprep.mubr.f32.mxu0 0.0
    %3635 = vmatmul.mubr.f32.gmra.mrb[0].mxu0 %v3563
    %v3636 = vpop.f32.mrb[0].mxu0
    %v3637 = vadd.f32 %v3558, %v3636
    %v3638 = vpop.f32.mrb[0].mxu0
    %3639 = vdwg.mxu0
    %v3640 = vmul.f32 %v3632, 0.5
    %v3641 = vmul.f32 %v3637, 0.5
    %v3642 = vmul.f32 %v3632, 0.70710677
    %v3643 = vmul.f32 %v3637, 0.70710677
    %v3644 = vand.u32 2147483647, %v3642
    %v3645 = vand.u32 2147483647, %v3643
    %v3646 = vmul.f32 %v3644, 0.3275911
    %v3647 = vmul.f32 %v3645, 0.3275911
    %v3648 = vadd.f32 %v3646, 1.0
    %v3649 = vadd.f32 %v3647, 1.0
    %v3650 = vrcp.pop %v3648
    %v3651 = vrcp.pop %v3649
    %v3652 = vmul.f32 %v3650, 1.0614054
    %v3653 = vmul.f32 %v3651, 1.0614054
    %v3654 = vadd.f32 %v3652, -1.4531521
    %v3655 = vadd.f32 %v3653, -1.4531521
    %v3656 = vmul.f32 %v3654, %v3650
    %v3657 = vmul.f32 %v3655, %v3651
    %v3658 = vadd.f32 %v3656, 1.4214138
    %v3659 = vadd.f32 %v3657, 1.4214138
    %v3660 = vmul.f32 %v3658, %v3650
    %v3661 = vmul.f32 %v3659, %v3651
    %v3662 = vadd.f32 %v3660, -0.28449672
    %v3663 = vadd.f32 %v3661, -0.28449672
    %v3664 = vmul.f32 %v3662, %v3650
    %v3665 = vmul.f32 %v3663, %v3651
    %v3666 = vadd.f32 %v3664, 0.2548296
    %v3667 = vadd.f32 %v3665, 0.2548296
    %v3668 = vmul.f32 %v3666, %v3650
    %v3669 = vmul.f32 %v3667, %v3651
    %v3670 = vsub.f32 0.0, %v3644
    %v3671 = vsub.f32 0.0, %v3645
    %v3672 = vmul.f32 %v3670, %v3644
    %v3673 = vmul.f32 %v3671, %v3645
    %v3674 = vmul.f32 %v3672, 1.442695
    %v3675 = vpow.pop %v3674
    %v3676 = vmul.f32 %v3673, 1.442695
    %v3677 = vpow.pop %v3676
    %v3678 = vmul.f32 %v3668, %v3675
    %v3679 = vmul.f32 %v3669, %v3677
    %v3680 = vsub.f32 1.0, %v3678
    %v3681 = vsub.f32 1.0, %v3679
    %vm3682 = vcmp.lt.f32.partialorder %v3642, 0.0
    %vm3683 = vcmp.lt.f32.partialorder %v3643, 0.0
    %v3684 = vsub.f32 0.0, %v3680
    %v3685 = vsub.f32 0.0, %v3681
    %v3686 = vsel %vm3682, %v3684, %v3680
    %v3687 = vsel %vm3683, %v3685, %v3681
    %v3688 = vadd.f32 %v3686, 1.0
    %v3689 = vadd.f32 %v3687, 1.0
    %v3690 = vmul.f32 %v3640, %v3688
    %v3691 = vmul.f32 %v3641, %v3689
    %v3692 = vlaneseq
    %v3693 = vshrl.u32 %v3692, 7
    %v3694 = vsub.s32 7, %v3693
    %v3695 = vrot.slane %v1942, %v3694
    %v3697 = vsel %vm1836, %v3690, 0
    %v3700 = vsel %vm1836, %v3691, 0
    %3702 = vmatprep.subr.mxu0 0.0
    %3703 = vmatpush1.msra.mxu0 %v1933
    %3704 = vmatprep.subr.mxu0 0.0
    %3705 = vmatpush1.msra.mxu0 %v1934
    %3706 = vmatprep.subr.mxu0 0.0
    %3707 = vmatpush1.msra.mxu0 %v1935
    %3708 = vmatprep.subr.mxu0 0.0
    %3709 = vmatpush1.msra.mxu0 %v1936
    %3710 = vmatprep.subr.mxu0 0.0
    %3711 = vmatpush1.msra.mxu0 %v1937
    %3712 = vmatprep.subr.mxu0 0.0
    %3713 = vmatpush1.msra.mxu0 %v1938
    %3714 = vmatprep.subr.mxu0 0.0
    %3715 = vmatpush1.msra.mxu0 %v1939
    %3716 = vmatprep.subr.mxu0 0.0
    %3717 = vmatpush1.msra.mxu0 %v1940
    %3718 = vmatprep.subr.mxu0 0.0
    %3719 = vmatpush1.msra.mxu0 0.0
    %3720 = vmatprep.subr.mxu0 0.0
    %3721 = vmatpush1.msra.mxu0 0.0
    %3722 = vmatprep.subr.mxu0 0.0
    %3723 = vmatpush1.msra.mxu0 0.0
    %3724 = vmatprep.subr.mxu0 0.0
    %3725 = vmatpush1.msra.mxu0 0.0
    %3726 = vmatprep.subr.mxu0 0.0
    %3727 = vmatpush1.msra.mxu0 0.0
    %3728 = vmatprep.subr.mxu0 0.0
    %3729 = vmatpush1.msra.mxu0 0.0
    %3730 = vmatprep.subr.mxu0 0.0
    %3731 = vmatpush1.msra.mxu0 0.0
    %3732 = vmatprep.subr.mxu0 0.0
    %3733 = vmatpush1.msra.mxu0 0.0
    %3734 = vmatprep.subr.mxu0 0.0
    %3735 = vmatpush1.msra.mxu0 0.0
    %3736 = vmatprep.subr.mxu0 0.0
    %3737 = vmatpush1.msra.mxu0 0.0
    %3738 = vmatprep.subr.mxu0 0.0
    %3739 = vmatpush1.msra.mxu0 0.0
    %3740 = vmatprep.subr.mxu0 0.0
    %3741 = vmatpush1.msra.mxu0 0.0
    %3742 = vmatprep.subr.mxu0 0.0
    %3743 = vmatpush1.msra.mxu0 0.0
    %3744 = vmatprep.subr.mxu0 0.0
    %3745 = vmatpush1.msra.mxu0 0.0
    %3746 = vmatprep.subr.mxu0 0.0
    %3747 = vmatpush1.msra.mxu0 0.0
    %3748 = vmatprep.subr.mxu0 0.0
    %3749 = vmatpush1.msra.mxu0 0.0
    %3750 = vmatprep.subr.mxu0 0.0
    %3751 = vmatpush1.msra.mxu0 0.0
    %3752 = vmatprep.subr.mxu0 0.0
    %3753 = vmatpush1.msra.mxu0 0.0
    %3754 = vmatprep.subr.mxu0 0.0
    %3755 = vmatpush1.msra.mxu0 0.0
    %3756 = vmatprep.subr.mxu0 0.0
    %3757 = vmatpush1.msra.mxu0 0.0
    %3758 = vmatprep.subr.mxu0 0.0
    %3759 = vmatpush1.msra.mxu0 0.0
    %3760 = vmatprep.subr.mxu0 0.0
    %3761 = vmatpush1.msra.mxu0 0.0
    %3762 = vmatprep.subr.mxu0 0.0
    %3763 = vmatpush1.msra.mxu0 0.0
    %3764 = vmatprep.subr.mxu0 0.0
    %3765 = vmatpush1.msra.mxu0 0.0
    %3766 = vmatprep.mubr.f32.mxu0 0.0
    %3767 = vmatmul.mubr.f32.gmra.mrb[0].mxu0 %v3697
    %v3768 = vpop.f32.mrb[0].mxu0
    %v3769 = vadd.f32 %v3695, %v3768
    %v3770 = vpop.f32.mrb[0].mxu0
    %3771 = vmatprep.mubr.f32.mxu0 0.0
    %3772 = vmatmul.mubr.f32.gmra.mrb[0].mxu0 %v3700
    %v3773 = vpop.f32.mrb[0].mxu0
    %v3774 = vadd.f32 %v3695, %v3773
    %v3775 = vpop.f32.mrb[0].mxu0
    %3776 = vdwg.mxu0
    %v3777 = vadd.f32 %v3515, %v3769
    %v3778 = vadd.f32 %v3516, %v3774
    %s3779 = scalar_lea.vmem [#allocation6], 16
    %v3780 = vld [vmem:[%s3779] sm:$0xff]
    %v3781 = vsel %vm78, %v3777, 0.0
    %3782 = vadd.xlane.f32.xlu0 %v3781
    %v3783 = vpop.xlane.xlu0 %3782
    %v3784 = vsel %vm78, %v3778, 0.0
    %3785 = vadd.xlane.f32.xlu0 %v3784
    %v3786 = vpop.xlane.xlu0 %3785
    %v3787 = vmul.f32 %v3783, %v85
    %v3788 = vmul.f32 %v3786, %v85
    %v3789 = vsub.f32 %v3777, %v3787
    %v3790 = vsub.f32 %v3778, %v3788
    %v3791 = vmul.f32 %v3789, %v3789
    %v3792 = vmul.f32 %v3790, %v3790
    %v3793 = vsel %vm78, %v3791, 0.0
    %3794 = vadd.xlane.f32.xlu0 %v3793
    %v3795 = vpop.xlane.xlu0 %3794
    %v3796 = vsel %vm78, %v3792, 0.0
    %3797 = vadd.xlane.f32.xlu0 %v3796
    %v3798 = vpop.xlane.xlu0 %3797
    %v3799 = vmul.f32 %v3795, %v85
    %v3800 = vmul.f32 %v3798, %v85
    %v3801 = vadd.f32 %v3799, 1e-05
    %v3802 = vadd.f32 %v3800, 1e-05
    %v3803 = vrsqrt.pop %v3801
    %v3804 = vrsqrt.pop %v3802
    %v3805 = vmul.f32 %v3789, %v3803
    %v3806 = vmul.f32 %v3790, %v3804
    %v3807 = vlaneseq
    %v3808 = vshrl.u32 %v3807, 7
    %v3809 = vsub.s32 0, %v3808
    %v3810 = vrot.slane %v3780, %v3809
    %v3811 = vmul.f32 %v3805, %v3810
    %v3812 = vmul.f32 %v3806, %v3810
    %v3813 = vlaneseq
    %v3814 = vshrl.u32 %v3813, 7
    %v3815 = vsub.s32 1, %v3814
    %v3816 = vrot.slane %v3780, %v3815
    %v3817 = vadd.f32 %v3811, %v3816
    %v3818 = vadd.f32 %v3812, %v3816
    %3819 = vst.msk [vmem:[%s3] sm:$0xff] %vm78, %v3817
    %3821 = vrot.lane.b32.xlu0 %v3818, 32
    %v3822 = vpop.permute.xlu0 %3821
    %vm3824 = vcmask 523520
    %3825 = vst.msk [vmem:[%s3] sm:$0xff] %vm3824, %v3822
    // Predicated region
    $region26: #{encoder_forward.1} parent=1 // pred_check
      _
    $region27: #{encoder_forward.1} parent=1 // pred_check_branch
      %3827 = sbr.rel (0) target = $region29
    $region28: #{encoder_forward.1} parent=1 // pred_region
      _
    $region29: #{encoder_forward.1} parent=1 // pred_fallthru
      _
    // Predicated region
    $region30: #{encoder_forward.1} parent=1 // pred_check
      _
    $region31: #{encoder_forward.1} parent=1 // pred_check_branch
      %3829 = sbr.rel (0) target = $region33
    $region32: #{encoder_forward.1} parent=1 // pred_region
      _
    $region33: #{encoder_forward.1} parent=1 // pred_fallthru
      _
    %3830 = vsyncpa [#allocation3], 1
    %3831 = vsyncpa [#allocation5], 1

</llo_original>
